<compile_context>
chip_gen: v7x
topology: tpu7x:2x2x1
jax: 0.10.0
libtpu: 0.0.40
codegen_flags: <defaults>
</compile_context>

<pallas_src>
import functools
import math

import numpy as np
import jax
import jax.numpy as jnp
from jax.experimental import pallas as pl
from jax.experimental.pallas import tpu as pltpu

EPS = 1e-5
_PARALLEL = pltpu.CompilerParams(dimension_semantics=("parallel",))


def _round_up(x, m):
    return (x + m - 1) // m * m


# ---------------------------------------------------------------------------
# Kernel 1: fused QKV projection + multi-head attention + combine + residual.
# One grid step per batch element.
# ---------------------------------------------------------------------------
def _attn_kernel(x_ref, wqkv_ref, wc_ref, bc_ref, s1_ref, st_ref,
                 *, H, D, N, N_pad):
    x = x_ref[...]                                            # (N_pad, E_pad) bf16
    E_pad = x.shape[-1]

    # Fused, head-batched QKV projection: one einsum = 3*H batched matmuls.
    xb = jnp.broadcast_to(x, (3 * H, N_pad, E_pad))
    qkv = jnp.einsum("hne,hed->hnd", xb, wqkv_ref[...],
                     preferred_element_type=jnp.float32)      # (3H, N_pad, Dp)
    qkv = qkv.astype(jnp.bfloat16)
    qh, kh, vh = qkv[:H], qkv[H:2 * H], qkv[2 * H:]           # (H, N_pad, Dp)

    # Attention scores + softmax (f32 math), batched over heads.
    scores = jnp.einsum("hnd,hmd->hnm", qh, kh,
                        preferred_element_type=jnp.float32)
    scores = scores * (1.0 / math.sqrt(D))
    if N_pad != N:  # mask padded key positions
        col = jax.lax.broadcasted_iota(jnp.int32, scores.shape, 2)
        scores = jnp.where(col < N, scores, -1e30)
    m = jnp.max(scores, axis=-1, keepdims=True)
    p = jnp.exp(scores - m)
    p = p * pl.reciprocal(jnp.sum(p, axis=-1, keepdims=True), approx=True)

    ctx = jnp.einsum("hnm,hmd->hnd", p.astype(jnp.bfloat16), vh,
                     preferred_element_type=jnp.float32)      # (H, N_pad, Dp)

    # Combine heads: per-head block of Wc, then sum over heads (no concat).
    mh = jnp.einsum("hnd,hde->hne", ctx.astype(jnp.bfloat16), wc_ref[...],
                    preferred_element_type=jnp.float32)       # (H, N_pad, E_pad)
    mh = jnp.sum(mh, axis=0) + bc_ref[...]                    # (N_pad, E_pad)

    s1 = x.astype(jnp.float32) + mh                           # residual (f32)
    if N_pad != N:  # padded rows must not pollute BatchNorm statistics
        row = jax.lax.broadcasted_iota(jnp.int32, s1.shape, 0)
        s1 = jnp.where(row < N, s1, 0.0)
    s1_ref[...] = s1

    # Per-block partial BN statistics (row 0 = sum, row 1 = sum of squares).
    st_ref[...] = jnp.zeros_like(st_ref)
    st_ref[0:1, :] = jnp.sum(s1, axis=0, keepdims=True)
    st_ref[1:2, :] = jnp.sum(s1 * s1, axis=0, keepdims=True)


# ---------------------------------------------------------------------------
# Kernel 2: BN1 normalize + feed-forward (W2(relu(W1(.)))) + residual.
# ---------------------------------------------------------------------------
def _bn_ff_kernel(s1_ref, mean_ref, rstd_ref, g_ref, be_ref,
                  w1_ref, b1_ref, w2_ref, b2_ref, s2_ref, st_ref,
                  *, N, N_pad):
    s1 = s1_ref[...]                                          # (N_pad, E_pad) f32
    out1 = (s1 - mean_ref[...]) * rstd_ref[...] * g_ref[...] + be_ref[...]

    h = jnp.dot(out1.astype(jnp.bfloat16), w1_ref[...],
                preferred_element_type=jnp.float32) + b1_ref[...]
    h = jnp.maximum(h, 0.0)
    ff = jnp.dot(h.astype(jnp.bfloat16), w2_ref[...],
                 preferred_element_type=jnp.float32) + b2_ref[...]

    s2 = out1 + ff
    if N_pad != N:
        row = jax.lax.broadcasted_iota(jnp.int32, s2.shape, 0)
        s2 = jnp.where(row < N, s2, 0.0)
    s2_ref[...] = s2

    st_ref[...] = jnp.zeros_like(st_ref)
    st_ref[0:1, :] = jnp.sum(s2, axis=0, keepdims=True)
    st_ref[1:2, :] = jnp.sum(s2 * s2, axis=0, keepdims=True)


# ---------------------------------------------------------------------------
# Kernel 3: BN2 normalize -> final output.
# ---------------------------------------------------------------------------
def _bn_kernel(s_ref, mean_ref, rstd_ref, g_ref, be_ref, o_ref):
    o_ref[...] = ((s_ref[...] - mean_ref[...]) * rstd_ref[...]
                  * g_ref[...] + be_ref[...])


def _finalize_stats(stats, count):
    """Reduce per-block (sum, sumsq) -> global (mean, rstd), f32."""
    tot = jnp.sum(stats[:, 0:2, :], axis=0)                   # (2, E_pad)
    mean = tot[0:1, :] / count
    var = tot[1:2, :] / count - mean * mean                   # biased variance
    return mean, jax.lax.rsqrt(var + EPS)


def encoder_layer(x, params, *, head_num, qkv_dim):
    B, N, E = x.shape
    H, D = head_num, qkv_dim
    F = params["W1"].shape[1]

    E_pad = _round_up(E, 128)
    F_pad = _round_up(F, 128)
    N_pad = _round_up(N, 8)
    Dp = _round_up(D, 128 // math.gcd(H, 128))   # per-head dim, lane friendly

    f32, bf16 = jnp.float32, jnp.bfloat16

    # ---- padded / fused weights (bf16 for MXU; biases & BN params stay f32) ----
    def head_major(w):      # (E, H*D) -> (H, E_pad, Dp)
        w3 = jnp.transpose(w.reshape(E, H, D), (1, 0, 2))
        return jnp.pad(w3, ((0, 0), (0, E_pad - E), (0, Dp - D)))

    wqkv = jnp.concatenate(
        [head_major(params["Wq"]), head_major(params["Wk"]),
         head_major(params["Wv"])], axis=0).astype(bf16)                # (3H,E_pad,Dp)
    wc = jnp.pad(params["Wc"].reshape(H, D, E),
                 ((0, 0), (0, Dp - D), (0, E_pad - E))).astype(bf16)    # (H,Dp,E_pad)
    w1 = jnp.pad(params["W1"], ((0, E_pad - E), (0, F_pad - F))).astype(bf16)
    w2 = jnp.pad(params["W2"], ((0, F_pad - F), (0, E_pad - E))).astype(bf16)

    def row_pad(v, width):  # (1, w) -> (1, width), f32
        return jnp.pad(v.astype(f32), ((0, 0), (0, width - v.shape[1])))

    bc = row_pad(params["bc"], E_pad)
    b1 = row_pad(params["b1"], F_pad)
    b2 = row_pad(params["b2"], E_pad)
    g1, be1 = row_pad(params["g1"], E_pad), row_pad(params["be1"], E_pad)
    g2, be2 = row_pad(params["g2"], E_pad), row_pad(params["be2"], E_pad)

    x_p = jnp.pad(x, ((0, 0), (0, N_pad - N), (0, E_pad - E))).astype(bf16)

    # ---- specs ----
    act_spec = pl.BlockSpec((None, N_pad, E_pad), lambda b: (b, 0, 0))
    st_spec = pl.BlockSpec((None, 8, E_pad), lambda b: (b, 0, 0))

    def resident(shape):    # weights / vectors: same block every grid step
        nd = len(shape)
        return pl.BlockSpec(shape, lambda b, _nd=nd: (0,) * _nd)

    act_shape = jax.ShapeDtypeStruct((B, N_pad, E_pad), f32)
    st_shape = jax.ShapeDtypeStruct((B, 8, E_pad), f32)

    # ---- pass 1: attention + combine + residual, partial BN1 stats ----
    s1, st1 = pl.pallas_call(
        functools.partial(_attn_kernel, H=H, D=D, N=N, N_pad=N_pad),
        grid=(B,),
        in_specs=[act_spec, resident(wqkv.shape), resident(wc.shape),
                  resident(bc.shape)],
        out_specs=[act_spec, st_spec],
        out_shape=(act_shape, st_shape),
        compiler_params=_PARALLEL,
    )(x_p, wqkv, wc, bc)

    mean1, rstd1 = _finalize_stats(st1, B * N)

    # ---- pass 2: BN1 + feed-forward + residual, partial BN2 stats ----
    s2, st2 = pl.pallas_call(
        functools.partial(_bn_ff_kernel, N=N, N_pad=N_pad),
        grid=(B,),
        in_specs=[act_spec] + [resident(a.shape) for a in
                               (mean1, rstd1, g1, be1, w1, b1, w2, b2)],
        out_specs=[act_spec, st_spec],
        out_shape=(act_shape, st_shape),
        compiler_params=_PARALLEL,
    )(s1, mean1, rstd1, g1, be1, w1, b1, w2, b2)

    mean2, rstd2 = _finalize_stats(st2, B * N)

    # ---- pass 3: BN2 -> output ----
    out_p = pl.pallas_call(
        _bn_kernel,
        grid=(B,),
        in_specs=[act_spec] + [resident(a.shape) for a in
                               (mean2, rstd2, g2, be2)],
        out_specs=act_spec,
        out_shape=act_shape,
        compiler_params=_PARALLEL,
    )(s2, mean2, rstd2, g2, be2)

    return out_p[:, :N, :E]


# ---------------------------------------------------------------------------
# Pure-JAX f32 reference mirroring the PyTorch module semantics.
# ---------------------------------------------------------------------------
def encoder_layer_reference(x, params, *, head_num, qkv_dim):
    B, N, E = x.shape
    H, D = head_num, qkv_dim
    x2 = x.reshape(B * N, E)
    q = (x2 @ params["Wq"]).reshape(B, N, H, D).transpose(0, 2, 1, 3)
    k = (x2 @ params["Wk"]).reshape(B, N, H, D).transpose(0, 2, 1, 3)
    v = (x2 @ params["Wv"]).reshape(B, N, H, D).transpose(0, 2, 1, 3)
    score = jnp.einsum("bhnd,bhmd->bhnm", q, k) / np.sqrt(D)
    w = jax.nn.softmax(score, axis=-1)
    o = jnp.einsum("bhnm,bhmd->bhnd", w, v).transpose(0, 2, 1, 3).reshape(B * N, H * D)
    mh = o @ params["Wc"] + params["bc"]

    def bn(s, gamma, beta):
        mean = s.mean(0, keepdims=True)
        var = ((s - mean) ** 2).mean(0, keepdims=True)
        return (s - mean) / jnp.sqrt(var + EPS) * gamma + beta

    out1 = bn(x2 + mh, params["g1"], params["be1"])
    ff = jnp.maximum(out1 @ params["W1"] + params["b1"], 0.0) @ params["W2"] + params["b2"]
    out3 = bn(out1 + ff, params["g2"], params["be2"])
    return out3.reshape(B, N, E)


def init_params(key, *, embedding_dim, head_num, qkv_dim, ff_hidden_dim):
    E, HD, F = embedding_dim, head_num * qkv_dim, ff_hidden_dim
    ks = jax.random.split(key, 8)
    f32 = jnp.float32
    return {
        # projection weights stored (in, out); biases/BN params as (1, feat)
        "Wq": 0.1 * jax.random.normal(ks[0], (E, HD), f32),
        "Wk": 0.1 * jax.random.normal(ks[1], (E, HD), f32),
        "Wv": 0.1 * jax.random.normal(ks[2], (E, HD), f32),
        "Wc": 0.1 * jax.random.normal(ks[3], (HD, E), f32),
        "bc": 0.1 * jax.random.normal(ks[4], (1, E), f32),
        "W1": 0.1 * jax.random.normal(ks[5], (E, F), f32),
        "b1": 0.1 * jax.random.normal(ks[6], (1, F), f32),
        "W2": 0.1 * jax.random.normal(ks[7], (F, E), f32),
        "b2": jnp.zeros((1, E), f32),
        # BatchNorm1d affine init: weight=1, bias=0
        "g1": jnp.ones((1, E), f32), "be1": jnp.zeros((1, E), f32),
        "g2": jnp.ones((1, E), f32), "be2": jnp.zeros((1, E), f32),
    }


if __name__ == "__main__":
    # small shapes implied by the module: (batch, problem, embedding)
    B, N = 2, 8
    embedding_dim, head_num, qkv_dim, ff_hidden_dim = 32, 4, 8, 32

    key = jax.random.PRNGKey(0)
    kx, kp = jax.random.split(key)
    x = jax.random.normal(kx, (B, N, embedding_dim), jnp.float32)
    params = init_params(kp, embedding_dim=embedding_dim, head_num=head_num,
                         qkv_dim=qkv_dim, ff_hidden_dim=ff_hidden_dim)

    fwd = jax.jit(functools.partial(encoder_layer, head_num=head_num,
                                    qkv_dim=qkv_dim))
    out = jax.block_until_ready(fwd(x, params))

    ref = jax.block_until_ready(
        encoder_layer_reference(x, params, head_num=head_num, qkv_dim=qkv_dim))
    # bf16 matmuls vs f32 reference -> relaxed tolerance
    np.testing.assert_allclose(np.asarray(out), np.asarray(ref),
                               rtol=3e-2, atol=3e-2)

    print("KERNEL_OK")
</pallas_src>

<mosaic_0001>
module attributes {stable_mosaic.version = 11 : i64} {
  func.func @_attn_kernel(%arg0: i32, %arg1: memref<1x8x128xbf16, #tpu.memory_space<vmem>>, %arg2: memref<12x128x32xbf16, #tpu.memory_space<vmem>>, %arg3: memref<4x32x128xbf16, #tpu.memory_space<vmem>>, %arg4: memref<1x128xf32, #tpu.memory_space<vmem>>, %arg5: memref<1x8x128xf32, #tpu.memory_space<vmem>>, %arg6: memref<1x8x128xf32, #tpu.memory_space<vmem>>) attributes {dimension_semantics = [#tpu.dimension_semantics<parallel>], iteration_bounds = array<i64: 2>, scalar_prefetch = 0 : i64, scratch_operands = 0 : i64, tpu.core_type = #tpu.core_type<tc>, window_params = [{transform_indices = @transform_0, window_bounds = array<i64: 1, 8, 128>}, {pipeline_mode = #tpu.pipeline_mode<synchronous>, transform_indices = @transform_1, window_bounds = array<i64: 12, 128, 32>}, {pipeline_mode = #tpu.pipeline_mode<synchronous>, transform_indices = @transform_2, window_bounds = array<i64: 4, 32, 128>}, {pipeline_mode = #tpu.pipeline_mode<synchronous>, transform_indices = @transform_3, window_bounds = array<i64: 1, 128>}, {transform_indices = @transform_4, window_bounds = array<i64: 1, 8, 128>}, {transform_indices = @transform_5, window_bounds = array<i64: 1, 8, 128>}]} {
    %c0 = arith.constant 0 : index
    %c0_0 = arith.constant 0 : index
    %c0_1 = arith.constant 0 : index
    %0 = vector.load %arg1[%c0, %c0_0, %c0_1] : memref<1x8x128xbf16, #tpu.memory_space<vmem>>, vector<1x8x128xbf16>
    %1 = vector.shape_cast %0 : vector<1x8x128xbf16> to vector<8x128xbf16>
    %2 = vector.shape_cast %1 : vector<8x128xbf16> to vector<1x8x128xbf16>
    %3 = vector.broadcast %2 : vector<1x8x128xbf16> to vector<12x8x128xbf16>
    %c0_2 = arith.constant 0 : index
    %c0_3 = arith.constant 0 : index
    %c0_4 = arith.constant 0 : index
    %4 = vector.load %arg2[%c0_2, %c0_3, %c0_4] : memref<12x128x32xbf16, #tpu.memory_space<vmem>>, vector<12x128x32xbf16>
    "tpu.trace_start"() <{level = 10 : i32, message = "hne,hed->hnd"}> : () -> ()
    %cst = arith.constant dense<0.000000e+00> : vector<12x8x32xf32>
    %5 = tpu.matmul %3, %4, %cst {dimension_numbers = #tpu.dot_dimension_numbers<[2], [1], [1], [2], [0, 0, 0, 1, 1, 2], [0], [0]>} : vector<12x8x128xbf16>, vector<12x128x32xbf16>, vector<12x8x32xf32> -> vector<12x8x32xf32>
    "tpu.trace_stop"() : () -> ()
    %6 = arith.truncf %5 : vector<12x8x32xf32> to vector<12x8x32xbf16>
    %7 = vector.extract_strided_slice %6 {offsets = [0, 0, 0], sizes = [4, 8, 32], strides = [1, 1, 1]} : vector<12x8x32xbf16> to vector<4x8x32xbf16>
    %8 = vector.extract_strided_slice %6 {offsets = [4, 0, 0], sizes = [4, 8, 32], strides = [1, 1, 1]} : vector<12x8x32xbf16> to vector<4x8x32xbf16>
    %9 = vector.extract_strided_slice %6 {offsets = [8, 0, 0], sizes = [4, 8, 32], strides = [1, 1, 1]} : vector<12x8x32xbf16> to vector<4x8x32xbf16>
    "tpu.trace_start"() <{level = 10 : i32, message = "hnd,hmd->hnm"}> : () -> ()
    %cst_5 = arith.constant dense<0.000000e+00> : vector<4x8x8xf32>
    %10 = tpu.matmul %7, %8, %cst_5 {dimension_numbers = #tpu.dot_dimension_numbers<[2], [2], [1], [1], [0, 0, 0, 1, 1, 1], [0], [0]>} : vector<4x8x32xbf16>, vector<4x8x32xbf16>, vector<4x8x8xf32> -> vector<4x8x8xf32>
    "tpu.trace_stop"() : () -> ()
    %cst_6 = arith.constant 0.353553385 : f32
    %11 = vector.broadcast %cst_6 : f32 to vector<4x8x8xf32>
    %12 = arith.mulf %10, %11 : vector<4x8x8xf32>
    %cst_7 = arith.constant dense<0xFF800000> : vector<4x8xf32>
    %13 = vector.multi_reduction <maximumf>, %12, %cst_7 [2] : vector<4x8x8xf32> to vector<4x8xf32>
    %14 = vector.shape_cast %13 : vector<4x8xf32> to vector<4x8x1xf32>
    %15 = vector.broadcast %14 : vector<4x8x1xf32> to vector<4x8x8xf32>
    %16 = arith.subf %12, %15 : vector<4x8x8xf32>
    %17 = math.exp %16 : vector<4x8x8xf32>
    %cst_8 = arith.constant dense<0.000000e+00> : vector<4x8xf32>
    %18 = vector.multi_reduction <add>, %17, %cst_8 [2] : vector<4x8x8xf32> to vector<4x8xf32>
    %19 = vector.shape_cast %18 : vector<4x8xf32> to vector<4x8x1xf32>
    %20 = tpu.reciprocal %19 {approx = true} : vector<4x8x1xf32> -> vector<4x8x1xf32>
    %21 = vector.broadcast %20 : vector<4x8x1xf32> to vector<4x8x8xf32>
    %22 = arith.mulf %17, %21 : vector<4x8x8xf32>
    %23 = arith.truncf %22 : vector<4x8x8xf32> to vector<4x8x8xbf16>
    "tpu.trace_start"() <{level = 10 : i32, message = "hnm,hmd->hnd"}> : () -> ()
    %cst_9 = arith.constant dense<0.000000e+00> : vector<4x8x32xf32>
    %24 = tpu.matmul %23, %9, %cst_9 {dimension_numbers = #tpu.dot_dimension_numbers<[2], [1], [1], [2], [0, 0, 0, 1, 1, 2], [0], [0]>} : vector<4x8x8xbf16>, vector<4x8x32xbf16>, vector<4x8x32xf32> -> vector<4x8x32xf32>
    "tpu.trace_stop"() : () -> ()
    %25 = arith.truncf %24 : vector<4x8x32xf32> to vector<4x8x32xbf16>
    %c0_10 = arith.constant 0 : index
    %c0_11 = arith.constant 0 : index
    %c0_12 = arith.constant 0 : index
    %26 = vector.load %arg3[%c0_10, %c0_11, %c0_12] : memref<4x32x128xbf16, #tpu.memory_space<vmem>>, vector<4x32x128xbf16>
    "tpu.trace_start"() <{level = 10 : i32, message = "hnd,hde->hne"}> : () -> ()
    %cst_13 = arith.constant dense<0.000000e+00> : vector<4x8x128xf32>
    %27 = tpu.matmul %25, %26, %cst_13 {dimension_numbers = #tpu.dot_dimension_numbers<[2], [1], [1], [2], [0, 0, 0, 1, 1, 2], [0], [0]>} : vector<4x8x32xbf16>, vector<4x32x128xbf16>, vector<4x8x128xf32> -> vector<4x8x128xf32>
    "tpu.trace_stop"() : () -> ()
    %cst_14 = arith.constant dense<0.000000e+00> : vector<8x128xf32>
    %28 = vector.multi_reduction <add>, %27, %cst_14 [0] : vector<4x8x128xf32> to vector<8x128xf32>
    %c0_15 = arith.constant 0 : index
    %c0_16 = arith.constant 0 : index
    %29 = vector.load %arg4[%c0_15, %c0_16] : memref<1x128xf32, #tpu.memory_space<vmem>>, vector<1x128xf32>
    %30 = vector.broadcast %29 : vector<1x128xf32> to vector<8x128xf32>
    %31 = arith.addf %28, %30 : vector<8x128xf32>
    %32 = arith.extf %1 : vector<8x128xbf16> to vector<8x128xf32>
    %33 = arith.addf %32, %31 : vector<8x128xf32>
    %c0_17 = arith.constant 0 : index
    %c0_18 = arith.constant 0 : index
    %c0_19 = arith.constant 0 : index
    %34 = vector.load %arg5[%c0_17, %c0_18, %c0_19] : memref<1x8x128xf32, #tpu.memory_space<vmem>>, vector<1x8x128xf32>
    %35 = vector.shape_cast %34 : vector<1x8x128xf32> to vector<8x128xf32>
    %36 = vector.shape_cast %33 : vector<8x128xf32> to vector<1x8x128xf32>
    tpu.vector_store %arg5[%c0_17, %c0_18, %c0_19], %36 {strides = array<i32>} : memref<1x8x128xf32, #tpu.memory_space<vmem>>, vector<1x8x128xf32>,
    %cst_20 = arith.constant 0.000000e+00 : f32
    %37 = vector.broadcast %cst_20 : f32 to vector<8x128xf32>
    %c0_21 = arith.constant 0 : index
    %c0_22 = arith.constant 0 : index
    %c0_23 = arith.constant 0 : index
    %38 = vector.load %arg6[%c0_21, %c0_22, %c0_23] : memref<1x8x128xf32, #tpu.memory_space<vmem>>, vector<1x8x128xf32>
    %39 = vector.shape_cast %38 : vector<1x8x128xf32> to vector<8x128xf32>
    %40 = vector.shape_cast %37 : vector<8x128xf32> to vector<1x8x128xf32>
    tpu.vector_store %arg6[%c0_21, %c0_22, %c0_23], %40 {strides = array<i32>} : memref<1x8x128xf32, #tpu.memory_space<vmem>>, vector<1x8x128xf32>,
    %cst_24 = arith.constant dense<0.000000e+00> : vector<128xf32>
    %41 = vector.multi_reduction <add>, %33, %cst_24 [0] : vector<8x128xf32> to vector<128xf32>
    %42 = vector.shape_cast %41 : vector<128xf32> to vector<1x128xf32>
    %c0_25 = arith.constant 0 : index
    %c0_26 = arith.constant 0 : index
    %c0_27 = arith.constant 0 : index
    %43 = vector.load %arg6[%c0_25, %c0_26, %c0_27] : memref<1x8x128xf32, #tpu.memory_space<vmem>>, vector<1x1x128xf32>
    %44 = vector.shape_cast %43 : vector<1x1x128xf32> to vector<1x128xf32>
    %45 = vector.shape_cast %42 : vector<1x128xf32> to vector<1x1x128xf32>
    tpu.vector_store %arg6[%c0_25, %c0_26, %c0_27], %45 {strides = array<i32>} : memref<1x8x128xf32, #tpu.memory_space<vmem>>, vector<1x1x128xf32>,
    %46 = arith.mulf %33, %33 : vector<8x128xf32>
    %cst_28 = arith.constant dense<0.000000e+00> : vector<128xf32>
    %47 = vector.multi_reduction <add>, %46, %cst_28 [0] : vector<8x128xf32> to vector<128xf32>
    %48 = vector.shape_cast %47 : vector<128xf32> to vector<1x128xf32>
    %c0_29 = arith.constant 0 : index
    %c1 = arith.constant 1 : index
    %c0_30 = arith.constant 0 : index
    %49 = vector.load %arg6[%c0_29, %c1, %c0_30] : memref<1x8x128xf32, #tpu.memory_space<vmem>>, vector<1x1x128xf32>
    %50 = vector.shape_cast %49 : vector<1x1x128xf32> to vector<1x128xf32>
    %51 = vector.shape_cast %48 : vector<1x128xf32> to vector<1x1x128xf32>
    tpu.vector_store %arg6[%c0_29, %c1, %c0_30], %51 {strides = array<i32>} : memref<1x8x128xf32, #tpu.memory_space<vmem>>, vector<1x1x128xf32>,
    return
  }
  func.func @transform_0(%arg0: i32) -> (i32, i32, i32) {
    %c0_i32 = arith.constant 0 : i32
    %c0_i32_0 = arith.constant 0 : i32
    %c0_i32_1 = arith.constant 0 : i32
    return %arg0, %c0_i32, %c0_i32_0 : i32, i32, i32
  }
  func.func @transform_1(%arg0: i32) -> (i32, i32, i32) {
    %c0_i32 = arith.constant 0 : i32
    %c0_i32_0 = arith.constant 0 : i32
    %c0_i32_1 = arith.constant 0 : i32
    %c0_i32_2 = arith.constant 0 : i32
    return %c0_i32, %c0_i32_0, %c0_i32_1 : i32, i32, i32
  }
  func.func @transform_2(%arg0: i32) -> (i32, i32, i32) {
    %c0_i32 = arith.constant 0 : i32
    %c0_i32_0 = arith.constant 0 : i32
    %c0_i32_1 = arith.constant 0 : i32
    %c0_i32_2 = arith.constant 0 : i32
    return %c0_i32, %c0_i32_0, %c0_i32_1 : i32, i32, i32
  }
  func.func @transform_3(%arg0: i32) -> (i32, i32) {
    %c0_i32 = arith.constant 0 : i32
    %c0_i32_0 = arith.constant 0 : i32
    %c0_i32_1 = arith.constant 0 : i32
    return %c0_i32, %c0_i32_0 : i32, i32
  }
  func.func @transform_4(%arg0: i32) -> (i32, i32, i32) {
    %c0_i32 = arith.constant 0 : i32
    %c0_i32_0 = arith.constant 0 : i32
    %c0_i32_1 = arith.constant 0 : i32
    return %arg0, %c0_i32, %c0_i32_0 : i32, i32, i32
  }
  func.func @transform_5(%arg0: i32) -> (i32, i32, i32) {
    %c0_i32 = arith.constant 0 : i32
    %c0_i32_0 = arith.constant 0 : i32
    %c0_i32_1 = arith.constant 0 : i32
    return %arg0, %c0_i32, %c0_i32_0 : i32, i32, i32
  }
}

module attributes {stable_mosaic.version = 11 : i64} {
  func.func @_bn_kernel(%arg0: i32, %arg1: memref<1x8x128xf32, #tpu.memory_space<vmem>>, %arg2: memref<1x128xf32, #tpu.memory_space<vmem>>, %arg3: memref<1x128xf32, #tpu.memory_space<vmem>>, %arg4: memref<1x128xf32, #tpu.memory_space<vmem>>, %arg5: memref<1x128xf32, #tpu.memory_space<vmem>>, %arg6: memref<1x8x128xf32, #tpu.memory_space<vmem>>) attributes {dimension_semantics = [#tpu.dimension_semantics<parallel>], iteration_bounds = array<i64: 2>, scalar_prefetch = 0 : i64, scratch_operands = 0 : i64, tpu.core_type = #tpu.core_type<tc>, window_params = [{transform_indices = @transform_0, window_bounds = array<i64: 1, 8, 128>}, {pipeline_mode = #tpu.pipeline_mode<synchronous>, transform_indices = @transform_1, window_bounds = array<i64: 1, 128>}, {pipeline_mode = #tpu.pipeline_mode<synchronous>, transform_indices = @transform_2, window_bounds = array<i64: 1, 128>}, {pipeline_mode = #tpu.pipeline_mode<synchronous>, transform_indices = @transform_3, window_bounds = array<i64: 1, 128>}, {pipeline_mode = #tpu.pipeline_mode<synchronous>, transform_indices = @transform_4, window_bounds = array<i64: 1, 128>}, {transform_indices = @transform_5, window_bounds = array<i64: 1, 8, 128>}]} {
    %c0 = arith.constant 0 : index
    %c0_0 = arith.constant 0 : index
    %c0_1 = arith.constant 0 : index
    %0 = vector.load %arg1[%c0, %c0_0, %c0_1] : memref<1x8x128xf32, #tpu.memory_space<vmem>>, vector<1x8x128xf32>
    %1 = vector.shape_cast %0 : vector<1x8x128xf32> to vector<8x128xf32>
    %c0_2 = arith.constant 0 : index
    %c0_3 = arith.constant 0 : index
    %2 = vector.load %arg2[%c0_2, %c0_3] : memref<1x128xf32, #tpu.memory_space<vmem>>, vector<1x128xf32>
    %3 = vector.broadcast %2 : vector<1x128xf32> to vector<8x128xf32>
    %4 = arith.subf %1, %3 : vector<8x128xf32>
    %c0_4 = arith.constant 0 : index
    %c0_5 = arith.constant 0 : index
    %5 = vector.load %arg3[%c0_4, %c0_5] : memref<1x128xf32, #tpu.memory_space<vmem>>, vector<1x128xf32>
    %6 = vector.broadcast %5 : vector<1x128xf32> to vector<8x128xf32>
    %7 = arith.mulf %4, %6 : vector<8x128xf32>
    %c0_6 = arith.constant 0 : index
    %c0_7 = arith.constant 0 : index
    %8 = vector.load %arg4[%c0_6, %c0_7] : memref<1x128xf32, #tpu.memory_space<vmem>>, vector<1x128xf32>
    %9 = vector.broadcast %8 : vector<1x128xf32> to vector<8x128xf32>
    %10 = arith.mulf %7, %9 : vector<8x128xf32>
    %c0_8 = arith.constant 0 : index
    %c0_9 = arith.constant 0 : index
    %11 = vector.load %arg5[%c0_8, %c0_9] : memref<1x128xf32, #tpu.memory_space<vmem>>, vector<1x128xf32>
    %12 = vector.broadcast %11 : vector<1x128xf32> to vector<8x128xf32>
    %13 = arith.addf %10, %12 : vector<8x128xf32>
    %c0_10 = arith.constant 0 : index
    %c0_11 = arith.constant 0 : index
    %c0_12 = arith.constant 0 : index
    %14 = vector.load %arg6[%c0_10, %c0_11, %c0_12] : memref<1x8x128xf32, #tpu.memory_space<vmem>>, vector<1x8x128xf32>
    %15 = vector.shape_cast %14 : vector<1x8x128xf32> to vector<8x128xf32>
    %16 = vector.shape_cast %13 : vector<8x128xf32> to vector<1x8x128xf32>
    tpu.vector_store %arg6[%c0_10, %c0_11, %c0_12], %16 {strides = array<i32>} : memref<1x8x128xf32, #tpu.memory_space<vmem>>, vector<1x8x128xf32>,
    return
  }
  func.func @transform_0(%arg0: i32) -> (i32, i32, i32) {
    %c0_i32 = arith.constant 0 : i32
    %c0_i32_0 = arith.constant 0 : i32
    %c0_i32_1 = arith.constant 0 : i32
    return %arg0, %c0_i32, %c0_i32_0 : i32, i32, i32
  }
  func.func @transform_1(%arg0: i32) -> (i32, i32) {
    %c0_i32 = arith.constant 0 : i32
    %c0_i32_0 = arith.constant 0 : i32
    %c0_i32_1 = arith.constant 0 : i32
    return %c0_i32, %c0_i32_0 : i32, i32
  }
  func.func @transform_2(%arg0: i32) -> (i32, i32) {
    %c0_i32 = arith.constant 0 : i32
    %c0_i32_0 = arith.constant 0 : i32
    %c0_i32_1 = arith.constant 0 : i32
    return %c0_i32, %c0_i32_0 : i32, i32
  }
  func.func @transform_3(%arg0: i32) -> (i32, i32) {
    %c0_i32 = arith.constant 0 : i32
    %c0_i32_0 = arith.constant 0 : i32
    %c0_i32_1 = arith.constant 0 : i32
    return %c0_i32, %c0_i32_0 : i32, i32
  }
  func.func @transform_4(%arg0: i32) -> (i32, i32) {
    %c0_i32 = arith.constant 0 : i32
    %c0_i32_0 = arith.constant 0 : i32
    %c0_i32_1 = arith.constant 0 : i32
    return %c0_i32, %c0_i32_0 : i32, i32
  }
  func.func @transform_5(%arg0: i32) -> (i32, i32, i32) {
    %c0_i32 = arith.constant 0 : i32
    %c0_i32_0 = arith.constant 0 : i32
    %c0_i32_1 = arith.constant 0 : i32
    return %arg0, %c0_i32, %c0_i32_0 : i32, i32, i32
  }
}

module attributes {stable_mosaic.version = 11 : i64} {
  func.func @_bn_ff_kernel(%arg0: i32, %arg1: memref<1x8x128xf32, #tpu.memory_space<vmem>>, %arg2: memref<1x128xf32, #tpu.memory_space<vmem>>, %arg3: memref<1x128xf32, #tpu.memory_space<vmem>>, %arg4: memref<1x128xf32, #tpu.memory_space<vmem>>, %arg5: memref<1x128xf32, #tpu.memory_space<vmem>>, %arg6: memref<128x128xbf16, #tpu.memory_space<vmem>>, %arg7: memref<1x128xf32, #tpu.memory_space<vmem>>, %arg8: memref<128x128xbf16, #tpu.memory_space<vmem>>, %arg9: memref<1x128xf32, #tpu.memory_space<vmem>>, %arg10: memref<1x8x128xf32, #tpu.memory_space<vmem>>, %arg11: memref<1x8x128xf32, #tpu.memory_space<vmem>>) attributes {dimension_semantics = [#tpu.dimension_semantics<parallel>], iteration_bounds = array<i64: 2>, scalar_prefetch = 0 : i64, scratch_operands = 0 : i64, tpu.core_type = #tpu.core_type<tc>, window_params = [{transform_indices = @transform_0, window_bounds = array<i64: 1, 8, 128>}, {pipeline_mode = #tpu.pipeline_mode<synchronous>, transform_indices = @transform_1, window_bounds = array<i64: 1, 128>}, {pipeline_mode = #tpu.pipeline_mode<synchronous>, transform_indices = @transform_2, window_bounds = array<i64: 1, 128>}, {pipeline_mode = #tpu.pipeline_mode<synchronous>, transform_indices = @transform_3, window_bounds = array<i64: 1, 128>}, {pipeline_mode = #tpu.pipeline_mode<synchronous>, transform_indices = @transform_4, window_bounds = array<i64: 1, 128>}, {pipeline_mode = #tpu.pipeline_mode<synchronous>, transform_indices = @transform_5, window_bounds = array<i64: 128, 128>}, {pipeline_mode = #tpu.pipeline_mode<synchronous>, transform_indices = @transform_6, window_bounds = array<i64: 1, 128>}, {pipeline_mode = #tpu.pipeline_mode<synchronous>, transform_indices = @transform_7, window_bounds = array<i64: 128, 128>}, {pipeline_mode = #tpu.pipeline_mode<synchronous>, transform_indices = @transform_8, window_bounds = array<i64: 1, 128>}, {transform_indices = @transform_9, window_bounds = array<i64: 1, 8, 128>}, {transform_indices = @transform_10, window_bounds = array<i64: 1, 8, 128>}]} {
    %c0 = arith.constant 0 : index
    %c0_0 = arith.constant 0 : index
    %c0_1 = arith.constant 0 : index
    %0 = vector.load %arg1[%c0, %c0_0, %c0_1] : memref<1x8x128xf32, #tpu.memory_space<vmem>>, vector<1x8x128xf32>
    %1 = vector.shape_cast %0 : vector<1x8x128xf32> to vector<8x128xf32>
    %c0_2 = arith.constant 0 : index
    %c0_3 = arith.constant 0 : index
    %2 = vector.load %arg2[%c0_2, %c0_3] : memref<1x128xf32, #tpu.memory_space<vmem>>, vector<1x128xf32>
    %3 = vector.broadcast %2 : vector<1x128xf32> to vector<8x128xf32>
    %4 = arith.subf %1, %3 : vector<8x128xf32>
    %c0_4 = arith.constant 0 : index
    %c0_5 = arith.constant 0 : index
    %5 = vector.load %arg3[%c0_4, %c0_5] : memref<1x128xf32, #tpu.memory_space<vmem>>, vector<1x128xf32>
    %6 = vector.broadcast %5 : vector<1x128xf32> to vector<8x128xf32>
    %7 = arith.mulf %4, %6 : vector<8x128xf32>
    %c0_6 = arith.constant 0 : index
    %c0_7 = arith.constant 0 : index
    %8 = vector.load %arg4[%c0_6, %c0_7] : memref<1x128xf32, #tpu.memory_space<vmem>>, vector<1x128xf32>
    %9 = vector.broadcast %8 : vector<1x128xf32> to vector<8x128xf32>
    %10 = arith.mulf %7, %9 : vector<8x128xf32>
    %c0_8 = arith.constant 0 : index
    %c0_9 = arith.constant 0 : index
    %11 = vector.load %arg5[%c0_8, %c0_9] : memref<1x128xf32, #tpu.memory_space<vmem>>, vector<1x128xf32>
    %12 = vector.broadcast %11 : vector<1x128xf32> to vector<8x128xf32>
    %13 = arith.addf %10, %12 : vector<8x128xf32>
    %14 = arith.truncf %13 : vector<8x128xf32> to vector<8x128xbf16>
    %c0_10 = arith.constant 0 : index
    %c0_11 = arith.constant 0 : index
    %15 = vector.load %arg6[%c0_10, %c0_11] : memref<128x128xbf16, #tpu.memory_space<vmem>>, vector<128x128xbf16>
    %cst = arith.constant dense<0.000000e+00> : vector<8x128xf32>
    %16 = tpu.matmul %14, %15, %cst {dimension_numbers = #tpu.dot_dimension_numbers<[1], [0], [0], [1], [0, 0, 1, 1], [], []>} : vector<8x128xbf16>, vector<128x128xbf16>, vector<8x128xf32> -> vector<8x128xf32>
    %c0_12 = arith.constant 0 : index
    %c0_13 = arith.constant 0 : index
    %17 = vector.load %arg7[%c0_12, %c0_13] : memref<1x128xf32, #tpu.memory_space<vmem>>, vector<1x128xf32>
    %18 = vector.broadcast %17 : vector<1x128xf32> to vector<8x128xf32>
    %19 = arith.addf %16, %18 : vector<8x128xf32>
    %cst_14 = arith.constant 0.000000e+00 : f32
    %20 = vector.broadcast %cst_14 : f32 to vector<8x128xf32>
    %21 = arith.maximumf %19, %20 : vector<8x128xf32>
    %22 = arith.truncf %21 : vector<8x128xf32> to vector<8x128xbf16>
    %c0_15 = arith.constant 0 : index
    %c0_16 = arith.constant 0 : index
    %23 = vector.load %arg8[%c0_15, %c0_16] : memref<128x128xbf16, #tpu.memory_space<vmem>>, vector<128x128xbf16>
    %cst_17 = arith.constant dense<0.000000e+00> : vector<8x128xf32>
    %24 = tpu.matmul %22, %23, %cst_17 {dimension_numbers = #tpu.dot_dimension_numbers<[1], [0], [0], [1], [0, 0, 1, 1], [], []>} : vector<8x128xbf16>, vector<128x128xbf16>, vector<8x128xf32> -> vector<8x128xf32>
    %c0_18 = arith.constant 0 : index
    %c0_19 = arith.constant 0 : index
    %25 = vector.load %arg9[%c0_18, %c0_19] : memref<1x128xf32, #tpu.memory_space<vmem>>, vector<1x128xf32>
    %26 = vector.broadcast %25 : vector<1x128xf32> to vector<8x128xf32>
    %27 = arith.addf %24, %26 : vector<8x128xf32>
    %28 = arith.addf %13, %27 : vector<8x128xf32>
    %c0_20 = arith.constant 0 : index
    %c0_21 = arith.constant 0 : index
    %c0_22 = arith.constant 0 : index
    %29 = vector.load %arg10[%c0_20, %c0_21, %c0_22] : memref<1x8x128xf32, #tpu.memory_space<vmem>>, vector<1x8x128xf32>
    %30 = vector.shape_cast %29 : vector<1x8x128xf32> to vector<8x128xf32>
    %31 = vector.shape_cast %28 : vector<8x128xf32> to vector<1x8x128xf32>
    tpu.vector_store %arg10[%c0_20, %c0_21, %c0_22], %31 {strides = array<i32>} : memref<1x8x128xf32, #tpu.memory_space<vmem>>, vector<1x8x128xf32>,
    %cst_23 = arith.constant 0.000000e+00 : f32
    %32 = vector.broadcast %cst_23 : f32 to vector<8x128xf32>
    %c0_24 = arith.constant 0 : index
    %c0_25 = arith.constant 0 : index
    %c0_26 = arith.constant 0 : index
    %33 = vector.load %arg11[%c0_24, %c0_25, %c0_26] : memref<1x8x128xf32, #tpu.memory_space<vmem>>, vector<1x8x128xf32>
    %34 = vector.shape_cast %33 : vector<1x8x128xf32> to vector<8x128xf32>
    %35 = vector.shape_cast %32 : vector<8x128xf32> to vector<1x8x128xf32>
    tpu.vector_store %arg11[%c0_24, %c0_25, %c0_26], %35 {strides = array<i32>} : memref<1x8x128xf32, #tpu.memory_space<vmem>>, vector<1x8x128xf32>,
    %cst_27 = arith.constant dense<0.000000e+00> : vector<128xf32>
    %36 = vector.multi_reduction <add>, %28, %cst_27 [0] : vector<8x128xf32> to vector<128xf32>
    %37 = vector.shape_cast %36 : vector<128xf32> to vector<1x128xf32>
    %c0_28 = arith.constant 0 : index
    %c0_29 = arith.constant 0 : index
    %c0_30 = arith.constant 0 : index
    %38 = vector.load %arg11[%c0_28, %c0_29, %c0_30] : memref<1x8x128xf32, #tpu.memory_space<vmem>>, vector<1x1x128xf32>
    %39 = vector.shape_cast %38 : vector<1x1x128xf32> to vector<1x128xf32>
    %40 = vector.shape_cast %37 : vector<1x128xf32> to vector<1x1x128xf32>
    tpu.vector_store %arg11[%c0_28, %c0_29, %c0_30], %40 {strides = array<i32>} : memref<1x8x128xf32, #tpu.memory_space<vmem>>, vector<1x1x128xf32>,
    %41 = arith.mulf %28, %28 : vector<8x128xf32>
    %cst_31 = arith.constant dense<0.000000e+00> : vector<128xf32>
    %42 = vector.multi_reduction <add>, %41, %cst_31 [0] : vector<8x128xf32> to vector<128xf32>
    %43 = vector.shape_cast %42 : vector<128xf32> to vector<1x128xf32>
    %c0_32 = arith.constant 0 : index
    %c1 = arith.constant 1 : index
    %c0_33 = arith.constant 0 : index
    %44 = vector.load %arg11[%c0_32, %c1, %c0_33] : memref<1x8x128xf32, #tpu.memory_space<vmem>>, vector<1x1x128xf32>
    %45 = vector.shape_cast %44 : vector<1x1x128xf32> to vector<1x128xf32>
    %46 = vector.shape_cast %43 : vector<1x128xf32> to vector<1x1x128xf32>
    tpu.vector_store %arg11[%c0_32, %c1, %c0_33], %46 {strides = array<i32>} : memref<1x8x128xf32, #tpu.memory_space<vmem>>, vector<1x1x128xf32>,
    return
  }
  func.func @transform_0(%arg0: i32) -> (i32, i32, i32) {
    %c0_i32 = arith.constant 0 : i32
    %c0_i32_0 = arith.constant 0 : i32
    %c0_i32_1 = arith.constant 0 : i32
    return %arg0, %c0_i32, %c0_i32_0 : i32, i32, i32
  }
  func.func @transform_1(%arg0: i32) -> (i32, i32) {
    %c0_i32 = arith.constant 0 : i32
    %c0_i32_0 = arith.constant 0 : i32
    %c0_i32_1 = arith.constant 0 : i32
    return %c0_i32, %c0_i32_0 : i32, i32
  }
  func.func @transform_2(%arg0: i32) -> (i32, i32) {
    %c0_i32 = arith.constant 0 : i32
    %c0_i32_0 = arith.constant 0 : i32
    %c0_i32_1 = arith.constant 0 : i32
    return %c0_i32, %c0_i32_0 : i32, i32
  }
  func.func @transform_3(%arg0: i32) -> (i32, i32) {
    %c0_i32 = arith.constant 0 : i32
    %c0_i32_0 = arith.constant 0 : i32
    %c0_i32_1 = arith.constant 0 : i32
    return %c0_i32, %c0_i32_0 : i32, i32
  }
  func.func @transform_4(%arg0: i32) -> (i32, i32) {
    %c0_i32 = arith.constant 0 : i32
    %c0_i32_0 = arith.constant 0 : i32
    %c0_i32_1 = arith.constant 0 : i32
    return %c0_i32, %c0_i32_0 : i32, i32
  }
  func.func @transform_5(%arg0: i32) -> (i32, i32) {
    %c0_i32 = arith.constant 0 : i32
    %c0_i32_0 = arith.constant 0 : i32
    %c0_i32_1 = arith.constant 0 : i32
    return %c0_i32, %c0_i32_0 : i32, i32
  }
  func.func @transform_6(%arg0: i32) -> (i32, i32) {
    %c0_i32 = arith.constant 0 : i32
    %c0_i32_0 = arith.constant 0 : i32
    %c0_i32_1 = arith.constant 0 : i32
    return %c0_i32, %c0_i32_0 : i32, i32
  }
  func.func @transform_7(%arg0: i32) -> (i32, i32) {
    %c0_i32 = arith.constant 0 : i32
    %c0_i32_0 = arith.constant 0 : i32
    %c0_i32_1 = arith.constant 0 : i32
    return %c0_i32, %c0_i32_0 : i32, i32
  }
  func.func @transform_8(%arg0: i32) -> (i32, i32) {
    %c0_i32 = arith.constant 0 : i32
    %c0_i32_0 = arith.constant 0 : i32
    %c0_i32_1 = arith.constant 0 : i32
    return %c0_i32, %c0_i32_0 : i32, i32
  }
  func.func @transform_9(%arg0: i32) -> (i32, i32, i32) {
    %c0_i32 = arith.constant 0 : i32
    %c0_i32_0 = arith.constant 0 : i32
    %c0_i32_1 = arith.constant 0 : i32
    return %arg0, %c0_i32, %c0_i32_0 : i32, i32, i32
  }
  func.func @transform_10(%arg0: i32) -> (i32, i32, i32) {
    %c0_i32 = arith.constant 0 : i32
    %c0_i32_0 = arith.constant 0 : i32
    %c0_i32_1 = arith.constant 0 : i32
    return %arg0, %c0_i32, %c0_i32_0 : i32, i32, i32
  }
}

</mosaic_0001>

<llo_original>
// kernel: encoder_layer.5
$region0: #{encoder_layer.5}
  #allocation0 [shape = 'u32[]', space=smem, size = 0x4, offset = 0x4, fixed_abs, tag = 'smem constant byte address 0x4 - core index']
  #allocation1 [shape = 'u32[144,128]{1,0:T(1,128)}', space=vmem, size = 0x12000, scoped, tag = 'internal scratch']
  %s0 = inlined_call_operand.vmem [shape: f32[2,8,128], index: 0, kind: input, shape index: {}]
  %s1 = inlined_call_operand.vmem [shape: f32[1,128], index: 1, kind: input, shape index: {}]
  %s2 = inlined_call_operand.vmem [shape: f32[1,128], index: 2, kind: input, shape index: {}]
  %s3 = inlined_call_operand.vmem [shape: f32[1,128], index: 3, kind: input, shape index: {}]
  %s4 = inlined_call_operand.vmem [shape: f32[1,128], index: 4, kind: input, shape index: {}]
  %s5 = inlined_call_operand.hbm [shape: f32[2,8,128], index: 5, kind: output, shape index: {}]
  %s6 = sld [smem:[#allocation0]]
  $region53: #{encoder_layer.5} parent=0
    _
  %s8 = ssub.s32 1, %s6
  %s9 = scalar_select 0, %s8, %s6
  $region1: #{encoder_layer.5} parent=0
    #allocation2 [shape = 'u8[8192]{0}', space=vmem, size = 0x2000, scoped, tag = 'output window, operand 0']
    #allocation3 [shape = 's32[2]{0}', space=sflag, size = 0x8, scoped, tag = 'scoped memory for encoder_layer.5']
    %10 = vsyncpa [#allocation3], 0
    %s11 = scalar_lea.sflag [#allocation3], 1
    %12 = vsyncpa %s11, 0
    loop: start=0, step=1, limit=4
    $region2: #{encoder_layer.5} parent=1 // loop_pre_header
      _
    $region3: #{encoder_layer.5} parent=1 // loop_header
      %s14 = sphi 0, %s18
      %p15 = scmp.ge.s32.totalorder %s14, 4
      %s24 = sphi 0, %s26
      %s27 = sphi 0, %s24
      %s28 = sphi 0, %s27
      %s44 = sphi 0, %s28
      %s48 = sphi 0, %s48
      %s50 = sphi 0, %s48
      %s51 = sphi 0, %s50
      %s65 = sphi 0, %s51
      %s69 = sphi 0, %s69
      %s71 = sphi 0, %s69
      %s72 = sphi 0, %s71
      %s86 = sphi 0, %s72
      %s90 = sphi 0, %s90
      %s92 = sphi 0, %s90
      %s93 = sphi 0, %s92
      %s107 = sphi 0, %s93
      %s111 = sphi 0, %s111
      %s113 = sphi 0, %s111
      %s114 = sphi 0, %s113
      %s128 = sphi 0, %s114
      %s134 = sphi 0, %s136
      %s137 = sphi 0, %s134
      %s138 = sphi 0, %s137
      %s154 = sphi 0, %s138
    $region4: #{encoder_layer.5} parent=1 // loop_header_branch
      %17 = sbr.rel (%p15) target = $region8
    $region5: #{encoder_layer.5} parent=1 // loop_body
      %s19 = ssub.s32 %s14, 1
      %s20 = ssub.s32 %s14, 2
      %s21 = sadd.s32 %s14, 1
      %s22 = ssub.s32 %s14, %s21
      %p23 = scmp.eq.s32.totalorder %s22, 0
      %s25 = sadd.s32 %s24, 1
      %s26 = scalar_select %p23, %s24, %s25
      %p29 = pneg %p23
      %p30 = scmp.eq.s32.totalorder %s14, 1
      %p31 = por %p29, %p30
      %p32 = scmp.ne.s32.totalorder %s24, %s27
      %p33 = scmp.eq.s32.totalorder %s14, 0
      %p34 = por %p32, %p33
      %p35 = scmp.ne.s32.totalorder %s24, %s27
      %p36 = scmp.eq.s32.totalorder %s19, 1
      %p37 = por %p35, %p36
      %p38 = scmp.ne.s32.totalorder %s27, %s28
      %p39 = scmp.eq.s32.totalorder %s19, 0
      %p40 = por %p38, %p39
      %p41 = scmp.ne.s32.totalorder %s27, %s28
      %p42 = scmp.eq.s32.totalorder %s20, 1
      %p43 = por %p41, %p42
      %p45 = scmp.ne.s32.totalorder %s28, %s44
      %p46 = scmp.eq.s32.totalorder %s20, 0
      %p47 = por %p45, %p46
      %s49 = sadd.s32 %s48, 1
      %p52 = scmp.eq.s32.totalorder %s14, 1
      %p53 = scmp.ne.s32.totalorder %s48, %s50
      %p54 = scmp.eq.s32.totalorder %s14, 0
      %p55 = por %p53, %p54
      %p56 = scmp.ne.s32.totalorder %s48, %s50
      %p57 = scmp.eq.s32.totalorder %s19, 1
      %p58 = por %p56, %p57
      %p59 = scmp.ne.s32.totalorder %s50, %s51
      %p60 = scmp.eq.s32.totalorder %s19, 0
      %p61 = por %p59, %p60
      %p62 = scmp.ne.s32.totalorder %s50, %s51
      %p63 = scmp.eq.s32.totalorder %s20, 1
      %p64 = por %p62, %p63
      %p66 = scmp.ne.s32.totalorder %s51, %s65
      %p67 = scmp.eq.s32.totalorder %s20, 0
      %p68 = por %p66, %p67
      %s70 = sadd.s32 %s69, 1
      %p73 = scmp.eq.s32.totalorder %s14, 1
      %p74 = scmp.ne.s32.totalorder %s69, %s71
      %p75 = scmp.eq.s32.totalorder %s14, 0
      %p76 = por %p74, %p75
      %p77 = scmp.ne.s32.totalorder %s69, %s71
      %p78 = scmp.eq.s32.totalorder %s19, 1
      %p79 = por %p77, %p78
      %p80 = scmp.ne.s32.totalorder %s71, %s72
      %p81 = scmp.eq.s32.totalorder %s19, 0
      %p82 = por %p80, %p81
      %p83 = scmp.ne.s32.totalorder %s71, %s72
      %p84 = scmp.eq.s32.totalorder %s20, 1
      %p85 = por %p83, %p84
      %p87 = scmp.ne.s32.totalorder %s72, %s86
      %p88 = scmp.eq.s32.totalorder %s20, 0
      %p89 = por %p87, %p88
      %s91 = sadd.s32 %s90, 1
      %p94 = scmp.eq.s32.totalorder %s14, 1
      %p95 = scmp.ne.s32.totalorder %s90, %s92
      %p96 = scmp.eq.s32.totalorder %s14, 0
      %p97 = por %p95, %p96
      %p98 = scmp.ne.s32.totalorder %s90, %s92
      %p99 = scmp.eq.s32.totalorder %s19, 1
      %p100 = por %p98, %p99
      %p101 = scmp.ne.s32.totalorder %s92, %s93
      %p102 = scmp.eq.s32.totalorder %s19, 0
      %p103 = por %p101, %p102
      %p104 = scmp.ne.s32.totalorder %s92, %s93
      %p105 = scmp.eq.s32.totalorder %s20, 1
      %p106 = por %p104, %p105
      %p108 = scmp.ne.s32.totalorder %s93, %s107
      %p109 = scmp.eq.s32.totalorder %s20, 0
      %p110 = por %p108, %p109
      %s112 = sadd.s32 %s111, 1
      %p115 = scmp.eq.s32.totalorder %s14, 1
      %p116 = scmp.ne.s32.totalorder %s111, %s113
      %p117 = scmp.eq.s32.totalorder %s14, 0
      %p118 = por %p116, %p117
      %p119 = scmp.ne.s32.totalorder %s111, %s113
      %p120 = scmp.eq.s32.totalorder %s19, 1
      %p121 = por %p119, %p120
      %p122 = scmp.ne.s32.totalorder %s113, %s114
      %p123 = scmp.eq.s32.totalorder %s19, 0
      %p124 = por %p122, %p123
      %p125 = scmp.ne.s32.totalorder %s113, %s114
      %p126 = scmp.eq.s32.totalorder %s20, 1
      %p127 = por %p125, %p126
      %p129 = scmp.ne.s32.totalorder %s114, %s128
      %p130 = scmp.eq.s32.totalorder %s20, 0
      %p131 = por %p129, %p130
      %s132 = ssub.s32 %s14, %s21
      %p133 = scmp.eq.s32.totalorder %s132, 0
      %s135 = sadd.s32 %s134, 1
      %s136 = scalar_select %p133, %s134, %s135
      %p139 = pneg %p133
      %p140 = scmp.eq.s32.totalorder %s14, 1
      %p141 = por %p139, %p140
      %p142 = scmp.ne.s32.totalorder %s134, %s137
      %p143 = scmp.eq.s32.totalorder %s14, 0
      %p144 = por %p142, %p143
      %p145 = scmp.ne.s32.totalorder %s134, %s137
      %p146 = scmp.eq.s32.totalorder %s19, 1
      %p147 = por %p145, %p146
      %p148 = scmp.ne.s32.totalorder %s137, %s138
      %p149 = scmp.eq.s32.totalorder %s19, 0
      %p150 = por %p148, %p149
      %p151 = scmp.ne.s32.totalorder %s137, %s138
      %p152 = scmp.eq.s32.totalorder %s20, 1
      %p153 = por %p151, %p152
      %p155 = scmp.ne.s32.totalorder %s138, %s154
      %p156 = scmp.eq.s32.totalorder %s20, 0
      %p157 = por %p155, %p156
      %p158 = scmp.le.s32.totalorder 1, %s14
      %p159 = scmp.lt.s32.totalorder %s14, 3
      %p160 = pnand %p158, %p159
      %p161 = pneg %p160
      // Predicated region
      $region9: #{encoder_layer.5} parent=5 // pred_check
        _
      $region10: #{encoder_layer.5} parent=5 // pred_check_branch
        %163 = sbr.rel (%p160) target = $region12
      $region11: #{encoder_layer.5} parent=5 // pred_region
        %s164 = ssub.s32 %s14, 1
        // Predicated region
        $region13: #{encoder_layer.5} parent=11 // pred_check
          %p165 = pneg %p61
        $region14: #{encoder_layer.5} parent=11 // pred_check_branch
          %167 = sbr.rel (%p165) target = $region16
        $region15: #{encoder_layer.5} parent=11 // pred_region
          _
        $region16: #{encoder_layer.5} parent=11 // pred_fallthru
          _
        // Predicated region
        $region17: #{encoder_layer.5} parent=11 // pred_check
          %p168 = pneg %p82
        $region18: #{encoder_layer.5} parent=11 // pred_check_branch
          %170 = sbr.rel (%p168) target = $region20
        $region19: #{encoder_layer.5} parent=11 // pred_region
          _
        $region20: #{encoder_layer.5} parent=11 // pred_fallthru
          _
        // Predicated region
        $region21: #{encoder_layer.5} parent=11 // pred_check
          %p171 = pneg %p103
        $region22: #{encoder_layer.5} parent=11 // pred_check_branch
          %173 = sbr.rel (%p171) target = $region24
        $region23: #{encoder_layer.5} parent=11 // pred_region
          _
        $region24: #{encoder_layer.5} parent=11 // pred_fallthru
          _
        // Predicated region
        $region25: #{encoder_layer.5} parent=11 // pred_check
          %p174 = pneg %p124
        $region26: #{encoder_layer.5} parent=11 // pred_check_branch
          %176 = sbr.rel (%p174) target = $region28
        $region27: #{encoder_layer.5} parent=11 // pred_region
          _
        $region28: #{encoder_layer.5} parent=11 // pred_fallthru
          _
      $region12: #{encoder_layer.5} parent=5 // pred_fallthru
        _
      %p177 = scmp.lt.s32.totalorder %s14, 2
      // Predicated region
      $region29: #{encoder_layer.5} parent=5 // pred_check
        %p178 = pneg %p177
      $region30: #{encoder_layer.5} parent=5 // pred_check_branch
        %180 = sbr.rel (%p178) target = $region32
      $region31: #{encoder_layer.5} parent=5 // pred_region
        // Predicated region
        $region33: #{encoder_layer.5} parent=31 // pred_check
          %p181 = pneg %p34
        $region34: #{encoder_layer.5} parent=31 // pred_check_branch
          %183 = sbr.rel (%p181) target = $region36
        $region35: #{encoder_layer.5} parent=31 // pred_region
          %p184 = scmp.lt.s32.totalorder %s14, 1
          %s185 = scalar_select %p184, %s14, 1
          %s186 = smul.addr %s185, 8
          %s187 = scalar_lea.vmem %s0, %s186
        $region36: #{encoder_layer.5} parent=31 // pred_fallthru
          _
      $region32: #{encoder_layer.5} parent=5 // pred_fallthru
        _
      %p188 = scmp.le.s32.totalorder 1, %s14
      %p189 = scmp.lt.s32.totalorder %s14, 3
      %p190 = pnand %p188, %p189
      %p191 = pneg %p190
      // Predicated region
      $region37: #{encoder_layer.5} parent=5 // pred_check
        _
      $region38: #{encoder_layer.5} parent=5 // pred_check_branch
        %193 = sbr.rel (%p190) target = $region40
      $region39: #{encoder_layer.5} parent=5 // pred_region
        %s194 = ssub.s32 %s14, 1
        %p195 = scmp.lt.s32.totalorder %s19, 1
        %s196 = scalar_select %p195, %s19, 1
        %s197 = smul.addr %s196, 8
        %s198 = scalar_lea.vmem %s0, %s197
        %p199 = pneg %p40
        %p200 = pneg %p37
        %p201 = pneg %p61
        %p202 = pneg %p58
        %p203 = pneg %p82
        %p204 = pneg %p79
        %p205 = pneg %p103
        %p206 = pneg %p100
        %p207 = pneg %p124
        %p208 = pneg %p121
        %p209 = pneg %p150
        %p210 = pneg %p147
        %s211 = sand.u32 %s137, 1
        %s212 = scalar_lea.sflag [#allocation3], %s211
        %s213 = sand.u32 %s137, 1
        %s214 = smul.addr %s213, 8
        %s215 = scalar_lea.vmem [#allocation2], %s214
        %p216 = scmp.lt.s32.totalorder %s19, 1
        %s217 = scalar_select %p216, %s19, 1
        %s218 = smul.addr %s217, 8
        %s219 = scalar_lea.vmem %s0, %s218
        %v220 = vld [vmem:[%s219] sm:$0xff]
        %v221 = vld [vmem:[%s1] sm:$0x1]
        %v223 = vlaneseq
        %v224 = vshrl.u32 %v223, 7
        %v225 = vsub.s32 0, %v224
        %v226 = vrot.slane %v221, %v225
        %v228 = vsub.f32 %v220, %v226
        %v229 = vld [vmem:[%s2] sm:$0x1]
        %v231 = vlaneseq
        %v232 = vshrl.u32 %v231, 7
        %v233 = vsub.s32 0, %v232
        %v234 = vrot.slane %v229, %v233
        %v236 = vmul.f32 %v228, %v234
        %v237 = vld [vmem:[%s3] sm:$0x1]
        %v239 = vlaneseq
        %v240 = vshrl.u32 %v239, 7
        %v241 = vsub.s32 0, %v240
        %v242 = vrot.slane %v237, %v241
        %v244 = vmul.f32 %v236, %v242
        %v245 = vld [vmem:[%s4] sm:$0x1]
        %v247 = vlaneseq
        %v248 = vshrl.u32 %v247, 7
        %v249 = vsub.s32 0, %v248
        %v250 = vrot.slane %v245, %v249
        %v252 = vadd.f32 %v244, %v250
        %253 = vst [vmem:[%s215] sm:$0xff] %v252
        %s254 = sand.u32 %s137, 1
        %s255 = scalar_lea.sflag [#allocation3], %s254
        %s256 = sand.u32 %s137, 1
        %s257 = smul.addr %s256, 8
        %s258 = scalar_lea.vmem [#allocation2], %s257
        // Predicated region
        $region41: #{encoder_layer.5} parent=39 // pred_check
          %p259 = pneg %p147
        $region42: #{encoder_layer.5} parent=39 // pred_check_branch
          %261 = sbr.rel (%p259) target = $region44
        $region43: #{encoder_layer.5} parent=39 // pred_region
          %s263 = ssub.s32 128, 128
          %264 = vsyncadd %s255, %s263
          %s265 = smul.addr %s19, 128
          %s266 = scalar_lea.hbm %s5, %s265
          %s268 = sshll.u32 %s258, 4
          %s269 = int_to_ptr.vmem [resolvable:$true] %s268
          %271 = dma.vmem_to_hbm [thread:$0]  %s269, 128, %s266, %s255
        $region44: #{encoder_layer.5} parent=39 // pred_fallthru
          _
      $region40: #{encoder_layer.5} parent=5 // pred_fallthru
        _
      %p272 = scmp.le.s32.totalorder 2, %s14
      // Predicated region
      $region45: #{encoder_layer.5} parent=5 // pred_check
        %p273 = pneg %p272
      $region46: #{encoder_layer.5} parent=5 // pred_check_branch
        %275 = sbr.rel (%p273) target = $region48
      $region47: #{encoder_layer.5} parent=5 // pred_region
        %s276 = ssub.s32 %s14, 2
        // Predicated region
        $region49: #{encoder_layer.5} parent=47 // pred_check
          %p277 = pneg %p153
        $region50: #{encoder_layer.5} parent=47 // pred_check_branch
          %279 = sbr.rel (%p277) target = $region52
        $region51: #{encoder_layer.5} parent=47 // pred_region
          %s280 = sand.u32 %s138, 1
          %s281 = scalar_lea.sflag [#allocation3], %s280
          %s282 = sand.u32 %s138, 1
          %s283 = smul.addr %s282, 8
          %s284 = scalar_lea.vmem [#allocation2], %s283
          %285 = dma.done %s281, 128
        $region52: #{encoder_layer.5} parent=47 // pred_fallthru
          _
      $region48: #{encoder_layer.5} parent=5 // pred_fallthru
        _
    $region6: #{encoder_layer.5} parent=1 // loop_footer
      %s18 = sadd.s32 1, %s14
    $region7: #{encoder_layer.5} parent=1 // loop_footer_branch
      %13 = sbr.rel target = $region3
    $region8: #{encoder_layer.5} parent=1 // loop_exit
      _
    %286 = vsyncpa [#allocation3], 1
    %s287 = scalar_lea.sflag [#allocation3], 1
    %288 = vsyncpa %s287, 1

// kernel: encoder_layer.4
$region0: #{encoder_layer.4}
  #allocation0 [shape = 'u32[]', space=smem, size = 0x4, offset = 0x4, fixed_abs, tag = 'smem constant byte address 0x4 - core index']
  #allocation1 [shape = 'u32[144,128]{1,0:T(1,128)}', space=vmem, size = 0x12000, scoped, tag = 'internal scratch']
  %s0 = inlined_call_operand.vmem [shape: f32[2,8,128], index: 0, kind: input, shape index: {}]
  %s1 = inlined_call_operand.vmem [shape: f32[1,128], index: 1, kind: input, shape index: {}]
  %s2 = inlined_call_operand.vmem [shape: f32[1,128], index: 2, kind: input, shape index: {}]
  %s3 = inlined_call_operand.vmem [shape: f32[1,128], index: 3, kind: input, shape index: {}]
  %s4 = inlined_call_operand.vmem [shape: f32[1,128], index: 4, kind: input, shape index: {}]
  %s5 = inlined_call_operand.vmem [shape: bf16[128,128], index: 5, kind: input, shape index: {}]
  %s6 = inlined_call_operand.vmem [shape: f32[1,128], index: 6, kind: input, shape index: {}]
  %s7 = inlined_call_operand.vmem [shape: bf16[128,128], index: 7, kind: input, shape index: {}]
  %s8 = inlined_call_operand.vmem [shape: f32[1,128], index: 8, kind: input, shape index: {}]
  %s9 = inlined_call_operand.vmem [shape: f32[2,8,128], index: 9, kind: output, shape index: {0}]
  %s10 = inlined_call_operand.vmem [shape: f32[2,8,128], index: 10, kind: output, shape index: {1}]
  %11 = xla_tuple %s9, %s10
  %s12 = sld [smem:[#allocation0]]
  $region77: #{encoder_layer.4} parent=0
    _
  %s14 = ssub.s32 1, %s12
  %s15 = scalar_select 0, %s14, %s12
  loop: start=0, step=1, limit=4
  $region2: #{encoder_layer.4} parent=0 // loop_pre_header
    _
  $region3: #{encoder_layer.4} parent=0 // loop_header
    %s17 = sphi 0, %s21
    %p18 = scmp.ge.s32.totalorder %s17, 4
    %s27 = sphi 0, %s29
    %s30 = sphi 0, %s27
    %s31 = sphi 0, %s30
    %s47 = sphi 0, %s31
    %s51 = sphi 0, %s51
    %s53 = sphi 0, %s51
    %s54 = sphi 0, %s53
    %s68 = sphi 0, %s54
    %s72 = sphi 0, %s72
    %s74 = sphi 0, %s72
    %s75 = sphi 0, %s74
    %s89 = sphi 0, %s75
    %s93 = sphi 0, %s93
    %s95 = sphi 0, %s93
    %s96 = sphi 0, %s95
    %s110 = sphi 0, %s96
    %s114 = sphi 0, %s114
    %s116 = sphi 0, %s114
    %s117 = sphi 0, %s116
    %s131 = sphi 0, %s117
    %s135 = sphi 0, %s135
    %s137 = sphi 0, %s135
    %s138 = sphi 0, %s137
    %s152 = sphi 0, %s138
    %s156 = sphi 0, %s156
    %s158 = sphi 0, %s156
    %s159 = sphi 0, %s158
    %s173 = sphi 0, %s159
    %s177 = sphi 0, %s177
    %s179 = sphi 0, %s177
    %s180 = sphi 0, %s179
    %s194 = sphi 0, %s180
    %s198 = sphi 0, %s198
    %s200 = sphi 0, %s198
    %s201 = sphi 0, %s200
    %s215 = sphi 0, %s201
    %s221 = sphi 0, %s223
    %s224 = sphi 0, %s221
    %s225 = sphi 0, %s224
    %s241 = sphi 0, %s225
    %s247 = sphi 0, %s249
    %s250 = sphi 0, %s247
    %s251 = sphi 0, %s250
    %s267 = sphi 0, %s251
  $region4: #{encoder_layer.4} parent=0 // loop_header_branch
    %20 = sbr.rel (%p18) target = $region8
  $region5: #{encoder_layer.4} parent=0 // loop_body
    %s22 = ssub.s32 %s17, 1
    %s23 = ssub.s32 %s17, 2
    %s24 = sadd.s32 %s17, 1
    %s25 = ssub.s32 %s17, %s24
    %p26 = scmp.eq.s32.totalorder %s25, 0
    %s28 = sadd.s32 %s27, 1
    %s29 = scalar_select %p26, %s27, %s28
    %p32 = pneg %p26
    %p33 = scmp.eq.s32.totalorder %s17, 1
    %p34 = por %p32, %p33
    %p35 = scmp.ne.s32.totalorder %s27, %s30
    %p36 = scmp.eq.s32.totalorder %s17, 0
    %p37 = por %p35, %p36
    %p38 = scmp.ne.s32.totalorder %s27, %s30
    %p39 = scmp.eq.s32.totalorder %s22, 1
    %p40 = por %p38, %p39
    %p41 = scmp.ne.s32.totalorder %s30, %s31
    %p42 = scmp.eq.s32.totalorder %s22, 0
    %p43 = por %p41, %p42
    %p44 = scmp.ne.s32.totalorder %s30, %s31
    %p45 = scmp.eq.s32.totalorder %s23, 1
    %p46 = por %p44, %p45
    %p48 = scmp.ne.s32.totalorder %s31, %s47
    %p49 = scmp.eq.s32.totalorder %s23, 0
    %p50 = por %p48, %p49
    %s52 = sadd.s32 %s51, 1
    %p55 = scmp.eq.s32.totalorder %s17, 1
    %p56 = scmp.ne.s32.totalorder %s51, %s53
    %p57 = scmp.eq.s32.totalorder %s17, 0
    %p58 = por %p56, %p57
    %p59 = scmp.ne.s32.totalorder %s51, %s53
    %p60 = scmp.eq.s32.totalorder %s22, 1
    %p61 = por %p59, %p60
    %p62 = scmp.ne.s32.totalorder %s53, %s54
    %p63 = scmp.eq.s32.totalorder %s22, 0
    %p64 = por %p62, %p63
    %p65 = scmp.ne.s32.totalorder %s53, %s54
    %p66 = scmp.eq.s32.totalorder %s23, 1
    %p67 = por %p65, %p66
    %p69 = scmp.ne.s32.totalorder %s54, %s68
    %p70 = scmp.eq.s32.totalorder %s23, 0
    %p71 = por %p69, %p70
    %s73 = sadd.s32 %s72, 1
    %p76 = scmp.eq.s32.totalorder %s17, 1
    %p77 = scmp.ne.s32.totalorder %s72, %s74
    %p78 = scmp.eq.s32.totalorder %s17, 0
    %p79 = por %p77, %p78
    %p80 = scmp.ne.s32.totalorder %s72, %s74
    %p81 = scmp.eq.s32.totalorder %s22, 1
    %p82 = por %p80, %p81
    %p83 = scmp.ne.s32.totalorder %s74, %s75
    %p84 = scmp.eq.s32.totalorder %s22, 0
    %p85 = por %p83, %p84
    %p86 = scmp.ne.s32.totalorder %s74, %s75
    %p87 = scmp.eq.s32.totalorder %s23, 1
    %p88 = por %p86, %p87
    %p90 = scmp.ne.s32.totalorder %s75, %s89
    %p91 = scmp.eq.s32.totalorder %s23, 0
    %p92 = por %p90, %p91
    %s94 = sadd.s32 %s93, 1
    %p97 = scmp.eq.s32.totalorder %s17, 1
    %p98 = scmp.ne.s32.totalorder %s93, %s95
    %p99 = scmp.eq.s32.totalorder %s17, 0
    %p100 = por %p98, %p99
    %p101 = scmp.ne.s32.totalorder %s93, %s95
    %p102 = scmp.eq.s32.totalorder %s22, 1
    %p103 = por %p101, %p102
    %p104 = scmp.ne.s32.totalorder %s95, %s96
    %p105 = scmp.eq.s32.totalorder %s22, 0
    %p106 = por %p104, %p105
    %p107 = scmp.ne.s32.totalorder %s95, %s96
    %p108 = scmp.eq.s32.totalorder %s23, 1
    %p109 = por %p107, %p108
    %p111 = scmp.ne.s32.totalorder %s96, %s110
    %p112 = scmp.eq.s32.totalorder %s23, 0
    %p113 = por %p111, %p112
    %s115 = sadd.s32 %s114, 1
    %p118 = scmp.eq.s32.totalorder %s17, 1
    %p119 = scmp.ne.s32.totalorder %s114, %s116
    %p120 = scmp.eq.s32.totalorder %s17, 0
    %p121 = por %p119, %p120
    %p122 = scmp.ne.s32.totalorder %s114, %s116
    %p123 = scmp.eq.s32.totalorder %s22, 1
    %p124 = por %p122, %p123
    %p125 = scmp.ne.s32.totalorder %s116, %s117
    %p126 = scmp.eq.s32.totalorder %s22, 0
    %p127 = por %p125, %p126
    %p128 = scmp.ne.s32.totalorder %s116, %s117
    %p129 = scmp.eq.s32.totalorder %s23, 1
    %p130 = por %p128, %p129
    %p132 = scmp.ne.s32.totalorder %s117, %s131
    %p133 = scmp.eq.s32.totalorder %s23, 0
    %p134 = por %p132, %p133
    %s136 = sadd.s32 %s135, 1
    %p139 = scmp.eq.s32.totalorder %s17, 1
    %p140 = scmp.ne.s32.totalorder %s135, %s137
    %p141 = scmp.eq.s32.totalorder %s17, 0
    %p142 = por %p140, %p141
    %p143 = scmp.ne.s32.totalorder %s135, %s137
    %p144 = scmp.eq.s32.totalorder %s22, 1
    %p145 = por %p143, %p144
    %p146 = scmp.ne.s32.totalorder %s137, %s138
    %p147 = scmp.eq.s32.totalorder %s22, 0
    %p148 = por %p146, %p147
    %p149 = scmp.ne.s32.totalorder %s137, %s138
    %p150 = scmp.eq.s32.totalorder %s23, 1
    %p151 = por %p149, %p150
    %p153 = scmp.ne.s32.totalorder %s138, %s152
    %p154 = scmp.eq.s32.totalorder %s23, 0
    %p155 = por %p153, %p154
    %s157 = sadd.s32 %s156, 1
    %p160 = scmp.eq.s32.totalorder %s17, 1
    %p161 = scmp.ne.s32.totalorder %s156, %s158
    %p162 = scmp.eq.s32.totalorder %s17, 0
    %p163 = por %p161, %p162
    %p164 = scmp.ne.s32.totalorder %s156, %s158
    %p165 = scmp.eq.s32.totalorder %s22, 1
    %p166 = por %p164, %p165
    %p167 = scmp.ne.s32.totalorder %s158, %s159
    %p168 = scmp.eq.s32.totalorder %s22, 0
    %p169 = por %p167, %p168
    %p170 = scmp.ne.s32.totalorder %s158, %s159
    %p171 = scmp.eq.s32.totalorder %s23, 1
    %p172 = por %p170, %p171
    %p174 = scmp.ne.s32.totalorder %s159, %s173
    %p175 = scmp.eq.s32.totalorder %s23, 0
    %p176 = por %p174, %p175
    %s178 = sadd.s32 %s177, 1
    %p181 = scmp.eq.s32.totalorder %s17, 1
    %p182 = scmp.ne.s32.totalorder %s177, %s179
    %p183 = scmp.eq.s32.totalorder %s17, 0
    %p184 = por %p182, %p183
    %p185 = scmp.ne.s32.totalorder %s177, %s179
    %p186 = scmp.eq.s32.totalorder %s22, 1
    %p187 = por %p185, %p186
    %p188 = scmp.ne.s32.totalorder %s179, %s180
    %p189 = scmp.eq.s32.totalorder %s22, 0
    %p190 = por %p188, %p189
    %p191 = scmp.ne.s32.totalorder %s179, %s180
    %p192 = scmp.eq.s32.totalorder %s23, 1
    %p193 = por %p191, %p192
    %p195 = scmp.ne.s32.totalorder %s180, %s194
    %p196 = scmp.eq.s32.totalorder %s23, 0
    %p197 = por %p195, %p196
    %s199 = sadd.s32 %s198, 1
    %p202 = scmp.eq.s32.totalorder %s17, 1
    %p203 = scmp.ne.s32.totalorder %s198, %s200
    %p204 = scmp.eq.s32.totalorder %s17, 0
    %p205 = por %p203, %p204
    %p206 = scmp.ne.s32.totalorder %s198, %s200
    %p207 = scmp.eq.s32.totalorder %s22, 1
    %p208 = por %p206, %p207
    %p209 = scmp.ne.s32.totalorder %s200, %s201
    %p210 = scmp.eq.s32.totalorder %s22, 0
    %p211 = por %p209, %p210
    %p212 = scmp.ne.s32.totalorder %s200, %s201
    %p213 = scmp.eq.s32.totalorder %s23, 1
    %p214 = por %p212, %p213
    %p216 = scmp.ne.s32.totalorder %s201, %s215
    %p217 = scmp.eq.s32.totalorder %s23, 0
    %p218 = por %p216, %p217
    %s219 = ssub.s32 %s17, %s24
    %p220 = scmp.eq.s32.totalorder %s219, 0
    %s222 = sadd.s32 %s221, 1
    %s223 = scalar_select %p220, %s221, %s222
    %p226 = pneg %p220
    %p227 = scmp.eq.s32.totalorder %s17, 1
    %p228 = por %p226, %p227
    %p229 = scmp.ne.s32.totalorder %s221, %s224
    %p230 = scmp.eq.s32.totalorder %s17, 0
    %p231 = por %p229, %p230
    %p232 = scmp.ne.s32.totalorder %s221, %s224
    %p233 = scmp.eq.s32.totalorder %s22, 1
    %p234 = por %p232, %p233
    %p235 = scmp.ne.s32.totalorder %s224, %s225
    %p236 = scmp.eq.s32.totalorder %s22, 0
    %p237 = por %p235, %p236
    %p238 = scmp.ne.s32.totalorder %s224, %s225
    %p239 = scmp.eq.s32.totalorder %s23, 1
    %p240 = por %p238, %p239
    %p242 = scmp.ne.s32.totalorder %s225, %s241
    %p243 = scmp.eq.s32.totalorder %s23, 0
    %p244 = por %p242, %p243
    %s245 = ssub.s32 %s17, %s24
    %p246 = scmp.eq.s32.totalorder %s245, 0
    %s248 = sadd.s32 %s247, 1
    %s249 = scalar_select %p246, %s247, %s248
    %p252 = pneg %p246
    %p253 = scmp.eq.s32.totalorder %s17, 1
    %p254 = por %p252, %p253
    %p255 = scmp.ne.s32.totalorder %s247, %s250
    %p256 = scmp.eq.s32.totalorder %s17, 0
    %p257 = por %p255, %p256
    %p258 = scmp.ne.s32.totalorder %s247, %s250
    %p259 = scmp.eq.s32.totalorder %s22, 1
    %p260 = por %p258, %p259
    %p261 = scmp.ne.s32.totalorder %s250, %s251
    %p262 = scmp.eq.s32.totalorder %s22, 0
    %p263 = por %p261, %p262
    %p264 = scmp.ne.s32.totalorder %s250, %s251
    %p265 = scmp.eq.s32.totalorder %s23, 1
    %p266 = por %p264, %p265
    %p268 = scmp.ne.s32.totalorder %s251, %s267
    %p269 = scmp.eq.s32.totalorder %s23, 0
    %p270 = por %p268, %p269
    %p271 = scmp.le.s32.totalorder 1, %s17
    %p272 = scmp.lt.s32.totalorder %s17, 3
    %p273 = pnand %p271, %p272
    %p274 = pneg %p273
    // Predicated region
    $region9: #{encoder_layer.4} parent=5 // pred_check
      _
    $region10: #{encoder_layer.4} parent=5 // pred_check_branch
      %276 = sbr.rel (%p273) target = $region12
    $region11: #{encoder_layer.4} parent=5 // pred_region
      %s277 = ssub.s32 %s17, 1
      // Predicated region
      $region13: #{encoder_layer.4} parent=11 // pred_check
        %p278 = pneg %p64
      $region14: #{encoder_layer.4} parent=11 // pred_check_branch
        %280 = sbr.rel (%p278) target = $region16
      $region15: #{encoder_layer.4} parent=11 // pred_region
        _
      $region16: #{encoder_layer.4} parent=11 // pred_fallthru
        _
      // Predicated region
      $region17: #{encoder_layer.4} parent=11 // pred_check
        %p281 = pneg %p85
      $region18: #{encoder_layer.4} parent=11 // pred_check_branch
        %283 = sbr.rel (%p281) target = $region20
      $region19: #{encoder_layer.4} parent=11 // pred_region
        _
      $region20: #{encoder_layer.4} parent=11 // pred_fallthru
        _
      // Predicated region
      $region21: #{encoder_layer.4} parent=11 // pred_check
        %p284 = pneg %p106
      $region22: #{encoder_layer.4} parent=11 // pred_check_branch
        %286 = sbr.rel (%p284) target = $region24
      $region23: #{encoder_layer.4} parent=11 // pred_region
        _
      $region24: #{encoder_layer.4} parent=11 // pred_fallthru
        _
      // Predicated region
      $region25: #{encoder_layer.4} parent=11 // pred_check
        %p287 = pneg %p127
      $region26: #{encoder_layer.4} parent=11 // pred_check_branch
        %289 = sbr.rel (%p287) target = $region28
      $region27: #{encoder_layer.4} parent=11 // pred_region
        _
      $region28: #{encoder_layer.4} parent=11 // pred_fallthru
        _
      // Predicated region
      $region29: #{encoder_layer.4} parent=11 // pred_check
        %p290 = pneg %p148
      $region30: #{encoder_layer.4} parent=11 // pred_check_branch
        %292 = sbr.rel (%p290) target = $region32
      $region31: #{encoder_layer.4} parent=11 // pred_region
        _
      $region32: #{encoder_layer.4} parent=11 // pred_fallthru
        _
      // Predicated region
      $region33: #{encoder_layer.4} parent=11 // pred_check
        %p293 = pneg %p169
      $region34: #{encoder_layer.4} parent=11 // pred_check_branch
        %295 = sbr.rel (%p293) target = $region36
      $region35: #{encoder_layer.4} parent=11 // pred_region
        _
      $region36: #{encoder_layer.4} parent=11 // pred_fallthru
        _
      // Predicated region
      $region37: #{encoder_layer.4} parent=11 // pred_check
        %p296 = pneg %p190
      $region38: #{encoder_layer.4} parent=11 // pred_check_branch
        %298 = sbr.rel (%p296) target = $region40
      $region39: #{encoder_layer.4} parent=11 // pred_region
        _
      $region40: #{encoder_layer.4} parent=11 // pred_fallthru
        _
      // Predicated region
      $region41: #{encoder_layer.4} parent=11 // pred_check
        %p299 = pneg %p211
      $region42: #{encoder_layer.4} parent=11 // pred_check_branch
        %301 = sbr.rel (%p299) target = $region44
      $region43: #{encoder_layer.4} parent=11 // pred_region
        _
      $region44: #{encoder_layer.4} parent=11 // pred_fallthru
        _
    $region12: #{encoder_layer.4} parent=5 // pred_fallthru
      _
    %p302 = scmp.lt.s32.totalorder %s17, 2
    // Predicated region
    $region45: #{encoder_layer.4} parent=5 // pred_check
      %p303 = pneg %p302
    $region46: #{encoder_layer.4} parent=5 // pred_check_branch
      %305 = sbr.rel (%p303) target = $region48
    $region47: #{encoder_layer.4} parent=5 // pred_region
      // Predicated region
      $region49: #{encoder_layer.4} parent=47 // pred_check
        %p306 = pneg %p37
      $region50: #{encoder_layer.4} parent=47 // pred_check_branch
        %308 = sbr.rel (%p306) target = $region52
      $region51: #{encoder_layer.4} parent=47 // pred_region
        %p309 = scmp.lt.s32.totalorder %s17, 1
        %s310 = scalar_select %p309, %s17, 1
        %s311 = smul.addr %s310, 8
        %s312 = scalar_lea.vmem %s0, %s311
      $region52: #{encoder_layer.4} parent=47 // pred_fallthru
        _
    $region48: #{encoder_layer.4} parent=5 // pred_fallthru
      _
    %p313 = scmp.le.s32.totalorder 1, %s17
    %p314 = scmp.lt.s32.totalorder %s17, 3
    %p315 = pnand %p313, %p314
    %p316 = pneg %p315
    // Predicated region
    $region53: #{encoder_layer.4} parent=5 // pred_check
      _
    $region54: #{encoder_layer.4} parent=5 // pred_check_branch
      %318 = sbr.rel (%p315) target = $region56
    $region55: #{encoder_layer.4} parent=5 // pred_region
      %s319 = ssub.s32 %s17, 1
      %p320 = scmp.lt.s32.totalorder %s22, 1
      %s321 = scalar_select %p320, %s22, 1
      %s322 = smul.addr %s321, 8
      %s323 = scalar_lea.vmem %s0, %s322
      %p324 = pneg %p43
      %p325 = pneg %p40
      %p326 = pneg %p64
      %p327 = pneg %p61
      %p328 = pneg %p85
      %p329 = pneg %p82
      %p330 = pneg %p106
      %p331 = pneg %p103
      %p332 = pneg %p127
      %p333 = pneg %p124
      %p334 = pneg %p148
      %p335 = pneg %p145
      %p336 = pneg %p169
      %p337 = pneg %p166
      %p338 = pneg %p190
      %p339 = pneg %p187
      %p340 = pneg %p211
      %p341 = pneg %p208
      %p342 = pneg %p237
      %p343 = pneg %p234
      %p344 = scmp.lt.s32.totalorder %s22, 1
      %s345 = scalar_select %p344, %s22, 1
      %s346 = smul.addr %s345, 8
      %s347 = scalar_lea.vmem %s9, %s346
      %p348 = pneg %p263
      %p349 = pneg %p260
      %p350 = scmp.lt.s32.totalorder %s22, 1
      %s351 = scalar_select %p350, %s22, 1
      %s352 = smul.addr %s351, 8
      %s353 = scalar_lea.vmem %s10, %s352
      %p354 = scmp.lt.s32.totalorder %s22, 1
      %s355 = scalar_select %p354, %s22, 1
      %s356 = smul.addr %s355, 8
      %s357 = scalar_lea.vmem %s0, %s356
      %p358 = scmp.lt.s32.totalorder %s22, 1
      %s359 = scalar_select %p358, %s22, 1
      %s360 = smul.addr %s359, 8
      %s361 = scalar_lea.vmem %s9, %s360
      %p362 = scmp.lt.s32.totalorder %s22, 1
      %s363 = scalar_select %p362, %s22, 1
      %s364 = smul.addr %s363, 8
      %s365 = scalar_lea.vmem %s10, %s364
      %v367 = vld [vmem:[%s357] sm:$0xff]
      %v368 = vld [vmem:[%s1] sm:$0x1]
      %v370 = vlaneseq
      %v371 = vshrl.u32 %v370, 7
      %v372 = vsub.s32 0, %v371
      %v373 = vrot.slane %v368, %v372
      %v375 = vsub.f32 %v367, %v373
      %v376 = vld [vmem:[%s2] sm:$0x1]
      %v378 = vlaneseq
      %v379 = vshrl.u32 %v378, 7
      %v380 = vsub.s32 0, %v379
      %v381 = vrot.slane %v376, %v380
      %v383 = vmul.f32 %v375, %v381
      %v384 = vld [vmem:[%s3] sm:$0x1]
      %v386 = vlaneseq
      %v387 = vshrl.u32 %v386, 7
      %v388 = vsub.s32 0, %v387
      %v389 = vrot.slane %v384, %v388
      %v391 = vmul.f32 %v383, %v389
      %v392 = vld [vmem:[%s4] sm:$0x1]
      %v394 = vlaneseq
      %v395 = vshrl.u32 %v394, 7
      %v396 = vsub.s32 0, %v395
      %v397 = vrot.slane %v392, %v396
      %v399 = vadd.f32 %v391, %v397
      %v400 = vpack.c.bf16 %v399, %v399
      %v401 = vld [vmem:[%s5] sm:$0xf]
      %v402 = vld [vmem:[%s5 + $0x4] sm:$0xf]
      %v403 = vld [vmem:[%s5 + $0x8] sm:$0xf]
      %v404 = vld [vmem:[%s5 + $0xc] sm:$0xf]
      %v405 = vld [vmem:[%s5 + $0x10] sm:$0xf]
      %v406 = vld [vmem:[%s5 + $0x14] sm:$0xf]
      %v407 = vld [vmem:[%s5 + $0x18] sm:$0xf]
      %v408 = vld [vmem:[%s5 + $0x1c] sm:$0xf]
      %v409 = vld [vmem:[%s5 + $0x20] sm:$0xf]
      %v410 = vld [vmem:[%s5 + $0x24] sm:$0xf]
      %v411 = vld [vmem:[%s5 + $0x28] sm:$0xf]
      %v412 = vld [vmem:[%s5 + $0x2c] sm:$0xf]
      %v413 = vld [vmem:[%s5 + $0x30] sm:$0xf]
      %v414 = vld [vmem:[%s5 + $0x34] sm:$0xf]
      %v415 = vld [vmem:[%s5 + $0x38] sm:$0xf]
      %v416 = vld [vmem:[%s5 + $0x3c] sm:$0xf]
      %v417 = vld [vmem:[%s6] sm:$0x1]
      %v419 = vlaneseq
      %v420 = vshrl.u32 %v419, 7
      %v421 = vsub.s32 0, %v420
      %v422 = vrot.slane %v417, %v421
      %v440 = vunpack.c.l.b16 %v401
      %v441 = vunpack.c.l.b16 %v402
      %v442 = vunpack.c.l.b16 %v403
      %v443 = vunpack.c.l.b16 %v404
      %v444 = vunpack.c.l.b16 %v405
      %v445 = vunpack.c.l.b16 %v406
      %v446 = vunpack.c.l.b16 %v407
      %v447 = vunpack.c.l.b16 %v408
      %v448 = vunpack.c.l.b16 %v409
      %v449 = vunpack.c.l.b16 %v410
      %v450 = vunpack.c.l.b16 %v411
      %v451 = vunpack.c.l.b16 %v412
      %v452 = vunpack.c.l.b16 %v413
      %v453 = vunpack.c.l.b16 %v414
      %v454 = vunpack.c.l.b16 %v415
      %v455 = vunpack.c.l.b16 %v416
      %v456 = vpack.c.b16 %v441, %v440
      %v457 = vpack.c.b16 %v443, %v442
      %v458 = vpack.c.b16 %v445, %v444
      %v459 = vpack.c.b16 %v447, %v446
      %v460 = vpack.c.b16 %v449, %v448
      %v461 = vpack.c.b16 %v451, %v450
      %v462 = vpack.c.b16 %v453, %v452
      %v463 = vpack.c.b16 %v455, %v454
      %472 = vmatprep.subr.bf16.mxu0 0
      %473 = vmatpush1.bf16.msra.mxu0 %v456
      %474 = vmatprep.subr.bf16.mxu0 0
      %475 = vmatpush1.bf16.msra.mxu0 %v457
      %476 = vmatprep.subr.bf16.mxu0 0
      %477 = vmatpush1.bf16.msra.mxu0 %v458
      %478 = vmatprep.subr.bf16.mxu0 0
      %479 = vmatpush1.bf16.msra.mxu0 %v459
      %480 = vmatprep.subr.bf16.mxu0 0
      %481 = vmatpush1.bf16.msra.mxu0 %v460
      %482 = vmatprep.subr.bf16.mxu0 0
      %483 = vmatpush1.bf16.msra.mxu0 %v461
      %484 = vmatprep.subr.bf16.mxu0 0
      %485 = vmatpush1.bf16.msra.mxu0 %v462
      %486 = vmatprep.subr.bf16.mxu0 0
      %487 = vmatpush1.bf16.msra.mxu0 %v463
      %488 = vmatprep.subr.bf16.mxu0 0
      %489 = vmatpush1.bf16.msra.mxu0 0
      %490 = vmatprep.subr.bf16.mxu0 0
      %491 = vmatpush1.bf16.msra.mxu0 0
      %492 = vmatprep.subr.bf16.mxu0 0
      %493 = vmatpush1.bf16.msra.mxu0 0
      %494 = vmatprep.subr.bf16.mxu0 0
      %495 = vmatpush1.bf16.msra.mxu0 0
      %496 = vmatprep.subr.bf16.mxu0 0
      %497 = vmatpush1.bf16.msra.mxu0 0
      %498 = vmatprep.subr.bf16.mxu0 0
      %499 = vmatpush1.bf16.msra.mxu0 0
      %500 = vmatprep.subr.bf16.mxu0 0
      %501 = vmatpush1.bf16.msra.mxu0 0
      %502 = vmatprep.subr.bf16.mxu0 0
      %503 = vmatpush1.bf16.msra.mxu0 0
      %504 = vmatprep.mubr.bf16.mxu0 0
      %505 = vmatmul.mubr.bf16.gmra.mrb[0].mxu0 %v400
      %v506 = vpop.f32.mrb[0].mxu0
      %v507 = vadd.f32 %v422, %v506
      %v508 = vpop.f32.mrb[0].mxu0
      %v509 = vpop.f32.mrb[0].mxu0
      %v510 = vpop.f32.mrb[0].mxu0
      %511 = vdwg.mxu0
      %v512 = vmax.f32 %v507, 0.0
      %v513 = vpack.c.bf16 %v512, %v512
      %v514 = vld [vmem:[%s7] sm:$0xf]
      %v515 = vld [vmem:[%s7 + $0x4] sm:$0xf]
      %v516 = vld [vmem:[%s7 + $0x8] sm:$0xf]
      %v517 = vld [vmem:[%s7 + $0xc] sm:$0xf]
      %v518 = vld [vmem:[%s7 + $0x10] sm:$0xf]
      %v519 = vld [vmem:[%s7 + $0x14] sm:$0xf]
      %v520 = vld [vmem:[%s7 + $0x18] sm:$0xf]
      %v521 = vld [vmem:[%s7 + $0x1c] sm:$0xf]
      %v522 = vld [vmem:[%s7 + $0x20] sm:$0xf]
      %v523 = vld [vmem:[%s7 + $0x24] sm:$0xf]
      %v524 = vld [vmem:[%s7 + $0x28] sm:$0xf]
      %v525 = vld [vmem:[%s7 + $0x2c] sm:$0xf]
      %v526 = vld [vmem:[%s7 + $0x30] sm:$0xf]
      %v527 = vld [vmem:[%s7 + $0x34] sm:$0xf]
      %v528 = vld [vmem:[%s7 + $0x38] sm:$0xf]
      %v529 = vld [vmem:[%s7 + $0x3c] sm:$0xf]
      %v530 = vld [vmem:[%s8] sm:$0x1]
      %v532 = vlaneseq
      %v533 = vshrl.u32 %v532, 7
      %v534 = vsub.s32 0, %v533
      %v535 = vrot.slane %v530, %v534
      %v553 = vunpack.c.l.b16 %v514
      %v554 = vunpack.c.l.b16 %v515
      %v555 = vunpack.c.l.b16 %v516
      %v556 = vunpack.c.l.b16 %v517
      %v557 = vunpack.c.l.b16 %v518
      %v558 = vunpack.c.l.b16 %v519
      %v559 = vunpack.c.l.b16 %v520
      %v560 = vunpack.c.l.b16 %v521
      %v561 = vunpack.c.l.b16 %v522
      %v562 = vunpack.c.l.b16 %v523
      %v563 = vunpack.c.l.b16 %v524
      %v564 = vunpack.c.l.b16 %v525
      %v565 = vunpack.c.l.b16 %v526
      %v566 = vunpack.c.l.b16 %v527
      %v567 = vunpack.c.l.b16 %v528
      %v568 = vunpack.c.l.b16 %v529
      %v569 = vpack.c.b16 %v554, %v553
      %v570 = vpack.c.b16 %v556, %v555
      %v571 = vpack.c.b16 %v558, %v557
      %v572 = vpack.c.b16 %v560, %v559
      %v573 = vpack.c.b16 %v562, %v561
      %v574 = vpack.c.b16 %v564, %v563
      %v575 = vpack.c.b16 %v566, %v565
      %v576 = vpack.c.b16 %v568, %v567
      %585 = vmatprep.subr.bf16.mxu0 0
      %586 = vmatpush1.bf16.msra.mxu0 %v569
      %587 = vmatprep.subr.bf16.mxu0 0
      %588 = vmatpush1.bf16.msra.mxu0 %v570
      %589 = vmatprep.subr.bf16.mxu0 0
      %590 = vmatpush1.bf16.msra.mxu0 %v571
      %591 = vmatprep.subr.bf16.mxu0 0
      %592 = vmatpush1.bf16.msra.mxu0 %v572
      %593 = vmatprep.subr.bf16.mxu0 0
      %594 = vmatpush1.bf16.msra.mxu0 %v573
      %595 = vmatprep.subr.bf16.mxu0 0
      %596 = vmatpush1.bf16.msra.mxu0 %v574
      %597 = vmatprep.subr.bf16.mxu0 0
      %598 = vmatpush1.bf16.msra.mxu0 %v575
      %599 = vmatprep.subr.bf16.mxu0 0
      %600 = vmatpush1.bf16.msra.mxu0 %v576
      %601 = vmatprep.subr.bf16.mxu0 0
      %602 = vmatpush1.bf16.msra.mxu0 0
      %603 = vmatprep.subr.bf16.mxu0 0
      %604 = vmatpush1.bf16.msra.mxu0 0
      %605 = vmatprep.subr.bf16.mxu0 0
      %606 = vmatpush1.bf16.msra.mxu0 0
      %607 = vmatprep.subr.bf16.mxu0 0
      %608 = vmatpush1.bf16.msra.mxu0 0
      %609 = vmatprep.subr.bf16.mxu0 0
      %610 = vmatpush1.bf16.msra.mxu0 0
      %611 = vmatprep.subr.bf16.mxu0 0
      %612 = vmatpush1.bf16.msra.mxu0 0
      %613 = vmatprep.subr.bf16.mxu0 0
      %614 = vmatpush1.bf16.msra.mxu0 0
      %615 = vmatprep.subr.bf16.mxu0 0
      %616 = vmatpush1.bf16.msra.mxu0 0
      %617 = vmatprep.mubr.bf16.mxu0 0
      %618 = vmatmul.mubr.bf16.gmra.mrb[0].mxu0 %v513
      %v619 = vpop.f32.mrb[0].mxu0
      %v620 = vadd.f32 %v535, %v619
      %v621 = vpop.f32.mrb[0].mxu0
      %v622 = vpop.f32.mrb[0].mxu0
      %v623 = vpop.f32.mrb[0].mxu0
      %624 = vdwg.mxu0
      %v625 = vadd.f32 %v399, %v620
      %626 = vst [vmem:[%s361] sm:$0xff] %v625
      %627 = vst [vmem:[%s365] sm:$0xff] 0.0
      %v628 = vrot.slane %v625, 4
      %v629 = vadd.f32 %v625, %v628
      %v630 = vrot.slane %v629, 2
      %v631 = vadd.f32 %v629, %v630
      %v632 = vrot.slane %v631, 1
      %v633 = vadd.f32 %v631, %v632
      %634 = vst [vmem:[%s365] sm:$0x1] %v633
      %v635 = vmul.f32 %v625, %v625
      %v636 = vrot.slane %v635, 4
      %v637 = vadd.f32 %v635, %v636
      %v638 = vrot.slane %v637, 2
      %v639 = vadd.f32 %v637, %v638
      %v640 = vrot.slane %v639, 1
      %v641 = vadd.f32 %v639, %v640
      %642 = vst [vmem:[%s365 + $0x1] sm:$0x1] %v641
      %p643 = scmp.lt.s32.totalorder %s22, 1
      %s644 = scalar_select %p643, %s22, 1
      %s645 = smul.addr %s644, 8
      %s646 = scalar_lea.vmem %s9, %s645
      %p647 = scmp.lt.s32.totalorder %s22, 1
      %s648 = scalar_select %p647, %s22, 1
      %s649 = smul.addr %s648, 8
      %s650 = scalar_lea.vmem %s10, %s649
      // Predicated region
      $region57: #{encoder_layer.4} parent=55 // pred_check
        %p651 = pneg %p234
      $region58: #{encoder_layer.4} parent=55 // pred_check_branch
        %653 = sbr.rel (%p651) target = $region60
      $region59: #{encoder_layer.4} parent=55 // pred_region
        _
      $region60: #{encoder_layer.4} parent=55 // pred_fallthru
        _
      // Predicated region
      $region61: #{encoder_layer.4} parent=55 // pred_check
        %p654 = pneg %p260
      $region62: #{encoder_layer.4} parent=55 // pred_check_branch
        %656 = sbr.rel (%p654) target = $region64
      $region63: #{encoder_layer.4} parent=55 // pred_region
        _
      $region64: #{encoder_layer.4} parent=55 // pred_fallthru
        _
    $region56: #{encoder_layer.4} parent=5 // pred_fallthru
      _
    %p657 = scmp.le.s32.totalorder 2, %s17
    // Predicated region
    $region65: #{encoder_layer.4} parent=5 // pred_check
      %p658 = pneg %p657
    $region66: #{encoder_layer.4} parent=5 // pred_check_branch
      %660 = sbr.rel (%p658) target = $region68
    $region67: #{encoder_layer.4} parent=5 // pred_region
      %s661 = ssub.s32 %s17, 2
      // Predicated region
      $region69: #{encoder_layer.4} parent=67 // pred_check
        %p662 = pneg %p240
      $region70: #{encoder_layer.4} parent=67 // pred_check_branch
        %664 = sbr.rel (%p662) target = $region72
      $region71: #{encoder_layer.4} parent=67 // pred_region
        %p665 = scmp.lt.s32.totalorder %s23, 1
        %s666 = scalar_select %p665, %s23, 1
        %s667 = smul.addr %s666, 8
        %s668 = scalar_lea.vmem %s9, %s667
      $region72: #{encoder_layer.4} parent=67 // pred_fallthru
        _
      // Predicated region
      $region73: #{encoder_layer.4} parent=67 // pred_check
        %p669 = pneg %p266
      $region74: #{encoder_layer.4} parent=67 // pred_check_branch
        %671 = sbr.rel (%p669) target = $region76
      $region75: #{encoder_layer.4} parent=67 // pred_region
        %p672 = scmp.lt.s32.totalorder %s23, 1
        %s673 = scalar_select %p672, %s23, 1
        %s674 = smul.addr %s673, 8
        %s675 = scalar_lea.vmem %s10, %s674
      $region76: #{encoder_layer.4} parent=67 // pred_fallthru
        _
    $region68: #{encoder_layer.4} parent=5 // pred_fallthru
      _
  $region6: #{encoder_layer.4} parent=0 // loop_footer
    %s21 = sadd.s32 1, %s17
  $region7: #{encoder_layer.4} parent=0 // loop_footer_branch
    %16 = sbr.rel target = $region3
  $region8: #{encoder_layer.4} parent=0 // loop_exit
    _

// kernel: encoder_layer.3
$region0: #{encoder_layer.3}
  #allocation0 [shape = 'u32[]', space=smem, size = 0x4, offset = 0x4, fixed_abs, tag = 'smem constant byte address 0x4 - core index']
  #allocation1 [shape = 'u32[144,128]{1,0:T(1,128)}', space=vmem, size = 0x12000, scoped, tag = 'internal scratch']
  %s0 = inlined_call_operand.vmem [shape: bf16[2,8,128], index: 0, kind: input, shape index: {}]
  %s1 = inlined_call_operand.vmem [shape: bf16[12,128,32], index: 1, kind: input, shape index: {}]
  %s2 = inlined_call_operand.vmem [shape: bf16[4,32,128], index: 2, kind: input, shape index: {}]
  %s3 = inlined_call_operand.vmem [shape: f32[1,128], index: 3, kind: input, shape index: {}]
  %s4 = inlined_call_operand.vmem [shape: f32[2,8,128], index: 4, kind: output, shape index: {0}]
  %s5 = inlined_call_operand.vmem [shape: f32[2,8,128], index: 5, kind: output, shape index: {1}]
  %6 = xla_tuple %s4, %s5
  %s7 = sld [smem:[#allocation0]]
  $region57: #{encoder_layer.3} parent=0
    _
  %s9 = ssub.s32 1, %s7
  %s10 = scalar_select 0, %s9, %s7
  loop: start=0, step=1, limit=4
  $region2: #{encoder_layer.3} parent=0 // loop_pre_header
    _
  $region3: #{encoder_layer.3} parent=0 // loop_header
    %s12 = sphi 0, %s16
    %p13 = scmp.ge.s32.totalorder %s12, 4
    %s22 = sphi 0, %s24
    %s25 = sphi 0, %s22
    %s26 = sphi 0, %s25
    %s42 = sphi 0, %s26
    %s46 = sphi 0, %s46
    %s48 = sphi 0, %s46
    %s49 = sphi 0, %s48
    %s63 = sphi 0, %s49
    %s67 = sphi 0, %s67
    %s69 = sphi 0, %s67
    %s70 = sphi 0, %s69
    %s84 = sphi 0, %s70
    %s88 = sphi 0, %s88
    %s90 = sphi 0, %s88
    %s91 = sphi 0, %s90
    %s105 = sphi 0, %s91
    %s111 = sphi 0, %s113
    %s114 = sphi 0, %s111
    %s115 = sphi 0, %s114
    %s131 = sphi 0, %s115
    %s137 = sphi 0, %s139
    %s140 = sphi 0, %s137
    %s141 = sphi 0, %s140
    %s157 = sphi 0, %s141
  $region4: #{encoder_layer.3} parent=0 // loop_header_branch
    %15 = sbr.rel (%p13) target = $region8
  $region5: #{encoder_layer.3} parent=0 // loop_body
    %s17 = ssub.s32 %s12, 1
    %s18 = ssub.s32 %s12, 2
    %s19 = sadd.s32 %s12, 1
    %s20 = ssub.s32 %s12, %s19
    %p21 = scmp.eq.s32.totalorder %s20, 0
    %s23 = sadd.s32 %s22, 1
    %s24 = scalar_select %p21, %s22, %s23
    %p27 = pneg %p21
    %p28 = scmp.eq.s32.totalorder %s12, 1
    %p29 = por %p27, %p28
    %p30 = scmp.ne.s32.totalorder %s22, %s25
    %p31 = scmp.eq.s32.totalorder %s12, 0
    %p32 = por %p30, %p31
    %p33 = scmp.ne.s32.totalorder %s22, %s25
    %p34 = scmp.eq.s32.totalorder %s17, 1
    %p35 = por %p33, %p34
    %p36 = scmp.ne.s32.totalorder %s25, %s26
    %p37 = scmp.eq.s32.totalorder %s17, 0
    %p38 = por %p36, %p37
    %p39 = scmp.ne.s32.totalorder %s25, %s26
    %p40 = scmp.eq.s32.totalorder %s18, 1
    %p41 = por %p39, %p40
    %p43 = scmp.ne.s32.totalorder %s26, %s42
    %p44 = scmp.eq.s32.totalorder %s18, 0
    %p45 = por %p43, %p44
    %s47 = sadd.s32 %s46, 1
    %p50 = scmp.eq.s32.totalorder %s12, 1
    %p51 = scmp.ne.s32.totalorder %s46, %s48
    %p52 = scmp.eq.s32.totalorder %s12, 0
    %p53 = por %p51, %p52
    %p54 = scmp.ne.s32.totalorder %s46, %s48
    %p55 = scmp.eq.s32.totalorder %s17, 1
    %p56 = por %p54, %p55
    %p57 = scmp.ne.s32.totalorder %s48, %s49
    %p58 = scmp.eq.s32.totalorder %s17, 0
    %p59 = por %p57, %p58
    %p60 = scmp.ne.s32.totalorder %s48, %s49
    %p61 = scmp.eq.s32.totalorder %s18, 1
    %p62 = por %p60, %p61
    %p64 = scmp.ne.s32.totalorder %s49, %s63
    %p65 = scmp.eq.s32.totalorder %s18, 0
    %p66 = por %p64, %p65
    %s68 = sadd.s32 %s67, 1
    %p71 = scmp.eq.s32.totalorder %s12, 1
    %p72 = scmp.ne.s32.totalorder %s67, %s69
    %p73 = scmp.eq.s32.totalorder %s12, 0
    %p74 = por %p72, %p73
    %p75 = scmp.ne.s32.totalorder %s67, %s69
    %p76 = scmp.eq.s32.totalorder %s17, 1
    %p77 = por %p75, %p76
    %p78 = scmp.ne.s32.totalorder %s69, %s70
    %p79 = scmp.eq.s32.totalorder %s17, 0
    %p80 = por %p78, %p79
    %p81 = scmp.ne.s32.totalorder %s69, %s70
    %p82 = scmp.eq.s32.totalorder %s18, 1
    %p83 = por %p81, %p82
    %p85 = scmp.ne.s32.totalorder %s70, %s84
    %p86 = scmp.eq.s32.totalorder %s18, 0
    %p87 = por %p85, %p86
    %s89 = sadd.s32 %s88, 1
    %p92 = scmp.eq.s32.totalorder %s12, 1
    %p93 = scmp.ne.s32.totalorder %s88, %s90
    %p94 = scmp.eq.s32.totalorder %s12, 0
    %p95 = por %p93, %p94
    %p96 = scmp.ne.s32.totalorder %s88, %s90
    %p97 = scmp.eq.s32.totalorder %s17, 1
    %p98 = por %p96, %p97
    %p99 = scmp.ne.s32.totalorder %s90, %s91
    %p100 = scmp.eq.s32.totalorder %s17, 0
    %p101 = por %p99, %p100
    %p102 = scmp.ne.s32.totalorder %s90, %s91
    %p103 = scmp.eq.s32.totalorder %s18, 1
    %p104 = por %p102, %p103
    %p106 = scmp.ne.s32.totalorder %s91, %s105
    %p107 = scmp.eq.s32.totalorder %s18, 0
    %p108 = por %p106, %p107
    %s109 = ssub.s32 %s12, %s19
    %p110 = scmp.eq.s32.totalorder %s109, 0
    %s112 = sadd.s32 %s111, 1
    %s113 = scalar_select %p110, %s111, %s112
    %p116 = pneg %p110
    %p117 = scmp.eq.s32.totalorder %s12, 1
    %p118 = por %p116, %p117
    %p119 = scmp.ne.s32.totalorder %s111, %s114
    %p120 = scmp.eq.s32.totalorder %s12, 0
    %p121 = por %p119, %p120
    %p122 = scmp.ne.s32.totalorder %s111, %s114
    %p123 = scmp.eq.s32.totalorder %s17, 1
    %p124 = por %p122, %p123
    %p125 = scmp.ne.s32.totalorder %s114, %s115
    %p126 = scmp.eq.s32.totalorder %s17, 0
    %p127 = por %p125, %p126
    %p128 = scmp.ne.s32.totalorder %s114, %s115
    %p129 = scmp.eq.s32.totalorder %s18, 1
    %p130 = por %p128, %p129
    %p132 = scmp.ne.s32.totalorder %s115, %s131
    %p133 = scmp.eq.s32.totalorder %s18, 0
    %p134 = por %p132, %p133
    %s135 = ssub.s32 %s12, %s19
    %p136 = scmp.eq.s32.totalorder %s135, 0
    %s138 = sadd.s32 %s137, 1
    %s139 = scalar_select %p136, %s137, %s138
    %p142 = pneg %p136
    %p143 = scmp.eq.s32.totalorder %s12, 1
    %p144 = por %p142, %p143
    %p145 = scmp.ne.s32.totalorder %s137, %s140
    %p146 = scmp.eq.s32.totalorder %s12, 0
    %p147 = por %p145, %p146
    %p148 = scmp.ne.s32.totalorder %s137, %s140
    %p149 = scmp.eq.s32.totalorder %s17, 1
    %p150 = por %p148, %p149
    %p151 = scmp.ne.s32.totalorder %s140, %s141
    %p152 = scmp.eq.s32.totalorder %s17, 0
    %p153 = por %p151, %p152
    %p154 = scmp.ne.s32.totalorder %s140, %s141
    %p155 = scmp.eq.s32.totalorder %s18, 1
    %p156 = por %p154, %p155
    %p158 = scmp.ne.s32.totalorder %s141, %s157
    %p159 = scmp.eq.s32.totalorder %s18, 0
    %p160 = por %p158, %p159
    %p161 = scmp.le.s32.totalorder 1, %s12
    %p162 = scmp.lt.s32.totalorder %s12, 3
    %p163 = pnand %p161, %p162
    %p164 = pneg %p163
    // Predicated region
    $region9: #{encoder_layer.3} parent=5 // pred_check
      _
    $region10: #{encoder_layer.3} parent=5 // pred_check_branch
      %166 = sbr.rel (%p163) target = $region12
    $region11: #{encoder_layer.3} parent=5 // pred_region
      %s167 = ssub.s32 %s12, 1
      // Predicated region
      $region13: #{encoder_layer.3} parent=11 // pred_check
        %p168 = pneg %p59
      $region14: #{encoder_layer.3} parent=11 // pred_check_branch
        %170 = sbr.rel (%p168) target = $region16
      $region15: #{encoder_layer.3} parent=11 // pred_region
        _
      $region16: #{encoder_layer.3} parent=11 // pred_fallthru
        _
      // Predicated region
      $region17: #{encoder_layer.3} parent=11 // pred_check
        %p171 = pneg %p80
      $region18: #{encoder_layer.3} parent=11 // pred_check_branch
        %173 = sbr.rel (%p171) target = $region20
      $region19: #{encoder_layer.3} parent=11 // pred_region
        _
      $region20: #{encoder_layer.3} parent=11 // pred_fallthru
        _
      // Predicated region
      $region21: #{encoder_layer.3} parent=11 // pred_check
        %p174 = pneg %p101
      $region22: #{encoder_layer.3} parent=11 // pred_check_branch
        %176 = sbr.rel (%p174) target = $region24
      $region23: #{encoder_layer.3} parent=11 // pred_region
        _
      $region24: #{encoder_layer.3} parent=11 // pred_fallthru
        _
    $region12: #{encoder_layer.3} parent=5 // pred_fallthru
      _
    %p177 = scmp.lt.s32.totalorder %s12, 2
    // Predicated region
    $region25: #{encoder_layer.3} parent=5 // pred_check
      %p178 = pneg %p177
    $region26: #{encoder_layer.3} parent=5 // pred_check_branch
      %180 = sbr.rel (%p178) target = $region28
    $region27: #{encoder_layer.3} parent=5 // pred_region
      // Predicated region
      $region29: #{encoder_layer.3} parent=27 // pred_check
        %p181 = pneg %p32
      $region30: #{encoder_layer.3} parent=27 // pred_check_branch
        %183 = sbr.rel (%p181) target = $region32
      $region31: #{encoder_layer.3} parent=27 // pred_region
        %p184 = scmp.lt.s32.totalorder %s12, 1
        %s185 = scalar_select %p184, %s12, 1
        %s186 = smul.addr %s185, 4
        %s187 = scalar_lea.vmem %s0, %s186
      $region32: #{encoder_layer.3} parent=27 // pred_fallthru
        _
    $region28: #{encoder_layer.3} parent=5 // pred_fallthru
      _
    %p188 = scmp.le.s32.totalorder 1, %s12
    %p189 = scmp.lt.s32.totalorder %s12, 3
    %p190 = pnand %p188, %p189
    %p191 = pneg %p190
    // Predicated region
    $region33: #{encoder_layer.3} parent=5 // pred_check
      _
    $region34: #{encoder_layer.3} parent=5 // pred_check_branch
      %193 = sbr.rel (%p190) target = $region36
    $region35: #{encoder_layer.3} parent=5 // pred_region
      %s194 = ssub.s32 %s12, 1
      %p195 = scmp.lt.s32.totalorder %s17, 1
      %s196 = scalar_select %p195, %s17, 1
      %s197 = smul.addr %s196, 4
      %s198 = scalar_lea.vmem %s0, %s197
      %p199 = pneg %p38
      %p200 = pneg %p35
      %p201 = pneg %p59
      %p202 = pneg %p56
      %p203 = pneg %p80
      %p204 = pneg %p77
      %p205 = pneg %p101
      %p206 = pneg %p98
      %p207 = pneg %p127
      %p208 = pneg %p124
      %p209 = scmp.lt.s32.totalorder %s17, 1
      %s210 = scalar_select %p209, %s17, 1
      %s211 = smul.addr %s210, 8
      %s212 = scalar_lea.vmem %s4, %s211
      %p213 = pneg %p153
      %p214 = pneg %p150
      %p215 = scmp.lt.s32.totalorder %s17, 1
      %s216 = scalar_select %p215, %s17, 1
      %s217 = smul.addr %s216, 8
      %s218 = scalar_lea.vmem %s5, %s217
      %p219 = scmp.lt.s32.totalorder %s17, 1
      %s220 = scalar_select %p219, %s17, 1
      %s221 = smul.addr %s220, 4
      %s222 = scalar_lea.vmem %s0, %s221
      %p223 = scmp.lt.s32.totalorder %s17, 1
      %s224 = scalar_select %p223, %s17, 1
      %s225 = smul.addr %s224, 8
      %s226 = scalar_lea.vmem %s4, %s225
      %p227 = scmp.lt.s32.totalorder %s17, 1
      %s228 = scalar_select %p227, %s17, 1
      %s229 = smul.addr %s228, 8
      %s230 = scalar_lea.vmem %s5, %s229
      %v232 = vld [vmem:[%s222] sm:$0xf]
      %v233 = vld [vmem:[%s1] sm:$0xf]
      %v234 = vld [vmem:[%s1 + $0x4] sm:$0xf]
      %v235 = vld [vmem:[%s1 + $0x8] sm:$0xf]
      %v236 = vld [vmem:[%s1 + $0xc] sm:$0xf]
      %v237 = vld [vmem:[%s1 + $0x10] sm:$0xf]
      %v238 = vld [vmem:[%s1 + $0x14] sm:$0xf]
      %v239 = vld [vmem:[%s1 + $0x18] sm:$0xf]
      %v240 = vld [vmem:[%s1 + $0x1c] sm:$0xf]
      %v241 = vld [vmem:[%s1 + $0x20] sm:$0xf]
      %v242 = vld [vmem:[%s1 + $0x24] sm:$0xf]
      %v243 = vld [vmem:[%s1 + $0x28] sm:$0xf]
      %v244 = vld [vmem:[%s1 + $0x2c] sm:$0xf]
      %v245 = vld [vmem:[%s1 + $0x30] sm:$0xf]
      %v246 = vld [vmem:[%s1 + $0x34] sm:$0xf]
      %v247 = vld [vmem:[%s1 + $0x38] sm:$0xf]
      %v248 = vld [vmem:[%s1 + $0x3c] sm:$0xf]
      %v249 = vld [vmem:[%s1 + $0x40] sm:$0xf]
      %v250 = vld [vmem:[%s1 + $0x44] sm:$0xf]
      %v251 = vld [vmem:[%s1 + $0x48] sm:$0xf]
      %v252 = vld [vmem:[%s1 + $0x4c] sm:$0xf]
      %v253 = vld [vmem:[%s1 + $0x50] sm:$0xf]
      %v254 = vld [vmem:[%s1 + $0x54] sm:$0xf]
      %v255 = vld [vmem:[%s1 + $0x58] sm:$0xf]
      %v256 = vld [vmem:[%s1 + $0x5c] sm:$0xf]
      %v257 = vld [vmem:[%s1 + $0x60] sm:$0xf]
      %v258 = vld [vmem:[%s1 + $0x64] sm:$0xf]
      %v259 = vld [vmem:[%s1 + $0x68] sm:$0xf]
      %v260 = vld [vmem:[%s1 + $0x6c] sm:$0xf]
      %v261 = vld [vmem:[%s1 + $0x70] sm:$0xf]
      %v262 = vld [vmem:[%s1 + $0x74] sm:$0xf]
      %v263 = vld [vmem:[%s1 + $0x78] sm:$0xf]
      %v264 = vld [vmem:[%s1 + $0x7c] sm:$0xf]
      %v265 = vld [vmem:[%s1 + $0x80] sm:$0xf]
      %v266 = vld [vmem:[%s1 + $0x84] sm:$0xf]
      %v267 = vld [vmem:[%s1 + $0x88] sm:$0xf]
      %v268 = vld [vmem:[%s1 + $0x8c] sm:$0xf]
      %v269 = vld [vmem:[%s1 + $0x90] sm:$0xf]
      %v270 = vld [vmem:[%s1 + $0x94] sm:$0xf]
      %v271 = vld [vmem:[%s1 + $0x98] sm:$0xf]
      %v272 = vld [vmem:[%s1 + $0x9c] sm:$0xf]
      %v273 = vld [vmem:[%s1 + $0xa0] sm:$0xf]
      %v274 = vld [vmem:[%s1 + $0xa4] sm:$0xf]
      %v275 = vld [vmem:[%s1 + $0xa8] sm:$0xf]
      %v276 = vld [vmem:[%s1 + $0xac] sm:$0xf]
      %v277 = vld [vmem:[%s1 + $0xb0] sm:$0xf]
      %v278 = vld [vmem:[%s1 + $0xb4] sm:$0xf]
      %v279 = vld [vmem:[%s1 + $0xb8] sm:$0xf]
      %v280 = vld [vmem:[%s1 + $0xbc] sm:$0xf]
      %v281 = vld [vmem:[%s1 + $0xc0] sm:$0xf]
      %v282 = vld [vmem:[%s1 + $0xc4] sm:$0xf]
      %v283 = vld [vmem:[%s1 + $0xc8] sm:$0xf]
      %v284 = vld [vmem:[%s1 + $0xcc] sm:$0xf]
      %v285 = vld [vmem:[%s1 + $0xd0] sm:$0xf]
      %v286 = vld [vmem:[%s1 + $0xd4] sm:$0xf]
      %v287 = vld [vmem:[%s1 + $0xd8] sm:$0xf]
      %v288 = vld [vmem:[%s1 + $0xdc] sm:$0xf]
      %v289 = vld [vmem:[%s1 + $0xe0] sm:$0xf]
      %v290 = vld [vmem:[%s1 + $0xe4] sm:$0xf]
      %v291 = vld [vmem:[%s1 + $0xe8] sm:$0xf]
      %v292 = vld [vmem:[%s1 + $0xec] sm:$0xf]
      %v293 = vld [vmem:[%s1 + $0xf0] sm:$0xf]
      %v294 = vld [vmem:[%s1 + $0xf4] sm:$0xf]
      %v295 = vld [vmem:[%s1 + $0xf8] sm:$0xf]
      %v296 = vld [vmem:[%s1 + $0xfc] sm:$0xf]
      %v297 = vld [vmem:[%s1 + $0x100] sm:$0xf]
      %v298 = vld [vmem:[%s1 + $0x104] sm:$0xf]
      %v299 = vld [vmem:[%s1 + $0x108] sm:$0xf]
      %v300 = vld [vmem:[%s1 + $0x10c] sm:$0xf]
      %v301 = vld [vmem:[%s1 + $0x110] sm:$0xf]
      %v302 = vld [vmem:[%s1 + $0x114] sm:$0xf]
      %v303 = vld [vmem:[%s1 + $0x118] sm:$0xf]
      %v304 = vld [vmem:[%s1 + $0x11c] sm:$0xf]
      %v305 = vld [vmem:[%s1 + $0x120] sm:$0xf]
      %v306 = vld [vmem:[%s1 + $0x124] sm:$0xf]
      %v307 = vld [vmem:[%s1 + $0x128] sm:$0xf]
      %v308 = vld [vmem:[%s1 + $0x12c] sm:$0xf]
      %v309 = vld [vmem:[%s1 + $0x130] sm:$0xf]
      %v310 = vld [vmem:[%s1 + $0x134] sm:$0xf]
      %v311 = vld [vmem:[%s1 + $0x138] sm:$0xf]
      %v312 = vld [vmem:[%s1 + $0x13c] sm:$0xf]
      %v313 = vld [vmem:[%s1 + $0x140] sm:$0xf]
      %v314 = vld [vmem:[%s1 + $0x144] sm:$0xf]
      %v315 = vld [vmem:[%s1 + $0x148] sm:$0xf]
      %v316 = vld [vmem:[%s1 + $0x14c] sm:$0xf]
      %v317 = vld [vmem:[%s1 + $0x150] sm:$0xf]
      %v318 = vld [vmem:[%s1 + $0x154] sm:$0xf]
      %v319 = vld [vmem:[%s1 + $0x158] sm:$0xf]
      %v320 = vld [vmem:[%s1 + $0x15c] sm:$0xf]
      %v321 = vld [vmem:[%s1 + $0x160] sm:$0xf]
      %v322 = vld [vmem:[%s1 + $0x164] sm:$0xf]
      %v323 = vld [vmem:[%s1 + $0x168] sm:$0xf]
      %v324 = vld [vmem:[%s1 + $0x16c] sm:$0xf]
      %v325 = vld [vmem:[%s1 + $0x170] sm:$0xf]
      %v326 = vld [vmem:[%s1 + $0x174] sm:$0xf]
      %v327 = vld [vmem:[%s1 + $0x178] sm:$0xf]
      %v328 = vld [vmem:[%s1 + $0x17c] sm:$0xf]
      %v329 = vld [vmem:[%s1 + $0x180] sm:$0xf]
      %v330 = vld [vmem:[%s1 + $0x184] sm:$0xf]
      %v331 = vld [vmem:[%s1 + $0x188] sm:$0xf]
      %v332 = vld [vmem:[%s1 + $0x18c] sm:$0xf]
      %v333 = vld [vmem:[%s1 + $0x190] sm:$0xf]
      %v334 = vld [vmem:[%s1 + $0x194] sm:$0xf]
      %v335 = vld [vmem:[%s1 + $0x198] sm:$0xf]
      %v336 = vld [vmem:[%s1 + $0x19c] sm:$0xf]
      %v337 = vld [vmem:[%s1 + $0x1a0] sm:$0xf]
      %v338 = vld [vmem:[%s1 + $0x1a4] sm:$0xf]
      %v339 = vld [vmem:[%s1 + $0x1a8] sm:$0xf]
      %v340 = vld [vmem:[%s1 + $0x1ac] sm:$0xf]
      %v341 = vld [vmem:[%s1 + $0x1b0] sm:$0xf]
      %v342 = vld [vmem:[%s1 + $0x1b4] sm:$0xf]
      %v343 = vld [vmem:[%s1 + $0x1b8] sm:$0xf]
      %v344 = vld [vmem:[%s1 + $0x1bc] sm:$0xf]
      %v345 = vld [vmem:[%s1 + $0x1c0] sm:$0xf]
      %v346 = vld [vmem:[%s1 + $0x1c4] sm:$0xf]
      %v347 = vld [vmem:[%s1 + $0x1c8] sm:$0xf]
      %v348 = vld [vmem:[%s1 + $0x1cc] sm:$0xf]
      %v349 = vld [vmem:[%s1 + $0x1d0] sm:$0xf]
      %v350 = vld [vmem:[%s1 + $0x1d4] sm:$0xf]
      %v351 = vld [vmem:[%s1 + $0x1d8] sm:$0xf]
      %v352 = vld [vmem:[%s1 + $0x1dc] sm:$0xf]
      %v353 = vld [vmem:[%s1 + $0x1e0] sm:$0xf]
      %v354 = vld [vmem:[%s1 + $0x1e4] sm:$0xf]
      %v355 = vld [vmem:[%s1 + $0x1e8] sm:$0xf]
      %v356 = vld [vmem:[%s1 + $0x1ec] sm:$0xf]
      %v357 = vld [vmem:[%s1 + $0x1f0] sm:$0xf]
      %v358 = vld [vmem:[%s1 + $0x1f4] sm:$0xf]
      %v359 = vld [vmem:[%s1 + $0x1f8] sm:$0xf]
      %v360 = vld [vmem:[%s1 + $0x1fc] sm:$0xf]
      %v361 = vld [vmem:[%s1 + $0x200] sm:$0xf]
      %v362 = vld [vmem:[%s1 + $0x204] sm:$0xf]
      %v363 = vld [vmem:[%s1 + $0x208] sm:$0xf]
      %v364 = vld [vmem:[%s1 + $0x20c] sm:$0xf]
      %v365 = vld [vmem:[%s1 + $0x210] sm:$0xf]
      %v366 = vld [vmem:[%s1 + $0x214] sm:$0xf]
      %v367 = vld [vmem:[%s1 + $0x218] sm:$0xf]
      %v368 = vld [vmem:[%s1 + $0x21c] sm:$0xf]
      %v369 = vld [vmem:[%s1 + $0x220] sm:$0xf]
      %v370 = vld [vmem:[%s1 + $0x224] sm:$0xf]
      %v371 = vld [vmem:[%s1 + $0x228] sm:$0xf]
      %v372 = vld [vmem:[%s1 + $0x22c] sm:$0xf]
      %v373 = vld [vmem:[%s1 + $0x230] sm:$0xf]
      %v374 = vld [vmem:[%s1 + $0x234] sm:$0xf]
      %v375 = vld [vmem:[%s1 + $0x238] sm:$0xf]
      %v376 = vld [vmem:[%s1 + $0x23c] sm:$0xf]
      %v377 = vld [vmem:[%s1 + $0x240] sm:$0xf]
      %v378 = vld [vmem:[%s1 + $0x244] sm:$0xf]
      %v379 = vld [vmem:[%s1 + $0x248] sm:$0xf]
      %v380 = vld [vmem:[%s1 + $0x24c] sm:$0xf]
      %v381 = vld [vmem:[%s1 + $0x250] sm:$0xf]
      %v382 = vld [vmem:[%s1 + $0x254] sm:$0xf]
      %v383 = vld [vmem:[%s1 + $0x258] sm:$0xf]
      %v384 = vld [vmem:[%s1 + $0x25c] sm:$0xf]
      %v385 = vld [vmem:[%s1 + $0x260] sm:$0xf]
      %v386 = vld [vmem:[%s1 + $0x264] sm:$0xf]
      %v387 = vld [vmem:[%s1 + $0x268] sm:$0xf]
      %v388 = vld [vmem:[%s1 + $0x26c] sm:$0xf]
      %v389 = vld [vmem:[%s1 + $0x270] sm:$0xf]
      %v390 = vld [vmem:[%s1 + $0x274] sm:$0xf]
      %v391 = vld [vmem:[%s1 + $0x278] sm:$0xf]
      %v392 = vld [vmem:[%s1 + $0x27c] sm:$0xf]
      %v393 = vld [vmem:[%s1 + $0x280] sm:$0xf]
      %v394 = vld [vmem:[%s1 + $0x284] sm:$0xf]
      %v395 = vld [vmem:[%s1 + $0x288] sm:$0xf]
      %v396 = vld [vmem:[%s1 + $0x28c] sm:$0xf]
      %v397 = vld [vmem:[%s1 + $0x290] sm:$0xf]
      %v398 = vld [vmem:[%s1 + $0x294] sm:$0xf]
      %v399 = vld [vmem:[%s1 + $0x298] sm:$0xf]
      %v400 = vld [vmem:[%s1 + $0x29c] sm:$0xf]
      %v401 = vld [vmem:[%s1 + $0x2a0] sm:$0xf]
      %v402 = vld [vmem:[%s1 + $0x2a4] sm:$0xf]
      %v403 = vld [vmem:[%s1 + $0x2a8] sm:$0xf]
      %v404 = vld [vmem:[%s1 + $0x2ac] sm:$0xf]
      %v405 = vld [vmem:[%s1 + $0x2b0] sm:$0xf]
      %v406 = vld [vmem:[%s1 + $0x2b4] sm:$0xf]
      %v407 = vld [vmem:[%s1 + $0x2b8] sm:$0xf]
      %v408 = vld [vmem:[%s1 + $0x2bc] sm:$0xf]
      %v409 = vld [vmem:[%s1 + $0x2c0] sm:$0xf]
      %v410 = vld [vmem:[%s1 + $0x2c4] sm:$0xf]
      %v411 = vld [vmem:[%s1 + $0x2c8] sm:$0xf]
      %v412 = vld [vmem:[%s1 + $0x2cc] sm:$0xf]
      %v413 = vld [vmem:[%s1 + $0x2d0] sm:$0xf]
      %v414 = vld [vmem:[%s1 + $0x2d4] sm:$0xf]
      %v415 = vld [vmem:[%s1 + $0x2d8] sm:$0xf]
      %v416 = vld [vmem:[%s1 + $0x2dc] sm:$0xf]
      %v417 = vld [vmem:[%s1 + $0x2e0] sm:$0xf]
      %v418 = vld [vmem:[%s1 + $0x2e4] sm:$0xf]
      %v419 = vld [vmem:[%s1 + $0x2e8] sm:$0xf]
      %v420 = vld [vmem:[%s1 + $0x2ec] sm:$0xf]
      %v421 = vld [vmem:[%s1 + $0x2f0] sm:$0xf]
      %v422 = vld [vmem:[%s1 + $0x2f4] sm:$0xf]
      %v423 = vld [vmem:[%s1 + $0x2f8] sm:$0xf]
      %v424 = vld [vmem:[%s1 + $0x2fc] sm:$0xf]
      %v441 = vunpack.c.l.b16 %v233
      %v442 = vunpack.c.l.b16 %v234
      %v443 = vunpack.c.l.b16 %v235
      %v444 = vunpack.c.l.b16 %v236
      %v445 = vunpack.c.l.b16 %v237
      %v446 = vunpack.c.l.b16 %v238
      %v447 = vunpack.c.l.b16 %v239
      %v448 = vunpack.c.l.b16 %v240
      %v449 = vunpack.c.l.b16 %v241
      %v450 = vunpack.c.l.b16 %v242
      %v451 = vunpack.c.l.b16 %v243
      %v452 = vunpack.c.l.b16 %v244
      %v453 = vunpack.c.l.b16 %v245
      %v454 = vunpack.c.l.b16 %v246
      %v455 = vunpack.c.l.b16 %v247
      %v456 = vunpack.c.l.b16 %v248
      %v457 = vpack.c.b16 %v442, %v441
      %v458 = vpack.c.b16 %v444, %v443
      %v459 = vpack.c.b16 %v446, %v445
      %v460 = vpack.c.b16 %v448, %v447
      %v461 = vpack.c.b16 %v450, %v449
      %v462 = vpack.c.b16 %v452, %v451
      %v463 = vpack.c.b16 %v454, %v453
      %v464 = vpack.c.b16 %v456, %v455
      %473 = vmatprep.subr.bf16.mxu0 0
      %474 = vmatpush1.bf16.msra.mxu0 %v457
      %475 = vmatprep.subr.bf16.mxu0 0
      %476 = vmatpush1.bf16.msra.mxu0 %v458
      %477 = vmatprep.subr.bf16.mxu0 0
      %478 = vmatpush1.bf16.msra.mxu0 %v459
      %479 = vmatprep.subr.bf16.mxu0 0
      %480 = vmatpush1.bf16.msra.mxu0 %v460
      %481 = vmatprep.subr.bf16.mxu0 0
      %482 = vmatpush1.bf16.msra.mxu0 %v461
      %483 = vmatprep.subr.bf16.mxu0 0
      %484 = vmatpush1.bf16.msra.mxu0 %v462
      %485 = vmatprep.subr.bf16.mxu0 0
      %486 = vmatpush1.bf16.msra.mxu0 %v463
      %487 = vmatprep.subr.bf16.mxu0 0
      %488 = vmatpush1.bf16.msra.mxu0 %v464
      %489 = vmatprep.subr.bf16.mxu0 0
      %490 = vmatpush1.bf16.msra.mxu0 0
      %491 = vmatprep.subr.bf16.mxu0 0
      %492 = vmatpush1.bf16.msra.mxu0 0
      %493 = vmatprep.subr.bf16.mxu0 0
      %494 = vmatpush1.bf16.msra.mxu0 0
      %495 = vmatprep.subr.bf16.mxu0 0
      %496 = vmatpush1.bf16.msra.mxu0 0
      %497 = vmatprep.subr.bf16.mxu0 0
      %498 = vmatpush1.bf16.msra.mxu0 0
      %499 = vmatprep.subr.bf16.mxu0 0
      %500 = vmatpush1.bf16.msra.mxu0 0
      %501 = vmatprep.subr.bf16.mxu0 0
      %502 = vmatpush1.bf16.msra.mxu0 0
      %503 = vmatprep.subr.bf16.mxu0 0
      %504 = vmatpush1.bf16.msra.mxu0 0
      %505 = vmatprep.mubr.bf16.mxu0 0
      %506 = vmatmul.mubr.bf16.gmra.mrb[0].mxu0 %v232
      %v507 = vpop.f32.mrb[0].mxu0
      %v508 = vadd.f32 0.0, %v507
      %v509 = vpop.f32.mrb[0].mxu0
      %v510 = vpop.f32.mrb[0].mxu0
      %v511 = vpop.f32.mrb[0].mxu0
      %512 = vdwg.mxu0
      %v529 = vunpack.c.l.b16 %v249
      %v530 = vunpack.c.l.b16 %v250
      %v531 = vunpack.c.l.b16 %v251
      %v532 = vunpack.c.l.b16 %v252
      %v533 = vunpack.c.l.b16 %v253
      %v534 = vunpack.c.l.b16 %v254
      %v535 = vunpack.c.l.b16 %v255
      %v536 = vunpack.c.l.b16 %v256
      %v537 = vunpack.c.l.b16 %v257
      %v538 = vunpack.c.l.b16 %v258
      %v539 = vunpack.c.l.b16 %v259
      %v540 = vunpack.c.l.b16 %v260
      %v541 = vunpack.c.l.b16 %v261
      %v542 = vunpack.c.l.b16 %v262
      %v543 = vunpack.c.l.b16 %v263
      %v544 = vunpack.c.l.b16 %v264
      %v545 = vpack.c.b16 %v530, %v529
      %v546 = vpack.c.b16 %v532, %v531
      %v547 = vpack.c.b16 %v534, %v533
      %v548 = vpack.c.b16 %v536, %v535
      %v549 = vpack.c.b16 %v538, %v537
      %v550 = vpack.c.b16 %v540, %v539
      %v551 = vpack.c.b16 %v542, %v541
      %v552 = vpack.c.b16 %v544, %v543
      %561 = vmatprep.subr.bf16.mxu0 0
      %562 = vmatpush1.bf16.msra.mxu0 %v545
      %563 = vmatprep.subr.bf16.mxu0 0
      %564 = vmatpush1.bf16.msra.mxu0 %v546
      %565 = vmatprep.subr.bf16.mxu0 0
      %566 = vmatpush1.bf16.msra.mxu0 %v547
      %567 = vmatprep.subr.bf16.mxu0 0
      %568 = vmatpush1.bf16.msra.mxu0 %v548
      %569 = vmatprep.subr.bf16.mxu0 0
      %570 = vmatpush1.bf16.msra.mxu0 %v549
      %571 = vmatprep.subr.bf16.mxu0 0
      %572 = vmatpush1.bf16.msra.mxu0 %v550
      %573 = vmatprep.subr.bf16.mxu0 0
      %574 = vmatpush1.bf16.msra.mxu0 %v551
      %575 = vmatprep.subr.bf16.mxu0 0
      %576 = vmatpush1.bf16.msra.mxu0 %v552
      %577 = vmatprep.subr.bf16.mxu0 0
      %578 = vmatpush1.bf16.msra.mxu0 0
      %579 = vmatprep.subr.bf16.mxu0 0
      %580 = vmatpush1.bf16.msra.mxu0 0
      %581 = vmatprep.subr.bf16.mxu0 0
      %582 = vmatpush1.bf16.msra.mxu0 0
      %583 = vmatprep.subr.bf16.mxu0 0
      %584 = vmatpush1.bf16.msra.mxu0 0
      %585 = vmatprep.subr.bf16.mxu0 0
      %586 = vmatpush1.bf16.msra.mxu0 0
      %587 = vmatprep.subr.bf16.mxu0 0
      %588 = vmatpush1.bf16.msra.mxu0 0
      %589 = vmatprep.subr.bf16.mxu0 0
      %590 = vmatpush1.bf16.msra.mxu0 0
      %591 = vmatprep.subr.bf16.mxu0 0
      %592 = vmatpush1.bf16.msra.mxu0 0
      %593 = vmatprep.mubr.bf16.mxu0 0
      %594 = vmatmul.mubr.bf16.gmra.mrb[0].mxu0 %v232
      %v595 = vpop.f32.mrb[0].mxu0
      %v596 = vadd.f32 0.0, %v595
      %v597 = vpop.f32.mrb[0].mxu0
      %v598 = vpop.f32.mrb[0].mxu0
      %v599 = vpop.f32.mrb[0].mxu0
      %600 = vdwg.mxu0
      %v617 = vunpack.c.l.b16 %v265
      %v618 = vunpack.c.l.b16 %v266
      %v619 = vunpack.c.l.b16 %v267
      %v620 = vunpack.c.l.b16 %v268
      %v621 = vunpack.c.l.b16 %v269
      %v622 = vunpack.c.l.b16 %v270
      %v623 = vunpack.c.l.b16 %v271
      %v624 = vunpack.c.l.b16 %v272
      %v625 = vunpack.c.l.b16 %v273
      %v626 = vunpack.c.l.b16 %v274
      %v627 = vunpack.c.l.b16 %v275
      %v628 = vunpack.c.l.b16 %v276
      %v629 = vunpack.c.l.b16 %v277
      %v630 = vunpack.c.l.b16 %v278
      %v631 = vunpack.c.l.b16 %v279
      %v632 = vunpack.c.l.b16 %v280
      %v633 = vpack.c.b16 %v618, %v617
      %v634 = vpack.c.b16 %v620, %v619
      %v635 = vpack.c.b16 %v622, %v621
      %v636 = vpack.c.b16 %v624, %v623
      %v637 = vpack.c.b16 %v626, %v625
      %v638 = vpack.c.b16 %v628, %v627
      %v639 = vpack.c.b16 %v630, %v629
      %v640 = vpack.c.b16 %v632, %v631
      %649 = vmatprep.subr.bf16.mxu0 0
      %650 = vmatpush1.bf16.msra.mxu0 %v633
      %651 = vmatprep.subr.bf16.mxu0 0
      %652 = vmatpush1.bf16.msra.mxu0 %v634
      %653 = vmatprep.subr.bf16.mxu0 0
      %654 = vmatpush1.bf16.msra.mxu0 %v635
      %655 = vmatprep.subr.bf16.mxu0 0
      %656 = vmatpush1.bf16.msra.mxu0 %v636
      %657 = vmatprep.subr.bf16.mxu0 0
      %658 = vmatpush1.bf16.msra.mxu0 %v637
      %659 = vmatprep.subr.bf16.mxu0 0
      %660 = vmatpush1.bf16.msra.mxu0 %v638
      %661 = vmatprep.subr.bf16.mxu0 0
      %662 = vmatpush1.bf16.msra.mxu0 %v639
      %663 = vmatprep.subr.bf16.mxu0 0
      %664 = vmatpush1.bf16.msra.mxu0 %v640
      %665 = vmatprep.subr.bf16.mxu0 0
      %666 = vmatpush1.bf16.msra.mxu0 0
      %667 = vmatprep.subr.bf16.mxu0 0
      %668 = vmatpush1.bf16.msra.mxu0 0
      %669 = vmatprep.subr.bf16.mxu0 0
      %670 = vmatpush1.bf16.msra.mxu0 0
      %671 = vmatprep.subr.bf16.mxu0 0
      %672 = vmatpush1.bf16.msra.mxu0 0
      %673 = vmatprep.subr.bf16.mxu0 0
      %674 = vmatpush1.bf16.msra.mxu0 0
      %675 = vmatprep.subr.bf16.mxu0 0
      %676 = vmatpush1.bf16.msra.mxu0 0
      %677 = vmatprep.subr.bf16.mxu0 0
      %678 = vmatpush1.bf16.msra.mxu0 0
      %679 = vmatprep.subr.bf16.mxu0 0
      %680 = vmatpush1.bf16.msra.mxu0 0
      %681 = vmatprep.mubr.bf16.mxu0 0
      %682 = vmatmul.mubr.bf16.gmra.mrb[0].mxu0 %v232
      %v683 = vpop.f32.mrb[0].mxu0
      %v684 = vadd.f32 0.0, %v683
      %v685 = vpop.f32.mrb[0].mxu0
      %v686 = vpop.f32.mrb[0].mxu0
      %v687 = vpop.f32.mrb[0].mxu0
      %688 = vdwg.mxu0
      %v705 = vunpack.c.l.b16 %v281
      %v706 = vunpack.c.l.b16 %v282
      %v707 = vunpack.c.l.b16 %v283
      %v708 = vunpack.c.l.b16 %v284
      %v709 = vunpack.c.l.b16 %v285
      %v710 = vunpack.c.l.b16 %v286
      %v711 = vunpack.c.l.b16 %v287
      %v712 = vunpack.c.l.b16 %v288
      %v713 = vunpack.c.l.b16 %v289
      %v714 = vunpack.c.l.b16 %v290
      %v715 = vunpack.c.l.b16 %v291
      %v716 = vunpack.c.l.b16 %v292
      %v717 = vunpack.c.l.b16 %v293
      %v718 = vunpack.c.l.b16 %v294
      %v719 = vunpack.c.l.b16 %v295
      %v720 = vunpack.c.l.b16 %v296
      %v721 = vpack.c.b16 %v706, %v705
      %v722 = vpack.c.b16 %v708, %v707
      %v723 = vpack.c.b16 %v710, %v709
      %v724 = vpack.c.b16 %v712, %v711
      %v725 = vpack.c.b16 %v714, %v713
      %v726 = vpack.c.b16 %v716, %v715
      %v727 = vpack.c.b16 %v718, %v717
      %v728 = vpack.c.b16 %v720, %v719
      %737 = vmatprep.subr.bf16.mxu0 0
      %738 = vmatpush1.bf16.msra.mxu0 %v721
      %739 = vmatprep.subr.bf16.mxu0 0
      %740 = vmatpush1.bf16.msra.mxu0 %v722
      %741 = vmatprep.subr.bf16.mxu0 0
      %742 = vmatpush1.bf16.msra.mxu0 %v723
      %743 = vmatprep.subr.bf16.mxu0 0
      %744 = vmatpush1.bf16.msra.mxu0 %v724
      %745 = vmatprep.subr.bf16.mxu0 0
      %746 = vmatpush1.bf16.msra.mxu0 %v725
      %747 = vmatprep.subr.bf16.mxu0 0
      %748 = vmatpush1.bf16.msra.mxu0 %v726
      %749 = vmatprep.subr.bf16.mxu0 0
      %750 = vmatpush1.bf16.msra.mxu0 %v727
      %751 = vmatprep.subr.bf16.mxu0 0
      %752 = vmatpush1.bf16.msra.mxu0 %v728
      %753 = vmatprep.subr.bf16.mxu0 0
      %754 = vmatpush1.bf16.msra.mxu0 0
      %755 = vmatprep.subr.bf16.mxu0 0
      %756 = vmatpush1.bf16.msra.mxu0 0
      %757 = vmatprep.subr.bf16.mxu0 0
      %758 = vmatpush1.bf16.msra.mxu0 0
      %759 = vmatprep.subr.bf16.mxu0 0
      %760 = vmatpush1.bf16.msra.mxu0 0
      %761 = vmatprep.subr.bf16.mxu0 0
      %762 = vmatpush1.bf16.msra.mxu0 0
      %763 = vmatprep.subr.bf16.mxu0 0
      %764 = vmatpush1.bf16.msra.mxu0 0
      %765 = vmatprep.subr.bf16.mxu0 0
      %766 = vmatpush1.bf16.msra.mxu0 0
      %767 = vmatprep.subr.bf16.mxu0 0
      %768 = vmatpush1.bf16.msra.mxu0 0
      %769 = vmatprep.mubr.bf16.mxu0 0
      %770 = vmatmul.mubr.bf16.gmra.mrb[0].mxu0 %v232
      %v771 = vpop.f32.mrb[0].mxu0
      %v772 = vadd.f32 0.0, %v771
      %v773 = vpop.f32.mrb[0].mxu0
      %v774 = vpop.f32.mrb[0].mxu0
      %v775 = vpop.f32.mrb[0].mxu0
      %776 = vdwg.mxu0
      %v793 = vunpack.c.l.b16 %v297
      %v794 = vunpack.c.l.b16 %v298
      %v795 = vunpack.c.l.b16 %v299
      %v796 = vunpack.c.l.b16 %v300
      %v797 = vunpack.c.l.b16 %v301
      %v798 = vunpack.c.l.b16 %v302
      %v799 = vunpack.c.l.b16 %v303
      %v800 = vunpack.c.l.b16 %v304
      %v801 = vunpack.c.l.b16 %v305
      %v802 = vunpack.c.l.b16 %v306
      %v803 = vunpack.c.l.b16 %v307
      %v804 = vunpack.c.l.b16 %v308
      %v805 = vunpack.c.l.b16 %v309
      %v806 = vunpack.c.l.b16 %v310
      %v807 = vunpack.c.l.b16 %v311
      %v808 = vunpack.c.l.b16 %v312
      %v809 = vpack.c.b16 %v794, %v793
      %v810 = vpack.c.b16 %v796, %v795
      %v811 = vpack.c.b16 %v798, %v797
      %v812 = vpack.c.b16 %v800, %v799
      %v813 = vpack.c.b16 %v802, %v801
      %v814 = vpack.c.b16 %v804, %v803
      %v815 = vpack.c.b16 %v806, %v805
      %v816 = vpack.c.b16 %v808, %v807
      %825 = vmatprep.subr.bf16.mxu0 0
      %826 = vmatpush1.bf16.msra.mxu0 %v809
      %827 = vmatprep.subr.bf16.mxu0 0
      %828 = vmatpush1.bf16.msra.mxu0 %v810
      %829 = vmatprep.subr.bf16.mxu0 0
      %830 = vmatpush1.bf16.msra.mxu0 %v811
      %831 = vmatprep.subr.bf16.mxu0 0
      %832 = vmatpush1.bf16.msra.mxu0 %v812
      %833 = vmatprep.subr.bf16.mxu0 0
      %834 = vmatpush1.bf16.msra.mxu0 %v813
      %835 = vmatprep.subr.bf16.mxu0 0
      %836 = vmatpush1.bf16.msra.mxu0 %v814
      %837 = vmatprep.subr.bf16.mxu0 0
      %838 = vmatpush1.bf16.msra.mxu0 %v815
      %839 = vmatprep.subr.bf16.mxu0 0
      %840 = vmatpush1.bf16.msra.mxu0 %v816
      %841 = vmatprep.subr.bf16.mxu0 0
      %842 = vmatpush1.bf16.msra.mxu0 0
      %843 = vmatprep.subr.bf16.mxu0 0
      %844 = vmatpush1.bf16.msra.mxu0 0
      %845 = vmatprep.subr.bf16.mxu0 0
      %846 = vmatpush1.bf16.msra.mxu0 0
      %847 = vmatprep.subr.bf16.mxu0 0
      %848 = vmatpush1.bf16.msra.mxu0 0
      %849 = vmatprep.subr.bf16.mxu0 0
      %850 = vmatpush1.bf16.msra.mxu0 0
      %851 = vmatprep.subr.bf16.mxu0 0
      %852 = vmatpush1.bf16.msra.mxu0 0
      %853 = vmatprep.subr.bf16.mxu0 0
      %854 = vmatpush1.bf16.msra.mxu0 0
      %855 = vmatprep.subr.bf16.mxu0 0
      %856 = vmatpush1.bf16.msra.mxu0 0
      %857 = vmatprep.mubr.bf16.mxu0 0
      %858 = vmatmul.mubr.bf16.gmra.mrb[0].mxu0 %v232
      %v859 = vpop.f32.mrb[0].mxu0
      %v860 = vadd.f32 0.0, %v859
      %v861 = vpop.f32.mrb[0].mxu0
      %v862 = vpop.f32.mrb[0].mxu0
      %v863 = vpop.f32.mrb[0].mxu0
      %864 = vdwg.mxu0
      %v881 = vunpack.c.l.b16 %v313
      %v882 = vunpack.c.l.b16 %v314
      %v883 = vunpack.c.l.b16 %v315
      %v884 = vunpack.c.l.b16 %v316
      %v885 = vunpack.c.l.b16 %v317
      %v886 = vunpack.c.l.b16 %v318
      %v887 = vunpack.c.l.b16 %v319
      %v888 = vunpack.c.l.b16 %v320
      %v889 = vunpack.c.l.b16 %v321
      %v890 = vunpack.c.l.b16 %v322
      %v891 = vunpack.c.l.b16 %v323
      %v892 = vunpack.c.l.b16 %v324
      %v893 = vunpack.c.l.b16 %v325
      %v894 = vunpack.c.l.b16 %v326
      %v895 = vunpack.c.l.b16 %v327
      %v896 = vunpack.c.l.b16 %v328
      %v897 = vpack.c.b16 %v882, %v881
      %v898 = vpack.c.b16 %v884, %v883
      %v899 = vpack.c.b16 %v886, %v885
      %v900 = vpack.c.b16 %v888, %v887
      %v901 = vpack.c.b16 %v890, %v889
      %v902 = vpack.c.b16 %v892, %v891
      %v903 = vpack.c.b16 %v894, %v893
      %v904 = vpack.c.b16 %v896, %v895
      %913 = vmatprep.subr.bf16.mxu0 0
      %914 = vmatpush1.bf16.msra.mxu0 %v897
      %915 = vmatprep.subr.bf16.mxu0 0
      %916 = vmatpush1.bf16.msra.mxu0 %v898
      %917 = vmatprep.subr.bf16.mxu0 0
      %918 = vmatpush1.bf16.msra.mxu0 %v899
      %919 = vmatprep.subr.bf16.mxu0 0
      %920 = vmatpush1.bf16.msra.mxu0 %v900
      %921 = vmatprep.subr.bf16.mxu0 0
      %922 = vmatpush1.bf16.msra.mxu0 %v901
      %923 = vmatprep.subr.bf16.mxu0 0
      %924 = vmatpush1.bf16.msra.mxu0 %v902
      %925 = vmatprep.subr.bf16.mxu0 0
      %926 = vmatpush1.bf16.msra.mxu0 %v903
      %927 = vmatprep.subr.bf16.mxu0 0
      %928 = vmatpush1.bf16.msra.mxu0 %v904
      %929 = vmatprep.subr.bf16.mxu0 0
      %930 = vmatpush1.bf16.msra.mxu0 0
      %931 = vmatprep.subr.bf16.mxu0 0
      %932 = vmatpush1.bf16.msra.mxu0 0
      %933 = vmatprep.subr.bf16.mxu0 0
      %934 = vmatpush1.bf16.msra.mxu0 0
      %935 = vmatprep.subr.bf16.mxu0 0
      %936 = vmatpush1.bf16.msra.mxu0 0
      %937 = vmatprep.subr.bf16.mxu0 0
      %938 = vmatpush1.bf16.msra.mxu0 0
      %939 = vmatprep.subr.bf16.mxu0 0
      %940 = vmatpush1.bf16.msra.mxu0 0
      %941 = vmatprep.subr.bf16.mxu0 0
      %942 = vmatpush1.bf16.msra.mxu0 0
      %943 = vmatprep.subr.bf16.mxu0 0
      %944 = vmatpush1.bf16.msra.mxu0 0
      %945 = vmatprep.mubr.bf16.mxu0 0
      %946 = vmatmul.mubr.bf16.gmra.mrb[0].mxu0 %v232
      %v947 = vpop.f32.mrb[0].mxu0
      %v948 = vadd.f32 0.0, %v947
      %v949 = vpop.f32.mrb[0].mxu0
      %v950 = vpop.f32.mrb[0].mxu0
      %v951 = vpop.f32.mrb[0].mxu0
      %952 = vdwg.mxu0
      %v969 = vunpack.c.l.b16 %v329
      %v970 = vunpack.c.l.b16 %v330
      %v971 = vunpack.c.l.b16 %v331
      %v972 = vunpack.c.l.b16 %v332
      %v973 = vunpack.c.l.b16 %v333
      %v974 = vunpack.c.l.b16 %v334
      %v975 = vunpack.c.l.b16 %v335
      %v976 = vunpack.c.l.b16 %v336
      %v977 = vunpack.c.l.b16 %v337
      %v978 = vunpack.c.l.b16 %v338
      %v979 = vunpack.c.l.b16 %v339
      %v980 = vunpack.c.l.b16 %v340
      %v981 = vunpack.c.l.b16 %v341
      %v982 = vunpack.c.l.b16 %v342
      %v983 = vunpack.c.l.b16 %v343
      %v984 = vunpack.c.l.b16 %v344
      %v985 = vpack.c.b16 %v970, %v969
      %v986 = vpack.c.b16 %v972, %v971
      %v987 = vpack.c.b16 %v974, %v973
      %v988 = vpack.c.b16 %v976, %v975
      %v989 = vpack.c.b16 %v978, %v977
      %v990 = vpack.c.b16 %v980, %v979
      %v991 = vpack.c.b16 %v982, %v981
      %v992 = vpack.c.b16 %v984, %v983
      %1001 = vmatprep.subr.bf16.mxu0 0
      %1002 = vmatpush1.bf16.msra.mxu0 %v985
      %1003 = vmatprep.subr.bf16.mxu0 0
      %1004 = vmatpush1.bf16.msra.mxu0 %v986
      %1005 = vmatprep.subr.bf16.mxu0 0
      %1006 = vmatpush1.bf16.msra.mxu0 %v987
      %1007 = vmatprep.subr.bf16.mxu0 0
      %1008 = vmatpush1.bf16.msra.mxu0 %v988
      %1009 = vmatprep.subr.bf16.mxu0 0
      %1010 = vmatpush1.bf16.msra.mxu0 %v989
      %1011 = vmatprep.subr.bf16.mxu0 0
      %1012 = vmatpush1.bf16.msra.mxu0 %v990
      %1013 = vmatprep.subr.bf16.mxu0 0
      %1014 = vmatpush1.bf16.msra.mxu0 %v991
      %1015 = vmatprep.subr.bf16.mxu0 0
      %1016 = vmatpush1.bf16.msra.mxu0 %v992
      %1017 = vmatprep.subr.bf16.mxu0 0
      %1018 = vmatpush1.bf16.msra.mxu0 0
      %1019 = vmatprep.subr.bf16.mxu0 0
      %1020 = vmatpush1.bf16.msra.mxu0 0
      %1021 = vmatprep.subr.bf16.mxu0 0
      %1022 = vmatpush1.bf16.msra.mxu0 0
      %1023 = vmatprep.subr.bf16.mxu0 0
      %1024 = vmatpush1.bf16.msra.mxu0 0
      %1025 = vmatprep.subr.bf16.mxu0 0
      %1026 = vmatpush1.bf16.msra.mxu0 0
      %1027 = vmatprep.subr.bf16.mxu0 0
      %1028 = vmatpush1.bf16.msra.mxu0 0
      %1029 = vmatprep.subr.bf16.mxu0 0
      %1030 = vmatpush1.bf16.msra.mxu0 0
      %1031 = vmatprep.subr.bf16.mxu0 0
      %1032 = vmatpush1.bf16.msra.mxu0 0
      %1033 = vmatprep.mubr.bf16.mxu0 0
      %1034 = vmatmul.mubr.bf16.gmra.mrb[0].mxu0 %v232
      %v1035 = vpop.f32.mrb[0].mxu0
      %v1036 = vadd.f32 0.0, %v1035
      %v1037 = vpop.f32.mrb[0].mxu0
      %v1038 = vpop.f32.mrb[0].mxu0
      %v1039 = vpop.f32.mrb[0].mxu0
      %1040 = vdwg.mxu0
      %v1057 = vunpack.c.l.b16 %v345
      %v1058 = vunpack.c.l.b16 %v346
      %v1059 = vunpack.c.l.b16 %v347
      %v1060 = vunpack.c.l.b16 %v348
      %v1061 = vunpack.c.l.b16 %v349
      %v1062 = vunpack.c.l.b16 %v350
      %v1063 = vunpack.c.l.b16 %v351
      %v1064 = vunpack.c.l.b16 %v352
      %v1065 = vunpack.c.l.b16 %v353
      %v1066 = vunpack.c.l.b16 %v354
      %v1067 = vunpack.c.l.b16 %v355
      %v1068 = vunpack.c.l.b16 %v356
      %v1069 = vunpack.c.l.b16 %v357
      %v1070 = vunpack.c.l.b16 %v358
      %v1071 = vunpack.c.l.b16 %v359
      %v1072 = vunpack.c.l.b16 %v360
      %v1073 = vpack.c.b16 %v1058, %v1057
      %v1074 = vpack.c.b16 %v1060, %v1059
      %v1075 = vpack.c.b16 %v1062, %v1061
      %v1076 = vpack.c.b16 %v1064, %v1063
      %v1077 = vpack.c.b16 %v1066, %v1065
      %v1078 = vpack.c.b16 %v1068, %v1067
      %v1079 = vpack.c.b16 %v1070, %v1069
      %v1080 = vpack.c.b16 %v1072, %v1071
      %1089 = vmatprep.subr.bf16.mxu0 0
      %1090 = vmatpush1.bf16.msra.mxu0 %v1073
      %1091 = vmatprep.subr.bf16.mxu0 0
      %1092 = vmatpush1.bf16.msra.mxu0 %v1074
      %1093 = vmatprep.subr.bf16.mxu0 0
      %1094 = vmatpush1.bf16.msra.mxu0 %v1075
      %1095 = vmatprep.subr.bf16.mxu0 0
      %1096 = vmatpush1.bf16.msra.mxu0 %v1076
      %1097 = vmatprep.subr.bf16.mxu0 0
      %1098 = vmatpush1.bf16.msra.mxu0 %v1077
      %1099 = vmatprep.subr.bf16.mxu0 0
      %1100 = vmatpush1.bf16.msra.mxu0 %v1078
      %1101 = vmatprep.subr.bf16.mxu0 0
      %1102 = vmatpush1.bf16.msra.mxu0 %v1079
      %1103 = vmatprep.subr.bf16.mxu0 0
      %1104 = vmatpush1.bf16.msra.mxu0 %v1080
      %1105 = vmatprep.subr.bf16.mxu0 0
      %1106 = vmatpush1.bf16.msra.mxu0 0
      %1107 = vmatprep.subr.bf16.mxu0 0
      %1108 = vmatpush1.bf16.msra.mxu0 0
      %1109 = vmatprep.subr.bf16.mxu0 0
      %1110 = vmatpush1.bf16.msra.mxu0 0
      %1111 = vmatprep.subr.bf16.mxu0 0
      %1112 = vmatpush1.bf16.msra.mxu0 0
      %1113 = vmatprep.subr.bf16.mxu0 0
      %1114 = vmatpush1.bf16.msra.mxu0 0
      %1115 = vmatprep.subr.bf16.mxu0 0
      %1116 = vmatpush1.bf16.msra.mxu0 0
      %1117 = vmatprep.subr.bf16.mxu0 0
      %1118 = vmatpush1.bf16.msra.mxu0 0
      %1119 = vmatprep.subr.bf16.mxu0 0
      %1120 = vmatpush1.bf16.msra.mxu0 0
      %1121 = vmatprep.mubr.bf16.mxu0 0
      %1122 = vmatmul.mubr.bf16.gmra.mrb[0].mxu0 %v232
      %v1123 = vpop.f32.mrb[0].mxu0
      %v1124 = vadd.f32 0.0, %v1123
      %v1125 = vpop.f32.mrb[0].mxu0
      %v1126 = vpop.f32.mrb[0].mxu0
      %v1127 = vpop.f32.mrb[0].mxu0
      %1128 = vdwg.mxu0
      %v1145 = vunpack.c.l.b16 %v361
      %v1146 = vunpack.c.l.b16 %v362
      %v1147 = vunpack.c.l.b16 %v363
      %v1148 = vunpack.c.l.b16 %v364
      %v1149 = vunpack.c.l.b16 %v365
      %v1150 = vunpack.c.l.b16 %v366
      %v1151 = vunpack.c.l.b16 %v367
      %v1152 = vunpack.c.l.b16 %v368
      %v1153 = vunpack.c.l.b16 %v369
      %v1154 = vunpack.c.l.b16 %v370
      %v1155 = vunpack.c.l.b16 %v371
      %v1156 = vunpack.c.l.b16 %v372
      %v1157 = vunpack.c.l.b16 %v373
      %v1158 = vunpack.c.l.b16 %v374
      %v1159 = vunpack.c.l.b16 %v375
      %v1160 = vunpack.c.l.b16 %v376
      %v1161 = vpack.c.b16 %v1146, %v1145
      %v1162 = vpack.c.b16 %v1148, %v1147
      %v1163 = vpack.c.b16 %v1150, %v1149
      %v1164 = vpack.c.b16 %v1152, %v1151
      %v1165 = vpack.c.b16 %v1154, %v1153
      %v1166 = vpack.c.b16 %v1156, %v1155
      %v1167 = vpack.c.b16 %v1158, %v1157
      %v1168 = vpack.c.b16 %v1160, %v1159
      %1177 = vmatprep.subr.bf16.mxu0 0
      %1178 = vmatpush1.bf16.msra.mxu0 %v1161
      %1179 = vmatprep.subr.bf16.mxu0 0
      %1180 = vmatpush1.bf16.msra.mxu0 %v1162
      %1181 = vmatprep.subr.bf16.mxu0 0
      %1182 = vmatpush1.bf16.msra.mxu0 %v1163
      %1183 = vmatprep.subr.bf16.mxu0 0
      %1184 = vmatpush1.bf16.msra.mxu0 %v1164
      %1185 = vmatprep.subr.bf16.mxu0 0
      %1186 = vmatpush1.bf16.msra.mxu0 %v1165
      %1187 = vmatprep.subr.bf16.mxu0 0
      %1188 = vmatpush1.bf16.msra.mxu0 %v1166
      %1189 = vmatprep.subr.bf16.mxu0 0
      %1190 = vmatpush1.bf16.msra.mxu0 %v1167
      %1191 = vmatprep.subr.bf16.mxu0 0
      %1192 = vmatpush1.bf16.msra.mxu0 %v1168
      %1193 = vmatprep.subr.bf16.mxu0 0
      %1194 = vmatpush1.bf16.msra.mxu0 0
      %1195 = vmatprep.subr.bf16.mxu0 0
      %1196 = vmatpush1.bf16.msra.mxu0 0
      %1197 = vmatprep.subr.bf16.mxu0 0
      %1198 = vmatpush1.bf16.msra.mxu0 0
      %1199 = vmatprep.subr.bf16.mxu0 0
      %1200 = vmatpush1.bf16.msra.mxu0 0
      %1201 = vmatprep.subr.bf16.mxu0 0
      %1202 = vmatpush1.bf16.msra.mxu0 0
      %1203 = vmatprep.subr.bf16.mxu0 0
      %1204 = vmatpush1.bf16.msra.mxu0 0
      %1205 = vmatprep.subr.bf16.mxu0 0
      %1206 = vmatpush1.bf16.msra.mxu0 0
      %1207 = vmatprep.subr.bf16.mxu0 0
      %1208 = vmatpush1.bf16.msra.mxu0 0
      %1209 = vmatprep.mubr.bf16.mxu0 0
      %1210 = vmatmul.mubr.bf16.gmra.mrb[0].mxu0 %v232
      %v1211 = vpop.f32.mrb[0].mxu0
      %v1212 = vadd.f32 0.0, %v1211
      %v1213 = vpop.f32.mrb[0].mxu0
      %v1214 = vpop.f32.mrb[0].mxu0
      %v1215 = vpop.f32.mrb[0].mxu0
      %1216 = vdwg.mxu0
      %v1233 = vunpack.c.l.b16 %v377
      %v1234 = vunpack.c.l.b16 %v378
      %v1235 = vunpack.c.l.b16 %v379
      %v1236 = vunpack.c.l.b16 %v380
      %v1237 = vunpack.c.l.b16 %v381
      %v1238 = vunpack.c.l.b16 %v382
      %v1239 = vunpack.c.l.b16 %v383
      %v1240 = vunpack.c.l.b16 %v384
      %v1241 = vunpack.c.l.b16 %v385
      %v1242 = vunpack.c.l.b16 %v386
      %v1243 = vunpack.c.l.b16 %v387
      %v1244 = vunpack.c.l.b16 %v388
      %v1245 = vunpack.c.l.b16 %v389
      %v1246 = vunpack.c.l.b16 %v390
      %v1247 = vunpack.c.l.b16 %v391
      %v1248 = vunpack.c.l.b16 %v392
      %v1249 = vpack.c.b16 %v1234, %v1233
      %v1250 = vpack.c.b16 %v1236, %v1235
      %v1251 = vpack.c.b16 %v1238, %v1237
      %v1252 = vpack.c.b16 %v1240, %v1239
      %v1253 = vpack.c.b16 %v1242, %v1241
      %v1254 = vpack.c.b16 %v1244, %v1243
      %v1255 = vpack.c.b16 %v1246, %v1245
      %v1256 = vpack.c.b16 %v1248, %v1247
      %1265 = vmatprep.subr.bf16.mxu0 0
      %1266 = vmatpush1.bf16.msra.mxu0 %v1249
      %1267 = vmatprep.subr.bf16.mxu0 0
      %1268 = vmatpush1.bf16.msra.mxu0 %v1250
      %1269 = vmatprep.subr.bf16.mxu0 0
      %1270 = vmatpush1.bf16.msra.mxu0 %v1251
      %1271 = vmatprep.subr.bf16.mxu0 0
      %1272 = vmatpush1.bf16.msra.mxu0 %v1252
      %1273 = vmatprep.subr.bf16.mxu0 0
      %1274 = vmatpush1.bf16.msra.mxu0 %v1253
      %1275 = vmatprep.subr.bf16.mxu0 0
      %1276 = vmatpush1.bf16.msra.mxu0 %v1254
      %1277 = vmatprep.subr.bf16.mxu0 0
      %1278 = vmatpush1.bf16.msra.mxu0 %v1255
      %1279 = vmatprep.subr.bf16.mxu0 0
      %1280 = vmatpush1.bf16.msra.mxu0 %v1256
      %1281 = vmatprep.subr.bf16.mxu0 0
      %1282 = vmatpush1.bf16.msra.mxu0 0
      %1283 = vmatprep.subr.bf16.mxu0 0
      %1284 = vmatpush1.bf16.msra.mxu0 0
      %1285 = vmatprep.subr.bf16.mxu0 0
      %1286 = vmatpush1.bf16.msra.mxu0 0
      %1287 = vmatprep.subr.bf16.mxu0 0
      %1288 = vmatpush1.bf16.msra.mxu0 0
      %1289 = vmatprep.subr.bf16.mxu0 0
      %1290 = vmatpush1.bf16.msra.mxu0 0
      %1291 = vmatprep.subr.bf16.mxu0 0
      %1292 = vmatpush1.bf16.msra.mxu0 0
      %1293 = vmatprep.subr.bf16.mxu0 0
      %1294 = vmatpush1.bf16.msra.mxu0 0
      %1295 = vmatprep.subr.bf16.mxu0 0
      %1296 = vmatpush1.bf16.msra.mxu0 0
      %1297 = vmatprep.mubr.bf16.mxu0 0
      %1298 = vmatmul.mubr.bf16.gmra.mrb[0].mxu0 %v232
      %v1299 = vpop.f32.mrb[0].mxu0
      %v1300 = vadd.f32 0.0, %v1299
      %v1301 = vpop.f32.mrb[0].mxu0
      %v1302 = vpop.f32.mrb[0].mxu0
      %v1303 = vpop.f32.mrb[0].mxu0
      %1304 = vdwg.mxu0
      %v1321 = vunpack.c.l.b16 %v393
      %v1322 = vunpack.c.l.b16 %v394
      %v1323 = vunpack.c.l.b16 %v395
      %v1324 = vunpack.c.l.b16 %v396
      %v1325 = vunpack.c.l.b16 %v397
      %v1326 = vunpack.c.l.b16 %v398
      %v1327 = vunpack.c.l.b16 %v399
      %v1328 = vunpack.c.l.b16 %v400
      %v1329 = vunpack.c.l.b16 %v401
      %v1330 = vunpack.c.l.b16 %v402
      %v1331 = vunpack.c.l.b16 %v403
      %v1332 = vunpack.c.l.b16 %v404
      %v1333 = vunpack.c.l.b16 %v405
      %v1334 = vunpack.c.l.b16 %v406
      %v1335 = vunpack.c.l.b16 %v407
      %v1336 = vunpack.c.l.b16 %v408
      %v1337 = vpack.c.b16 %v1322, %v1321
      %v1338 = vpack.c.b16 %v1324, %v1323
      %v1339 = vpack.c.b16 %v1326, %v1325
      %v1340 = vpack.c.b16 %v1328, %v1327
      %v1341 = vpack.c.b16 %v1330, %v1329
      %v1342 = vpack.c.b16 %v1332, %v1331
      %v1343 = vpack.c.b16 %v1334, %v1333
      %v1344 = vpack.c.b16 %v1336, %v1335
      %1353 = vmatprep.subr.bf16.mxu0 0
      %1354 = vmatpush1.bf16.msra.mxu0 %v1337
      %1355 = vmatprep.subr.bf16.mxu0 0
      %1356 = vmatpush1.bf16.msra.mxu0 %v1338
      %1357 = vmatprep.subr.bf16.mxu0 0
      %1358 = vmatpush1.bf16.msra.mxu0 %v1339
      %1359 = vmatprep.subr.bf16.mxu0 0
      %1360 = vmatpush1.bf16.msra.mxu0 %v1340
      %1361 = vmatprep.subr.bf16.mxu0 0
      %1362 = vmatpush1.bf16.msra.mxu0 %v1341
      %1363 = vmatprep.subr.bf16.mxu0 0
      %1364 = vmatpush1.bf16.msra.mxu0 %v1342
      %1365 = vmatprep.subr.bf16.mxu0 0
      %1366 = vmatpush1.bf16.msra.mxu0 %v1343
      %1367 = vmatprep.subr.bf16.mxu0 0
      %1368 = vmatpush1.bf16.msra.mxu0 %v1344
      %1369 = vmatprep.subr.bf16.mxu0 0
      %1370 = vmatpush1.bf16.msra.mxu0 0
      %1371 = vmatprep.subr.bf16.mxu0 0
      %1372 = vmatpush1.bf16.msra.mxu0 0
      %1373 = vmatprep.subr.bf16.mxu0 0
      %1374 = vmatpush1.bf16.msra.mxu0 0
      %1375 = vmatprep.subr.bf16.mxu0 0
      %1376 = vmatpush1.bf16.msra.mxu0 0
      %1377 = vmatprep.subr.bf16.mxu0 0
      %1378 = vmatpush1.bf16.msra.mxu0 0
      %1379 = vmatprep.subr.bf16.mxu0 0
      %1380 = vmatpush1.bf16.msra.mxu0 0
      %1381 = vmatprep.subr.bf16.mxu0 0
      %1382 = vmatpush1.bf16.msra.mxu0 0
      %1383 = vmatprep.subr.bf16.mxu0 0
      %1384 = vmatpush1.bf16.msra.mxu0 0
      %1385 = vmatprep.mubr.bf16.mxu0 0
      %1386 = vmatmul.mubr.bf16.gmra.mrb[0].mxu0 %v232
      %v1387 = vpop.f32.mrb[0].mxu0
      %v1388 = vadd.f32 0.0, %v1387
      %v1389 = vpop.f32.mrb[0].mxu0
      %v1390 = vpop.f32.mrb[0].mxu0
      %v1391 = vpop.f32.mrb[0].mxu0
      %1392 = vdwg.mxu0
      %v1409 = vunpack.c.l.b16 %v409
      %v1410 = vunpack.c.l.b16 %v410
      %v1411 = vunpack.c.l.b16 %v411
      %v1412 = vunpack.c.l.b16 %v412
      %v1413 = vunpack.c.l.b16 %v413
      %v1414 = vunpack.c.l.b16 %v414
      %v1415 = vunpack.c.l.b16 %v415
      %v1416 = vunpack.c.l.b16 %v416
      %v1417 = vunpack.c.l.b16 %v417
      %v1418 = vunpack.c.l.b16 %v418
      %v1419 = vunpack.c.l.b16 %v419
      %v1420 = vunpack.c.l.b16 %v420
      %v1421 = vunpack.c.l.b16 %v421
      %v1422 = vunpack.c.l.b16 %v422
      %v1423 = vunpack.c.l.b16 %v423
      %v1424 = vunpack.c.l.b16 %v424
      %v1425 = vpack.c.b16 %v1410, %v1409
      %v1426 = vpack.c.b16 %v1412, %v1411
      %v1427 = vpack.c.b16 %v1414, %v1413
      %v1428 = vpack.c.b16 %v1416, %v1415
      %v1429 = vpack.c.b16 %v1418, %v1417
      %v1430 = vpack.c.b16 %v1420, %v1419
      %v1431 = vpack.c.b16 %v1422, %v1421
      %v1432 = vpack.c.b16 %v1424, %v1423
      %1441 = vmatprep.subr.bf16.mxu0 0
      %1442 = vmatpush1.bf16.msra.mxu0 %v1425
      %1443 = vmatprep.subr.bf16.mxu0 0
      %1444 = vmatpush1.bf16.msra.mxu0 %v1426
      %1445 = vmatprep.subr.bf16.mxu0 0
      %1446 = vmatpush1.bf16.msra.mxu0 %v1427
      %1447 = vmatprep.subr.bf16.mxu0 0
      %1448 = vmatpush1.bf16.msra.mxu0 %v1428
      %1449 = vmatprep.subr.bf16.mxu0 0
      %1450 = vmatpush1.bf16.msra.mxu0 %v1429
      %1451 = vmatprep.subr.bf16.mxu0 0
      %1452 = vmatpush1.bf16.msra.mxu0 %v1430
      %1453 = vmatprep.subr.bf16.mxu0 0
      %1454 = vmatpush1.bf16.msra.mxu0 %v1431
      %1455 = vmatprep.subr.bf16.mxu0 0
      %1456 = vmatpush1.bf16.msra.mxu0 %v1432
      %1457 = vmatprep.subr.bf16.mxu0 0
      %1458 = vmatpush1.bf16.msra.mxu0 0
      %1459 = vmatprep.subr.bf16.mxu0 0
      %1460 = vmatpush1.bf16.msra.mxu0 0
      %1461 = vmatprep.subr.bf16.mxu0 0
      %1462 = vmatpush1.bf16.msra.mxu0 0
      %1463 = vmatprep.subr.bf16.mxu0 0
      %1464 = vmatpush1.bf16.msra.mxu0 0
      %1465 = vmatprep.subr.bf16.mxu0 0
      %1466 = vmatpush1.bf16.msra.mxu0 0
      %1467 = vmatprep.subr.bf16.mxu0 0
      %1468 = vmatpush1.bf16.msra.mxu0 0
      %1469 = vmatprep.subr.bf16.mxu0 0
      %1470 = vmatpush1.bf16.msra.mxu0 0
      %1471 = vmatprep.subr.bf16.mxu0 0
      %1472 = vmatpush1.bf16.msra.mxu0 0
      %1473 = vmatprep.mubr.bf16.mxu0 0
      %1474 = vmatmul.mubr.bf16.gmra.mrb[0].mxu0 %v232
      %v1475 = vpop.f32.mrb[0].mxu0
      %v1476 = vadd.f32 0.0, %v1475
      %v1477 = vpop.f32.mrb[0].mxu0
      %v1478 = vpop.f32.mrb[0].mxu0
      %v1479 = vpop.f32.mrb[0].mxu0
      %1480 = vdwg.mxu0
      %v1481 = vpack.c.bf16 %v508, %v508
      %v1482 = vpack.c.bf16 %v596, %v596
      %v1483 = vpack.c.bf16 %v684, %v684
      %v1484 = vpack.c.bf16 %v772, %v772
      %v1485 = vpack.c.bf16 %v860, %v860
      %v1486 = vpack.c.bf16 %v948, %v948
      %v1487 = vpack.c.bf16 %v1036, %v1036
      %v1488 = vpack.c.bf16 %v1124, %v1124
      %v1489 = vpack.c.bf16 %v1212, %v1212
      %v1490 = vpack.c.bf16 %v1300, %v1300
      %v1491 = vpack.c.bf16 %v1388, %v1388
      %v1492 = vpack.c.bf16 %v1476, %v1476
      %vm1493 = vcmask 261120
      %v1495 = vsel %vm1493, %v1481, 0
      %v1498 = vsel %vm1493, %v1485, 0
      %1500 = vmatprep.subr.bf16.mxu0 0
      %1501 = vmatpush1.bf16.xpose.msra.mxu0 %v1498
      %1502 = vmatprep.subr.bf16.mxu0 0
      %1503 = vmatpush1.bf16.xpose.msra.mxu0 0
      %1504 = vmatprep.subr.bf16.mxu0 0
      %1505 = vmatpush1.bf16.xpose.msra.mxu0 0
      %1506 = vmatprep.subr.bf16.mxu0 0
      %1507 = vmatpush1.bf16.xpose.msra.mxu0 0
      %1508 = vmatprep.subr.bf16.mxu0 0
      %1509 = vmatpush1.bf16.xpose.msra.mxu0 0
      %1510 = vmatprep.subr.bf16.mxu0 0
      %1511 = vmatpush1.bf16.xpose.msra.mxu0 0
      %1512 = vmatprep.subr.bf16.mxu0 0
      %1513 = vmatpush1.bf16.xpose.msra.mxu0 0
      %1514 = vmatprep.subr.bf16.mxu0 0
      %1515 = vmatpush1.bf16.xpose.msra.mxu0 0
      %1516 = vmatprep.subr.bf16.mxu0 0
      %1517 = vmatpush1.bf16.xpose.msra.mxu0 0
      %1518 = vmatprep.subr.bf16.mxu0 0
      %1519 = vmatpush1.bf16.xpose.msra.mxu0 0
      %1520 = vmatprep.subr.bf16.mxu0 0
      %1521 = vmatpush1.bf16.xpose.msra.mxu0 0
      %1522 = vmatprep.subr.bf16.mxu0 0
      %1523 = vmatpush1.bf16.xpose.msra.mxu0 0
      %1524 = vmatprep.subr.bf16.mxu0 0
      %1525 = vmatpush1.bf16.xpose.msra.mxu0 0
      %1526 = vmatprep.subr.bf16.mxu0 0
      %1527 = vmatpush1.bf16.xpose.msra.mxu0 0
      %1528 = vmatprep.subr.bf16.mxu0 0
      %1529 = vmatpush1.bf16.xpose.msra.mxu0 0
      %1530 = vmatprep.subr.bf16.mxu0 0
      %1531 = vmatpush1.bf16.xpose.msra.mxu0 0
      %1532 = vmatprep.mubr.bf16.mxu0 0
      %1533 = vmatmul.mubr.bf16.gmra.mrb[0].mxu0 %v1495
      %v1534 = vpop.f32.mrb[0].mxu0
      %v1535 = vadd.f32 0.0, %v1534
      %v1536 = vpop.f32.mrb[0].mxu0
      %v1537 = vpop.f32.mrb[0].mxu0
      %v1538 = vpop.f32.mrb[0].mxu0
      %1539 = vdwg.mxu0
      %v1541 = vsel %vm1493, %v1482, 0
      %v1544 = vsel %vm1493, %v1486, 0
      %1546 = vmatprep.subr.bf16.mxu0 0
      %1547 = vmatpush1.bf16.xpose.msra.mxu0 %v1544
      %1548 = vmatprep.subr.bf16.mxu0 0
      %1549 = vmatpush1.bf16.xpose.msra.mxu0 0
      %1550 = vmatprep.subr.bf16.mxu0 0
      %1551 = vmatpush1.bf16.xpose.msra.mxu0 0
      %1552 = vmatprep.subr.bf16.mxu0 0
      %1553 = vmatpush1.bf16.xpose.msra.mxu0 0
      %1554 = vmatprep.subr.bf16.mxu0 0
      %1555 = vmatpush1.bf16.xpose.msra.mxu0 0
      %1556 = vmatprep.subr.bf16.mxu0 0
      %1557 = vmatpush1.bf16.xpose.msra.mxu0 0
      %1558 = vmatprep.subr.bf16.mxu0 0
      %1559 = vmatpush1.bf16.xpose.msra.mxu0 0
      %1560 = vmatprep.subr.bf16.mxu0 0
      %1561 = vmatpush1.bf16.xpose.msra.mxu0 0
      %1562 = vmatprep.subr.bf16.mxu0 0
      %1563 = vmatpush1.bf16.xpose.msra.mxu0 0
      %1564 = vmatprep.subr.bf16.mxu0 0
      %1565 = vmatpush1.bf16.xpose.msra.mxu0 0
      %1566 = vmatprep.subr.bf16.mxu0 0
      %1567 = vmatpush1.bf16.xpose.msra.mxu0 0
      %1568 = vmatprep.subr.bf16.mxu0 0
      %1569 = vmatpush1.bf16.xpose.msra.mxu0 0
      %1570 = vmatprep.subr.bf16.mxu0 0
      %1571 = vmatpush1.bf16.xpose.msra.mxu0 0
      %1572 = vmatprep.subr.bf16.mxu0 0
      %1573 = vmatpush1.bf16.xpose.msra.mxu0 0
      %1574 = vmatprep.subr.bf16.mxu0 0
      %1575 = vmatpush1.bf16.xpose.msra.mxu0 0
      %1576 = vmatprep.subr.bf16.mxu0 0
      %1577 = vmatpush1.bf16.xpose.msra.mxu0 0
      %1578 = vmatprep.mubr.bf16.mxu0 0
      %1579 = vmatmul.mubr.bf16.gmra.mrb[0].mxu0 %v1541
      %v1580 = vpop.f32.mrb[0].mxu0
      %v1581 = vadd.f32 0.0, %v1580
      %v1582 = vpop.f32.mrb[0].mxu0
      %v1583 = vpop.f32.mrb[0].mxu0
      %v1584 = vpop.f32.mrb[0].mxu0
      %1585 = vdwg.mxu0
      %v1587 = vsel %vm1493, %v1483, 0
      %v1590 = vsel %vm1493, %v1487, 0
      %1592 = vmatprep.subr.bf16.mxu0 0
      %1593 = vmatpush1.bf16.xpose.msra.mxu0 %v1590
      %1594 = vmatprep.subr.bf16.mxu0 0
      %1595 = vmatpush1.bf16.xpose.msra.mxu0 0
      %1596 = vmatprep.subr.bf16.mxu0 0
      %1597 = vmatpush1.bf16.xpose.msra.mxu0 0
      %1598 = vmatprep.subr.bf16.mxu0 0
      %1599 = vmatpush1.bf16.xpose.msra.mxu0 0
      %1600 = vmatprep.subr.bf16.mxu0 0
      %1601 = vmatpush1.bf16.xpose.msra.mxu0 0
      %1602 = vmatprep.subr.bf16.mxu0 0
      %1603 = vmatpush1.bf16.xpose.msra.mxu0 0
      %1604 = vmatprep.subr.bf16.mxu0 0
      %1605 = vmatpush1.bf16.xpose.msra.mxu0 0
      %1606 = vmatprep.subr.bf16.mxu0 0
      %1607 = vmatpush1.bf16.xpose.msra.mxu0 0
      %1608 = vmatprep.subr.bf16.mxu0 0
      %1609 = vmatpush1.bf16.xpose.msra.mxu0 0
      %1610 = vmatprep.subr.bf16.mxu0 0
      %1611 = vmatpush1.bf16.xpose.msra.mxu0 0
      %1612 = vmatprep.subr.bf16.mxu0 0
      %1613 = vmatpush1.bf16.xpose.msra.mxu0 0
      %1614 = vmatprep.subr.bf16.mxu0 0
      %1615 = vmatpush1.bf16.xpose.msra.mxu0 0
      %1616 = vmatprep.subr.bf16.mxu0 0
      %1617 = vmatpush1.bf16.xpose.msra.mxu0 0
      %1618 = vmatprep.subr.bf16.mxu0 0
      %1619 = vmatpush1.bf16.xpose.msra.mxu0 0
      %1620 = vmatprep.subr.bf16.mxu0 0
      %1621 = vmatpush1.bf16.xpose.msra.mxu0 0
      %1622 = vmatprep.subr.bf16.mxu0 0
      %1623 = vmatpush1.bf16.xpose.msra.mxu0 0
      %1624 = vmatprep.mubr.bf16.mxu0 0
      %1625 = vmatmul.mubr.bf16.gmra.mrb[0].mxu0 %v1587
      %v1626 = vpop.f32.mrb[0].mxu0
      %v1627 = vadd.f32 0.0, %v1626
      %v1628 = vpop.f32.mrb[0].mxu0
      %v1629 = vpop.f32.mrb[0].mxu0
      %v1630 = vpop.f32.mrb[0].mxu0
      %1631 = vdwg.mxu0
      %v1633 = vsel %vm1493, %v1484, 0
      %v1636 = vsel %vm1493, %v1488, 0
      %1638 = vmatprep.subr.bf16.mxu0 0
      %1639 = vmatpush1.bf16.xpose.msra.mxu0 %v1636
      %1640 = vmatprep.subr.bf16.mxu0 0
      %1641 = vmatpush1.bf16.xpose.msra.mxu0 0
      %1642 = vmatprep.subr.bf16.mxu0 0
      %1643 = vmatpush1.bf16.xpose.msra.mxu0 0
      %1644 = vmatprep.subr.bf16.mxu0 0
      %1645 = vmatpush1.bf16.xpose.msra.mxu0 0
      %1646 = vmatprep.subr.bf16.mxu0 0
      %1647 = vmatpush1.bf16.xpose.msra.mxu0 0
      %1648 = vmatprep.subr.bf16.mxu0 0
      %1649 = vmatpush1.bf16.xpose.msra.mxu0 0
      %1650 = vmatprep.subr.bf16.mxu0 0
      %1651 = vmatpush1.bf16.xpose.msra.mxu0 0
      %1652 = vmatprep.subr.bf16.mxu0 0
      %1653 = vmatpush1.bf16.xpose.msra.mxu0 0
      %1654 = vmatprep.subr.bf16.mxu0 0
      %1655 = vmatpush1.bf16.xpose.msra.mxu0 0
      %1656 = vmatprep.subr.bf16.mxu0 0
      %1657 = vmatpush1.bf16.xpose.msra.mxu0 0
      %1658 = vmatprep.subr.bf16.mxu0 0
      %1659 = vmatpush1.bf16.xpose.msra.mxu0 0
      %1660 = vmatprep.subr.bf16.mxu0 0
      %1661 = vmatpush1.bf16.xpose.msra.mxu0 0
      %1662 = vmatprep.subr.bf16.mxu0 0
      %1663 = vmatpush1.bf16.xpose.msra.mxu0 0
      %1664 = vmatprep.subr.bf16.mxu0 0
      %1665 = vmatpush1.bf16.xpose.msra.mxu0 0
      %1666 = vmatprep.subr.bf16.mxu0 0
      %1667 = vmatpush1.bf16.xpose.msra.mxu0 0
      %1668 = vmatprep.subr.bf16.mxu0 0
      %1669 = vmatpush1.bf16.xpose.msra.mxu0 0
      %1670 = vmatprep.mubr.bf16.mxu0 0
      %1671 = vmatmul.mubr.bf16.gmra.mrb[0].mxu0 %v1633
      %v1672 = vpop.f32.mrb[0].mxu0
      %v1673 = vadd.f32 0.0, %v1672
      %v1674 = vpop.f32.mrb[0].mxu0
      %v1675 = vpop.f32.mrb[0].mxu0
      %v1676 = vpop.f32.mrb[0].mxu0
      %1677 = vdwg.mxu0
      %v1678 = vmul.f32 %v1535, 0.35355338
      %v1679 = vmul.f32 %v1581, 0.35355338
      %v1680 = vmul.f32 %v1627, 0.35355338
      %v1681 = vmul.f32 %v1673, 0.35355338
      %vm1682 = vcmask 64512
      %v1683 = vsel %vm1682, %v1678, -inf
      %1684 = vmax.xlane.f32.xlu0 %v1683
      %v1685 = vpop.xlane.xlu0 %1684
      %v1686 = vsel %vm1682, %v1679, -inf
      %1687 = vmax.xlane.f32.xlu0 %v1686
      %v1688 = vpop.xlane.xlu0 %1687
      %v1689 = vsel %vm1682, %v1680, -inf
      %1690 = vmax.xlane.f32.xlu0 %v1689
      %v1691 = vpop.xlane.xlu0 %1690
      %v1692 = vsel %vm1682, %v1681, -inf
      %1693 = vmax.xlane.f32.xlu0 %v1692
      %v1694 = vpop.xlane.xlu0 %1693
      %v1695 = vsub.f32 %v1678, %v1685
      %v1696 = vsub.f32 %v1679, %v1688
      %v1697 = vsub.f32 %v1680, %v1691
      %v1698 = vsub.f32 %v1681, %v1694
      %v1699 = vmul.f32 %v1695, 1.442695
      %v1700 = vpow.pop %v1699
      %v1701 = vmul.f32 %v1696, 1.442695
      %v1702 = vpow.pop %v1701
      %v1703 = vmul.f32 %v1697, 1.442695
      %v1704 = vpow.pop %v1703
      %v1705 = vmul.f32 %v1698, 1.442695
      %v1706 = vpow.pop %v1705
      %v1707 = vsel %vm1682, %v1700, 0.0
      %1708 = vadd.xlane.f32.xlu0 %v1707
      %v1709 = vpop.xlane.xlu0 %1708
      %v1710 = vsel %vm1682, %v1702, 0.0
      %1711 = vadd.xlane.f32.xlu0 %v1710
      %v1712 = vpop.xlane.xlu0 %1711
      %v1713 = vsel %vm1682, %v1704, 0.0
      %1714 = vadd.xlane.f32.xlu0 %v1713
      %v1715 = vpop.xlane.xlu0 %1714
      %v1716 = vsel %vm1682, %v1706, 0.0
      %1717 = vadd.xlane.f32.xlu0 %v1716
      %v1718 = vpop.xlane.xlu0 %1717
      %v1719 = vrcp.pop %v1709
      %v1720 = vrcp.pop %v1712
      %v1721 = vrcp.pop %v1715
      %v1722 = vrcp.pop %v1718
      %v1723 = vmul.f32 %v1700, %v1719
      %v1724 = vmul.f32 %v1702, %v1720
      %v1725 = vmul.f32 %v1704, %v1721
      %v1726 = vmul.f32 %v1706, %v1722
      %v1727 = vpack.c.bf16 %v1723, %v1723
      %v1728 = vpack.c.bf16 %v1724, %v1724
      %v1729 = vpack.c.bf16 %v1725, %v1725
      %v1730 = vpack.c.bf16 %v1726, %v1726
      %v1732 = vsel %vm1682, %v1727, 0
      %vm1734 = vcmask 1043456
      %v1736 = vsel %vm1734, %v1489, 0
      %1738 = vmatprep.subr.bf16.mxu0 0
      %1739 = vmatpush1.bf16.msra.mxu0 %v1736
      %1740 = vmatprep.subr.bf16.mxu0 0
      %1741 = vmatpush1.bf16.msra.mxu0 0
      %1742 = vmatprep.subr.bf16.mxu0 0
      %1743 = vmatpush1.bf16.msra.mxu0 0
      %1744 = vmatprep.subr.bf16.mxu0 0
      %1745 = vmatpush1.bf16.msra.mxu0 0
      %1746 = vmatprep.subr.bf16.mxu0 0
      %1747 = vmatpush1.bf16.msra.mxu0 0
      %1748 = vmatprep.subr.bf16.mxu0 0
      %1749 = vmatpush1.bf16.msra.mxu0 0
      %1750 = vmatprep.subr.bf16.mxu0 0
      %1751 = vmatpush1.bf16.msra.mxu0 0
      %1752 = vmatprep.subr.bf16.mxu0 0
      %1753 = vmatpush1.bf16.msra.mxu0 0
      %1754 = vmatprep.subr.bf16.mxu0 0
      %1755 = vmatpush1.bf16.msra.mxu0 0
      %1756 = vmatprep.subr.bf16.mxu0 0
      %1757 = vmatpush1.bf16.msra.mxu0 0
      %1758 = vmatprep.subr.bf16.mxu0 0
      %1759 = vmatpush1.bf16.msra.mxu0 0
      %1760 = vmatprep.subr.bf16.mxu0 0
      %1761 = vmatpush1.bf16.msra.mxu0 0
      %1762 = vmatprep.subr.bf16.mxu0 0
      %1763 = vmatpush1.bf16.msra.mxu0 0
      %1764 = vmatprep.subr.bf16.mxu0 0
      %1765 = vmatpush1.bf16.msra.mxu0 0
      %1766 = vmatprep.subr.bf16.mxu0 0
      %1767 = vmatpush1.bf16.msra.mxu0 0
      %1768 = vmatprep.subr.bf16.mxu0 0
      %1769 = vmatpush1.bf16.msra.mxu0 0
      %1770 = vmatprep.mubr.bf16.mxu0 0
      %1771 = vmatmul.mubr.bf16.gmra.mrb[0].mxu0 %v1732
      %v1772 = vpop.f32.mrb[0].mxu0
      %v1773 = vadd.f32 0.0, %v1772
      %v1774 = vpop.f32.mrb[0].mxu0
      %v1775 = vpop.f32.mrb[0].mxu0
      %v1776 = vpop.f32.mrb[0].mxu0
      %1777 = vdwg.mxu0
      %v1779 = vsel %vm1682, %v1728, 0
      %v1782 = vsel %vm1734, %v1490, 0
      %1784 = vmatprep.subr.bf16.mxu0 0
      %1785 = vmatpush1.bf16.msra.mxu0 %v1782
      %1786 = vmatprep.subr.bf16.mxu0 0
      %1787 = vmatpush1.bf16.msra.mxu0 0
      %1788 = vmatprep.subr.bf16.mxu0 0
      %1789 = vmatpush1.bf16.msra.mxu0 0
      %1790 = vmatprep.subr.bf16.mxu0 0
      %1791 = vmatpush1.bf16.msra.mxu0 0
      %1792 = vmatprep.subr.bf16.mxu0 0
      %1793 = vmatpush1.bf16.msra.mxu0 0
      %1794 = vmatprep.subr.bf16.mxu0 0
      %1795 = vmatpush1.bf16.msra.mxu0 0
      %1796 = vmatprep.subr.bf16.mxu0 0
      %1797 = vmatpush1.bf16.msra.mxu0 0
      %1798 = vmatprep.subr.bf16.mxu0 0
      %1799 = vmatpush1.bf16.msra.mxu0 0
      %1800 = vmatprep.subr.bf16.mxu0 0
      %1801 = vmatpush1.bf16.msra.mxu0 0
      %1802 = vmatprep.subr.bf16.mxu0 0
      %1803 = vmatpush1.bf16.msra.mxu0 0
      %1804 = vmatprep.subr.bf16.mxu0 0
      %1805 = vmatpush1.bf16.msra.mxu0 0
      %1806 = vmatprep.subr.bf16.mxu0 0
      %1807 = vmatpush1.bf16.msra.mxu0 0
      %1808 = vmatprep.subr.bf16.mxu0 0
      %1809 = vmatpush1.bf16.msra.mxu0 0
      %1810 = vmatprep.subr.bf16.mxu0 0
      %1811 = vmatpush1.bf16.msra.mxu0 0
      %1812 = vmatprep.subr.bf16.mxu0 0
      %1813 = vmatpush1.bf16.msra.mxu0 0
      %1814 = vmatprep.subr.bf16.mxu0 0
      %1815 = vmatpush1.bf16.msra.mxu0 0
      %1816 = vmatprep.mubr.bf16.mxu0 0
      %1817 = vmatmul.mubr.bf16.gmra.mrb[0].mxu0 %v1779
      %v1818 = vpop.f32.mrb[0].mxu0
      %v1819 = vadd.f32 0.0, %v1818
      %v1820 = vpop.f32.mrb[0].mxu0
      %v1821 = vpop.f32.mrb[0].mxu0
      %v1822 = vpop.f32.mrb[0].mxu0
      %1823 = vdwg.mxu0
      %v1825 = vsel %vm1682, %v1729, 0
      %v1828 = vsel %vm1734, %v1491, 0
      %1830 = vmatprep.subr.bf16.mxu0 0
      %1831 = vmatpush1.bf16.msra.mxu0 %v1828
      %1832 = vmatprep.subr.bf16.mxu0 0
      %1833 = vmatpush1.bf16.msra.mxu0 0
      %1834 = vmatprep.subr.bf16.mxu0 0
      %1835 = vmatpush1.bf16.msra.mxu0 0
      %1836 = vmatprep.subr.bf16.mxu0 0
      %1837 = vmatpush1.bf16.msra.mxu0 0
      %1838 = vmatprep.subr.bf16.mxu0 0
      %1839 = vmatpush1.bf16.msra.mxu0 0
      %1840 = vmatprep.subr.bf16.mxu0 0
      %1841 = vmatpush1.bf16.msra.mxu0 0
      %1842 = vmatprep.subr.bf16.mxu0 0
      %1843 = vmatpush1.bf16.msra.mxu0 0
      %1844 = vmatprep.subr.bf16.mxu0 0
      %1845 = vmatpush1.bf16.msra.mxu0 0
      %1846 = vmatprep.subr.bf16.mxu0 0
      %1847 = vmatpush1.bf16.msra.mxu0 0
      %1848 = vmatprep.subr.bf16.mxu0 0
      %1849 = vmatpush1.bf16.msra.mxu0 0
      %1850 = vmatprep.subr.bf16.mxu0 0
      %1851 = vmatpush1.bf16.msra.mxu0 0
      %1852 = vmatprep.subr.bf16.mxu0 0
      %1853 = vmatpush1.bf16.msra.mxu0 0
      %1854 = vmatprep.subr.bf16.mxu0 0
      %1855 = vmatpush1.bf16.msra.mxu0 0
      %1856 = vmatprep.subr.bf16.mxu0 0
      %1857 = vmatpush1.bf16.msra.mxu0 0
      %1858 = vmatprep.subr.bf16.mxu0 0
      %1859 = vmatpush1.bf16.msra.mxu0 0
      %1860 = vmatprep.subr.bf16.mxu0 0
      %1861 = vmatpush1.bf16.msra.mxu0 0
      %1862 = vmatprep.mubr.bf16.mxu0 0
      %1863 = vmatmul.mubr.bf16.gmra.mrb[0].mxu0 %v1825
      %v1864 = vpop.f32.mrb[0].mxu0
      %v1865 = vadd.f32 0.0, %v1864
      %v1866 = vpop.f32.mrb[0].mxu0
      %v1867 = vpop.f32.mrb[0].mxu0
      %v1868 = vpop.f32.mrb[0].mxu0
      %1869 = vdwg.mxu0
      %v1871 = vsel %vm1682, %v1730, 0
      %v1874 = vsel %vm1734, %v1492, 0
      %1876 = vmatprep.subr.bf16.mxu0 0
      %1877 = vmatpush1.bf16.msra.mxu0 %v1874
      %1878 = vmatprep.subr.bf16.mxu0 0
      %1879 = vmatpush1.bf16.msra.mxu0 0
      %1880 = vmatprep.subr.bf16.mxu0 0
      %1881 = vmatpush1.bf16.msra.mxu0 0
      %1882 = vmatprep.subr.bf16.mxu0 0
      %1883 = vmatpush1.bf16.msra.mxu0 0
      %1884 = vmatprep.subr.bf16.mxu0 0
      %1885 = vmatpush1.bf16.msra.mxu0 0
      %1886 = vmatprep.subr.bf16.mxu0 0
      %1887 = vmatpush1.bf16.msra.mxu0 0
      %1888 = vmatprep.subr.bf16.mxu0 0
      %1889 = vmatpush1.bf16.msra.mxu0 0
      %1890 = vmatprep.subr.bf16.mxu0 0
      %1891 = vmatpush1.bf16.msra.mxu0 0
      %1892 = vmatprep.subr.bf16.mxu0 0
      %1893 = vmatpush1.bf16.msra.mxu0 0
      %1894 = vmatprep.subr.bf16.mxu0 0
      %1895 = vmatpush1.bf16.msra.mxu0 0
      %1896 = vmatprep.subr.bf16.mxu0 0
      %1897 = vmatpush1.bf16.msra.mxu0 0
      %1898 = vmatprep.subr.bf16.mxu0 0
      %1899 = vmatpush1.bf16.msra.mxu0 0
      %1900 = vmatprep.subr.bf16.mxu0 0
      %1901 = vmatpush1.bf16.msra.mxu0 0
      %1902 = vmatprep.subr.bf16.mxu0 0
      %1903 = vmatpush1.bf16.msra.mxu0 0
      %1904 = vmatprep.subr.bf16.mxu0 0
      %1905 = vmatpush1.bf16.msra.mxu0 0
      %1906 = vmatprep.subr.bf16.mxu0 0
      %1907 = vmatpush1.bf16.msra.mxu0 0
      %1908 = vmatprep.mubr.bf16.mxu0 0
      %1909 = vmatmul.mubr.bf16.gmra.mrb[0].mxu0 %v1871
      %v1910 = vpop.f32.mrb[0].mxu0
      %v1911 = vadd.f32 0.0, %v1910
      %v1912 = vpop.f32.mrb[0].mxu0
      %v1913 = vpop.f32.mrb[0].mxu0
      %v1914 = vpop.f32.mrb[0].mxu0
      %1915 = vdwg.mxu0
      %v1916 = vpack.c.bf16 %v1773, %v1773
      %v1917 = vpack.c.bf16 %v1819, %v1819
      %v1918 = vpack.c.bf16 %v1865, %v1865
      %v1919 = vpack.c.bf16 %v1911, %v1911
      %v1920 = vld [vmem:[%s2] sm:$0xf]
      %v1921 = vld [vmem:[%s2 + $0x4] sm:$0xf]
      %v1922 = vld [vmem:[%s2 + $0x8] sm:$0xf]
      %v1923 = vld [vmem:[%s2 + $0xc] sm:$0xf]
      %v1924 = vld [vmem:[%s2 + $0x10] sm:$0xf]
      %v1925 = vld [vmem:[%s2 + $0x14] sm:$0xf]
      %v1926 = vld [vmem:[%s2 + $0x18] sm:$0xf]
      %v1927 = vld [vmem:[%s2 + $0x1c] sm:$0xf]
      %v1928 = vld [vmem:[%s2 + $0x20] sm:$0xf]
      %v1929 = vld [vmem:[%s2 + $0x24] sm:$0xf]
      %v1930 = vld [vmem:[%s2 + $0x28] sm:$0xf]
      %v1931 = vld [vmem:[%s2 + $0x2c] sm:$0xf]
      %v1932 = vld [vmem:[%s2 + $0x30] sm:$0xf]
      %v1933 = vld [vmem:[%s2 + $0x34] sm:$0xf]
      %v1934 = vld [vmem:[%s2 + $0x38] sm:$0xf]
      %v1935 = vld [vmem:[%s2 + $0x3c] sm:$0xf]
      %v1940 = vunpack.c.l.b16 %v1920
      %v1941 = vunpack.c.l.b16 %v1921
      %v1942 = vunpack.c.l.b16 %v1922
      %v1943 = vunpack.c.l.b16 %v1923
      %v1944 = vpack.c.b16 %v1941, %v1940
      %v1945 = vpack.c.b16 %v1943, %v1942
      %v1949 = vsel %vm1493, %v1916, 0
      %1951 = vmatprep.subr.bf16.mxu0 0
      %1952 = vmatpush1.bf16.msra.mxu0 %v1944
      %1953 = vmatprep.subr.bf16.mxu0 0
      %1954 = vmatpush1.bf16.msra.mxu0 %v1945
      %1955 = vmatprep.subr.bf16.mxu0 0
      %1956 = vmatpush1.bf16.msra.mxu0 0
      %1957 = vmatprep.subr.bf16.mxu0 0
      %1958 = vmatpush1.bf16.msra.mxu0 0
      %1959 = vmatprep.subr.bf16.mxu0 0
      %1960 = vmatpush1.bf16.msra.mxu0 0
      %1961 = vmatprep.subr.bf16.mxu0 0
      %1962 = vmatpush1.bf16.msra.mxu0 0
      %1963 = vmatprep.subr.bf16.mxu0 0
      %1964 = vmatpush1.bf16.msra.mxu0 0
      %1965 = vmatprep.subr.bf16.mxu0 0
      %1966 = vmatpush1.bf16.msra.mxu0 0
      %1967 = vmatprep.subr.bf16.mxu0 0
      %1968 = vmatpush1.bf16.msra.mxu0 0
      %1969 = vmatprep.subr.bf16.mxu0 0
      %1970 = vmatpush1.bf16.msra.mxu0 0
      %1971 = vmatprep.subr.bf16.mxu0 0
      %1972 = vmatpush1.bf16.msra.mxu0 0
      %1973 = vmatprep.subr.bf16.mxu0 0
      %1974 = vmatpush1.bf16.msra.mxu0 0
      %1975 = vmatprep.subr.bf16.mxu0 0
      %1976 = vmatpush1.bf16.msra.mxu0 0
      %1977 = vmatprep.subr.bf16.mxu0 0
      %1978 = vmatpush1.bf16.msra.mxu0 0
      %1979 = vmatprep.subr.bf16.mxu0 0
      %1980 = vmatpush1.bf16.msra.mxu0 0
      %1981 = vmatprep.subr.bf16.mxu0 0
      %1982 = vmatpush1.bf16.msra.mxu0 0
      %1983 = vmatprep.mubr.bf16.mxu0 0
      %1984 = vmatmul.mubr.bf16.gmra.mrb[0].mxu0 %v1949
      %v1985 = vpop.f32.mrb[0].mxu0
      %v1986 = vadd.f32 0.0, %v1985
      %v1987 = vpop.f32.mrb[0].mxu0
      %v1988 = vpop.f32.mrb[0].mxu0
      %v1989 = vpop.f32.mrb[0].mxu0
      %1990 = vdwg.mxu0
      %v1995 = vunpack.c.l.b16 %v1924
      %v1996 = vunpack.c.l.b16 %v1925
      %v1997 = vunpack.c.l.b16 %v1926
      %v1998 = vunpack.c.l.b16 %v1927
      %v1999 = vpack.c.b16 %v1996, %v1995
      %v2000 = vpack.c.b16 %v1998, %v1997
      %v2004 = vsel %vm1493, %v1917, 0
      %2006 = vmatprep.subr.bf16.mxu0 0
      %2007 = vmatpush1.bf16.msra.mxu0 %v1999
      %2008 = vmatprep.subr.bf16.mxu0 0
      %2009 = vmatpush1.bf16.msra.mxu0 %v2000
      %2010 = vmatprep.subr.bf16.mxu0 0
      %2011 = vmatpush1.bf16.msra.mxu0 0
      %2012 = vmatprep.subr.bf16.mxu0 0
      %2013 = vmatpush1.bf16.msra.mxu0 0
      %2014 = vmatprep.subr.bf16.mxu0 0
      %2015 = vmatpush1.bf16.msra.mxu0 0
      %2016 = vmatprep.subr.bf16.mxu0 0
      %2017 = vmatpush1.bf16.msra.mxu0 0
      %2018 = vmatprep.subr.bf16.mxu0 0
      %2019 = vmatpush1.bf16.msra.mxu0 0
      %2020 = vmatprep.subr.bf16.mxu0 0
      %2021 = vmatpush1.bf16.msra.mxu0 0
      %2022 = vmatprep.subr.bf16.mxu0 0
      %2023 = vmatpush1.bf16.msra.mxu0 0
      %2024 = vmatprep.subr.bf16.mxu0 0
      %2025 = vmatpush1.bf16.msra.mxu0 0
      %2026 = vmatprep.subr.bf16.mxu0 0
      %2027 = vmatpush1.bf16.msra.mxu0 0
      %2028 = vmatprep.subr.bf16.mxu0 0
      %2029 = vmatpush1.bf16.msra.mxu0 0
      %2030 = vmatprep.subr.bf16.mxu0 0
      %2031 = vmatpush1.bf16.msra.mxu0 0
      %2032 = vmatprep.subr.bf16.mxu0 0
      %2033 = vmatpush1.bf16.msra.mxu0 0
      %2034 = vmatprep.subr.bf16.mxu0 0
      %2035 = vmatpush1.bf16.msra.mxu0 0
      %2036 = vmatprep.subr.bf16.mxu0 0
      %2037 = vmatpush1.bf16.msra.mxu0 0
      %2038 = vmatprep.mubr.bf16.mxu0 0
      %2039 = vmatmul.mubr.bf16.gmra.mrb[0].mxu0 %v2004
      %v2040 = vpop.f32.mrb[0].mxu0
      %v2041 = vadd.f32 0.0, %v2040
      %v2042 = vpop.f32.mrb[0].mxu0
      %v2043 = vpop.f32.mrb[0].mxu0
      %v2044 = vpop.f32.mrb[0].mxu0
      %2045 = vdwg.mxu0
      %v2050 = vunpack.c.l.b16 %v1928
      %v2051 = vunpack.c.l.b16 %v1929
      %v2052 = vunpack.c.l.b16 %v1930
      %v2053 = vunpack.c.l.b16 %v1931
      %v2054 = vpack.c.b16 %v2051, %v2050
      %v2055 = vpack.c.b16 %v2053, %v2052
      %v2059 = vsel %vm1493, %v1918, 0
      %2061 = vmatprep.subr.bf16.mxu0 0
      %2062 = vmatpush1.bf16.msra.mxu0 %v2054
      %2063 = vmatprep.subr.bf16.mxu0 0
      %2064 = vmatpush1.bf16.msra.mxu0 %v2055
      %2065 = vmatprep.subr.bf16.mxu0 0
      %2066 = vmatpush1.bf16.msra.mxu0 0
      %2067 = vmatprep.subr.bf16.mxu0 0
      %2068 = vmatpush1.bf16.msra.mxu0 0
      %2069 = vmatprep.subr.bf16.mxu0 0
      %2070 = vmatpush1.bf16.msra.mxu0 0
      %2071 = vmatprep.subr.bf16.mxu0 0
      %2072 = vmatpush1.bf16.msra.mxu0 0
      %2073 = vmatprep.subr.bf16.mxu0 0
      %2074 = vmatpush1.bf16.msra.mxu0 0
      %2075 = vmatprep.subr.bf16.mxu0 0
      %2076 = vmatpush1.bf16.msra.mxu0 0
      %2077 = vmatprep.subr.bf16.mxu0 0
      %2078 = vmatpush1.bf16.msra.mxu0 0
      %2079 = vmatprep.subr.bf16.mxu0 0
      %2080 = vmatpush1.bf16.msra.mxu0 0
      %2081 = vmatprep.subr.bf16.mxu0 0
      %2082 = vmatpush1.bf16.msra.mxu0 0
      %2083 = vmatprep.subr.bf16.mxu0 0
      %2084 = vmatpush1.bf16.msra.mxu0 0
      %2085 = vmatprep.subr.bf16.mxu0 0
      %2086 = vmatpush1.bf16.msra.mxu0 0
      %2087 = vmatprep.subr.bf16.mxu0 0
      %2088 = vmatpush1.bf16.msra.mxu0 0
      %2089 = vmatprep.subr.bf16.mxu0 0
      %2090 = vmatpush1.bf16.msra.mxu0 0
      %2091 = vmatprep.subr.bf16.mxu0 0
      %2092 = vmatpush1.bf16.msra.mxu0 0
      %2093 = vmatprep.mubr.bf16.mxu0 0
      %2094 = vmatmul.mubr.bf16.gmra.mrb[0].mxu0 %v2059
      %v2095 = vpop.f32.mrb[0].mxu0
      %v2096 = vadd.f32 0.0, %v2095
      %v2097 = vpop.f32.mrb[0].mxu0
      %v2098 = vpop.f32.mrb[0].mxu0
      %v2099 = vpop.f32.mrb[0].mxu0
      %2100 = vdwg.mxu0
      %v2105 = vunpack.c.l.b16 %v1932
      %v2106 = vunpack.c.l.b16 %v1933
      %v2107 = vunpack.c.l.b16 %v1934
      %v2108 = vunpack.c.l.b16 %v1935
      %v2109 = vpack.c.b16 %v2106, %v2105
      %v2110 = vpack.c.b16 %v2108, %v2107
      %v2114 = vsel %vm1493, %v1919, 0
      %2116 = vmatprep.subr.bf16.mxu0 0
      %2117 = vmatpush1.bf16.msra.mxu0 %v2109
      %2118 = vmatprep.subr.bf16.mxu0 0
      %2119 = vmatpush1.bf16.msra.mxu0 %v2110
      %2120 = vmatprep.subr.bf16.mxu0 0
      %2121 = vmatpush1.bf16.msra.mxu0 0
      %2122 = vmatprep.subr.bf16.mxu0 0
      %2123 = vmatpush1.bf16.msra.mxu0 0
      %2124 = vmatprep.subr.bf16.mxu0 0
      %2125 = vmatpush1.bf16.msra.mxu0 0
      %2126 = vmatprep.subr.bf16.mxu0 0
      %2127 = vmatpush1.bf16.msra.mxu0 0
      %2128 = vmatprep.subr.bf16.mxu0 0
      %2129 = vmatpush1.bf16.msra.mxu0 0
      %2130 = vmatprep.subr.bf16.mxu0 0
      %2131 = vmatpush1.bf16.msra.mxu0 0
      %2132 = vmatprep.subr.bf16.mxu0 0
      %2133 = vmatpush1.bf16.msra.mxu0 0
      %2134 = vmatprep.subr.bf16.mxu0 0
      %2135 = vmatpush1.bf16.msra.mxu0 0
      %2136 = vmatprep.subr.bf16.mxu0 0
      %2137 = vmatpush1.bf16.msra.mxu0 0
      %2138 = vmatprep.subr.bf16.mxu0 0
      %2139 = vmatpush1.bf16.msra.mxu0 0
      %2140 = vmatprep.subr.bf16.mxu0 0
      %2141 = vmatpush1.bf16.msra.mxu0 0
      %2142 = vmatprep.subr.bf16.mxu0 0
      %2143 = vmatpush1.bf16.msra.mxu0 0
      %2144 = vmatprep.subr.bf16.mxu0 0
      %2145 = vmatpush1.bf16.msra.mxu0 0
      %2146 = vmatprep.subr.bf16.mxu0 0
      %2147 = vmatpush1.bf16.msra.mxu0 0
      %2148 = vmatprep.mubr.bf16.mxu0 0
      %2149 = vmatmul.mubr.bf16.gmra.mrb[0].mxu0 %v2114
      %v2150 = vpop.f32.mrb[0].mxu0
      %v2151 = vadd.f32 0.0, %v2150
      %v2152 = vpop.f32.mrb[0].mxu0
      %v2153 = vpop.f32.mrb[0].mxu0
      %v2154 = vpop.f32.mrb[0].mxu0
      %2155 = vdwg.mxu0
      %v2156 = vadd.f32 %v1986, %v2041
      %v2157 = vadd.f32 %v2156, %v2096
      %v2158 = vadd.f32 %v2157, %v2151
      %v2159 = vld [vmem:[%s3] sm:$0x1]
      %v2161 = vlaneseq
      %v2162 = vshrl.u32 %v2161, 7
      %v2163 = vsub.s32 0, %v2162
      %v2164 = vrot.slane %v2159, %v2163
      %v2166 = vadd.f32 %v2158, %v2164
      %v2167 = vunpack.c.l.bf16 %v232
      %v2168 = vadd.f32 %v2167, %v2166
      %2169 = vst [vmem:[%s226] sm:$0xff] %v2168
      %2170 = vst [vmem:[%s230] sm:$0xff] 0.0
      %v2171 = vrot.slane %v2168, 4
      %v2172 = vadd.f32 %v2168, %v2171
      %v2173 = vrot.slane %v2172, 2
      %v2174 = vadd.f32 %v2172, %v2173
      %v2175 = vrot.slane %v2174, 1
      %v2176 = vadd.f32 %v2174, %v2175
      %2177 = vst [vmem:[%s230] sm:$0x1] %v2176
      %v2178 = vmul.f32 %v2168, %v2168
      %v2179 = vrot.slane %v2178, 4
      %v2180 = vadd.f32 %v2178, %v2179
      %v2181 = vrot.slane %v2180, 2
      %v2182 = vadd.f32 %v2180, %v2181
      %v2183 = vrot.slane %v2182, 1
      %v2184 = vadd.f32 %v2182, %v2183
      %2185 = vst [vmem:[%s230 + $0x1] sm:$0x1] %v2184
      %p2186 = scmp.lt.s32.totalorder %s17, 1
      %s2187 = scalar_select %p2186, %s17, 1
      %s2188 = smul.addr %s2187, 8
      %s2189 = scalar_lea.vmem %s4, %s2188
      %p2190 = scmp.lt.s32.totalorder %s17, 1
      %s2191 = scalar_select %p2190, %s17, 1
      %s2192 = smul.addr %s2191, 8
      %s2193 = scalar_lea.vmem %s5, %s2192
      // Predicated region
      $region37: #{encoder_layer.3} parent=35 // pred_check
        %p2194 = pneg %p124
      $region38: #{encoder_layer.3} parent=35 // pred_check_branch
        %2196 = sbr.rel (%p2194) target = $region40
      $region39: #{encoder_layer.3} parent=35 // pred_region
        _
      $region40: #{encoder_layer.3} parent=35 // pred_fallthru
        _
      // Predicated region
      $region41: #{encoder_layer.3} parent=35 // pred_check
        %p2197 = pneg %p150
      $region42: #{encoder_layer.3} parent=35 // pred_check_branch
        %2199 = sbr.rel (%p2197) target = $region44
      $region43: #{encoder_layer.3} parent=35 // pred_region
        _
      $region44: #{encoder_layer.3} parent=35 // pred_fallthru
        _
    $region36: #{encoder_layer.3} parent=5 // pred_fallthru
      _
    %p2200 = scmp.le.s32.totalorder 2, %s12
    // Predicated region
    $region45: #{encoder_layer.3} parent=5 // pred_check
      %p2201 = pneg %p2200
    $region46: #{encoder_layer.3} parent=5 // pred_check_branch
      %2203 = sbr.rel (%p2201) target = $region48
    $region47: #{encoder_layer.3} parent=5 // pred_region
      %s2204 = ssub.s32 %s12, 2
      // Predicated region
      $region49: #{encoder_layer.3} parent=47 // pred_check
        %p2205 = pneg %p130
      $region50: #{encoder_layer.3} parent=47 // pred_check_branch
        %2207 = sbr.rel (%p2205) target = $region52
      $region51: #{encoder_layer.3} parent=47 // pred_region
        %p2208 = scmp.lt.s32.totalorder %s18, 1
        %s2209 = scalar_select %p2208, %s18, 1
        %s2210 = smul.addr %s2209, 8
        %s2211 = scalar_lea.vmem %s4, %s2210
      $region52: #{encoder_layer.3} parent=47 // pred_fallthru
        _
      // Predicated region
      $region53: #{encoder_layer.3} parent=47 // pred_check
        %p2212 = pneg %p156
      $region54: #{encoder_layer.3} parent=47 // pred_check_branch
        %2214 = sbr.rel (%p2212) target = $region56
      $region55: #{encoder_layer.3} parent=47 // pred_region
        %p2215 = scmp.lt.s32.totalorder %s18, 1
        %s2216 = scalar_select %p2215, %s18, 1
        %s2217 = smul.addr %s2216, 8
        %s2218 = scalar_lea.vmem %s5, %s2217
      $region56: #{encoder_layer.3} parent=47 // pred_fallthru
        _
    $region48: #{encoder_layer.3} parent=5 // pred_fallthru
      _
  $region6: #{encoder_layer.3} parent=0 // loop_footer
    %s16 = sadd.s32 1, %s12
  $region7: #{encoder_layer.3} parent=0 // loop_footer_branch
    %11 = sbr.rel target = $region3
  $region8: #{encoder_layer.3} parent=0 // loop_exit
    _

</llo_original>
